<compile_context>
chip_gen: v6e
topology: v6e:2x2x1
jax: 0.10.0
libtpu: 0.0.40
codegen_flags: <defaults>
</compile_context>

<pallas_src>
import functools

import jax
import jax.numpy as jnp
from jax.experimental import pallas as pl
from jax.experimental.pallas import tpu as pltpu


# ----------------------------------------------------------------------------
# Pallas kernel: one MBConv block per image (grid over the batch).
# ----------------------------------------------------------------------------
def mbconv_kernel(
    x_ref,        # (H, W*Cin)        lane-dense packed input slab (one image)
    we_ref,       # (W*Cin, W*Wexp)   block-diag expand weight (BN scale folded)
    exp_b_ref,    # (1, W*Wexp)       expand BN bias (tiled)
    r_ref,        # (K, H, H)         row-shift operators (h taps, zero boundary)
    d_ref,        # (K, W*Wexp, W*Wexp)  banded depthwise operators (BN folded)
    dw_b_ref,     # (1, W*Wexp)       depthwise BN bias (tiled)
    w_se1_ref,    # (Wexp, Wse)
    b_se1_ref,    # (1, Wse)
    w_se2_ref,    # (Wse, Wexp)
    b_se2_ref,    # (1, Wexp)
    sum_l_ref,    # (W*Wexp, Wexp)    lane-block pooling matrix (mean folded)
    bcast_l_ref,  # (Wexp, W*Wexp)    gate broadcast matrix
    wp_ref,       # (W*Wexp, W*Wout)  block-diag projection weight (BN folded)
    pr_b_ref,     # (1, W*Wout)       projection BN bias (tiled)
    o_ref,        # (H, W*Wout)       lane-dense packed output slab
    *,
    K, pad, has_skip,
):
    f32 = jnp.float32
    x = x_ref[...]                                          # (H, W*Cin)

    # ---- expand 1x1 conv (block-diag packed) + BN bias + Swish --------------
    f = jnp.dot(x, we_ref[...], preferred_element_type=f32) + exp_b_ref[...]
    f = f * jax.nn.sigmoid(f)                               # (H, W*Wexp)

    # ---- depthwise KxK conv (stride 1) on the MXU ---------------------------
    #   acc = sum_kh (R_dh @ f) @ D_kh   (w-taps + channel weights inside D)
    acc = None
    for kh in range(K):
        if kh == pad:                                       # dh == 0: identity
            fh = f
        else:
            fh = jnp.dot(r_ref[kh], f, preferred_element_type=f32)
        t = jnp.dot(fh, d_ref[kh], preferred_element_type=f32)
        acc = t if acc is None else acc + t
    acc = acc + dw_b_ref[...]                               # BN bias (scale folded)
    acc = acc * jax.nn.sigmoid(acc)                         # Swish

    # ---- SE: avg-pool -> FC -> Swish -> FC -> Sigmoid -> channel gate -------
    pooled = jnp.dot(jnp.sum(acc, axis=0, keepdims=True), sum_l_ref[...],
                     preferred_element_type=f32)            # (1, Wexp), mean folded
    h1 = jnp.dot(pooled, w_se1_ref[...], preferred_element_type=f32) + b_se1_ref[...]
    h1 = h1 * jax.nn.sigmoid(h1)                            # Swish
    h2 = jnp.dot(h1, w_se2_ref[...], preferred_element_type=f32) + b_se2_ref[...]
    gate = jax.nn.sigmoid(h2)                               # (1, Wexp)
    gate_p = jnp.dot(gate, bcast_l_ref[...], preferred_element_type=f32)  # (1, W*Wexp)
    g = acc * gate_p

    # ---- linear projection 1x1 conv (block-diag packed) + BN bias + skip ----
    out = jnp.dot(g, wp_ref[...], preferred_element_type=f32) + pr_b_ref[...]
    if has_skip:
        out = out + x                                       # same packing (Cin==Wout)
    o_ref[...] = out                                        # lane-dense store


# ----------------------------------------------------------------------------
# Wrapper: BN folding, lane-dense repacking, pallas_call plumbing.
# ----------------------------------------------------------------------------
def _pack_params(params, *, H, W, K, pad):
    """Fold BN scales into the conv weights and repack for the packed layout."""
    Wexp = params["we"].shape[1]
    eye_w = jnp.eye(W, dtype=jnp.float32)

    # block-diagonal packed 1x1 convs (BN scale folded into the columns)
    we_pack = jnp.kron(eye_w, params["we"] * params["exp_s"])   # (W*Cin, W*Wexp)
    wp_pack = jnp.kron(eye_w, params["wp"] * params["pr_s"])    # (W*Wexp, W*Wout)

    # banded block-diagonal depthwise operators (one per kh row tap)
    wd_s = params["wd"] * params["dw_s"]                        # (K*K, Wexp)
    d_blocks = []
    for kh in range(K):
        d = jnp.zeros((W * Wexp, W * Wexp), jnp.float32)
        for kw in range(K):
            dw = kw - pad
            shift_w = jnp.eye(W, W, k=-dw, dtype=jnp.float32)   # src pixel w+dw
            d = d + jnp.kron(shift_w, jnp.diag(wd_s[kh * K + kw]))
        d_blocks.append(d)
    d_stack = jnp.stack(d_blocks, axis=0)                       # (K, WW, WW)

    # row-shift operators for the h taps (zero rows at the image boundary)
    r_stack = jnp.stack([jnp.eye(H, H, k=kh - pad, dtype=jnp.float32)
                         for kh in range(K)], axis=0)           # (K, H, H)

    return dict(
        we_pack=we_pack, wp_pack=wp_pack, d_stack=d_stack, r_stack=r_stack,
        exp_b_t=jnp.tile(params["exp_b"], (1, W)),
        dw_b_t=jnp.tile(params["dw_b"], (1, W)),
        pr_b_t=jnp.tile(params["pr_b"], (1, W)),
        sum_l=jnp.tile(jnp.eye(Wexp, dtype=jnp.float32), (W, 1)) / (H * W),
        bcast_l=jnp.tile(jnp.eye(Wexp, dtype=jnp.float32), (1, W)),
        w_se1=params["w_se1"], b_se1=params["b_se1"],
        w_se2=params["w_se2"], b_se2=params["b_se2"],
    )


def mbconv_forward(x_nchw, params, *, kernel, stride, has_skip):
    assert stride == 1, "only stride=1 implemented (see TODO above)"
    N, Cin, H, W = x_nchw.shape
    assert H % 8 == 0, "per-image row block must be a multiple of 8 sublanes"
    Wexp = params["we"].shape[1]
    Wout = params["wp"].shape[1]
    assert Wexp != Cin, "exp_r == 1 (no expansion) variant not implemented"
    K = kernel
    pad = (kernel - 1) // 2

    # lane-dense input slab: (N*H, W*Cin), element (n*H+h, w*Cin+c) = x[n,c,h,w]
    xp = jnp.transpose(x_nchw, (0, 2, 3, 1)).astype(jnp.float32)
    xp = xp.reshape(N * H, W * Cin)
    p = _pack_params(params, H=H, W=W, K=K, pad=pad)

    kern = functools.partial(mbconv_kernel, K=K, pad=pad, has_skip=has_skip)

    def const_spec(arr):
        zeros = (0,) * arr.ndim

        def imap(n):
            return zeros

        return pl.BlockSpec(arr.shape, imap)

    operands = (xp, p["we_pack"], p["exp_b_t"], p["r_stack"], p["d_stack"],
                p["dw_b_t"], p["w_se1"], p["b_se1"], p["w_se2"], p["b_se2"],
                p["sum_l"], p["bcast_l"], p["wp_pack"], p["pr_b_t"])
    in_specs = [pl.BlockSpec((H, W * Cin), lambda n: (n, 0))]
    in_specs += [const_spec(a) for a in operands[1:]]

    out_packed = pl.pallas_call(
        kern,
        out_shape=jax.ShapeDtypeStruct((N * H, W * Wout), jnp.float32),
        grid=(N,),
        in_specs=in_specs,
        out_specs=pl.BlockSpec((H, W * Wout), lambda n: (n, 0)),
        compiler_params=pltpu.CompilerParams(
            dimension_semantics=("parallel",),      # second TC on v7x
            vmem_limit_bytes=32 * 1024 * 1024),     # v5e scoped default is 16 MiB
    )(*operands)

    # unpack lane-dense slab -> NCHW
    return jnp.transpose(out_packed.reshape(N, H, W, Wout), (0, 3, 1, 2))


# ----------------------------------------------------------------------------
# Pure-JAX reference (same eval-mode BN semantics) for correctness check.
# ----------------------------------------------------------------------------
def mbconv_reference(x_nchw, params, *, kernel, stride, has_skip):
    x = jnp.transpose(x_nchw, (0, 2, 3, 1)).astype(jnp.float32)
    N, H, W, Cin = x.shape
    Wexp = params["we"].shape[1]
    pad = (kernel - 1) // 2

    f = jnp.einsum("nhwc,ce->nhwe", x, params["we"])
    f = f * params["exp_s"] + params["exp_b"]
    f = f * jax.nn.sigmoid(f)

    fp = jnp.pad(f, ((0, 0), (pad, pad), (pad, pad), (0, 0)))
    wd = params["wd"].reshape(kernel, kernel, Wexp)
    acc = jnp.zeros_like(f)
    for kh in range(kernel):
        for kw in range(kernel):
            acc = acc + fp[:, kh:kh + H, kw:kw + W, :] * wd[kh, kw]
    acc = acc * params["dw_s"] + params["dw_b"]
    acc = acc * jax.nn.sigmoid(acc)

    s = jnp.mean(acc, axis=(1, 2))
    h1 = s @ params["w_se1"] + params["b_se1"]
    h1 = h1 * jax.nn.sigmoid(h1)
    gate = jax.nn.sigmoid(h1 @ params["w_se2"] + params["b_se2"])
    acc = acc * gate[:, None, None, :]

    out = jnp.einsum("nhwc,co->nhwo", acc, params["wp"])
    out = out * params["pr_s"] + params["pr_b"]
    if has_skip:
        out = out + x
    return jnp.transpose(out, (0, 3, 1, 2))


# ----------------------------------------------------------------------------
# Deterministic parameter init (shapes follow MBConv.__init__; BN pre-folded
# into per-channel scale/bias; scale folding into weights happens in wrapper).
# ----------------------------------------------------------------------------
def make_params(key, w_in, exp_r, kernel, se_r, w_out):
    w_exp = int(w_in * exp_r)
    w_se = int(w_in * se_r)
    ks = jax.random.split(key, 16)

    def bn_fold(kg, kb, km, kv, c, eps=1e-5):
        gamma = jax.random.uniform(kg, (1, c), jnp.float32, 0.5, 1.5)
        beta = 0.1 * jax.random.normal(kb, (1, c), jnp.float32)
        mean = 0.1 * jax.random.normal(km, (1, c), jnp.float32)
        var = jax.random.uniform(kv, (1, c), jnp.float32, 0.5, 1.5)
        scale = gamma / jnp.sqrt(var + eps)
        bias = beta - mean * scale
        return scale, bias

    exp_s, exp_b = bn_fold(ks[0], ks[1], ks[2], ks[3], w_exp)
    dw_s, dw_b = bn_fold(ks[4], ks[5], ks[6], ks[7], w_exp)
    pr_s, pr_b = bn_fold(ks[8], ks[9], ks[10], ks[11], w_out)

    return {
        # expand 1x1 conv, no bias (torch weight (Wexp,Cin,1,1) -> (Cin,Wexp))
        "we": 0.2 * jax.random.normal(ks[12], (w_in, w_exp), jnp.float32),
        "exp_s": exp_s, "exp_b": exp_b,
        # depthwise KxK, groups=Wexp (torch (Wexp,1,K,K) -> (K*K, Wexp))
        "wd": 0.2 * jax.random.normal(ks[13], (kernel * kernel, w_exp),
                                      jnp.float32),
        "dw_s": dw_s, "dw_b": dw_b,
        # SE block (1x1 convs with bias -> dense)
        "w_se1": 0.2 * jax.random.normal(ks[14], (w_exp, w_se), jnp.float32),
        "b_se1": jnp.zeros((1, w_se), jnp.float32),
        "w_se2": 0.2 * jax.random.normal(ks[15], (w_se, w_exp), jnp.float32),
        "b_se2": jnp.zeros((1, w_exp), jnp.float32),
        # linear projection 1x1 conv, no bias
        "wp": 0.2 * jax.random.normal(ks[0], (w_exp, w_out), jnp.float32),
        "pr_s": pr_s, "pr_b": pr_b,
    }


if __name__ == "__main__":
    # MBConv(w_in=8, exp_r=4.0, kernel=3, stride=1, se_r=0.25, w_out=8)
    w_in, exp_r, kernel, stride, se_r, w_out = 8, 4.0, 3, 1, 0.25, 8
    has_skip = (stride == 1 and w_in == w_out)

    key = jax.random.PRNGKey(0)
    kx, kp = jax.random.split(key)
    x = jax.random.normal(kx, (2, w_in, 16, 16), jnp.float32)   # NCHW like torch
    params = make_params(kp, w_in, exp_r, kernel, se_r, w_out)

    out = mbconv_forward(x, params, kernel=kernel, stride=stride,
                         has_skip=has_skip)
    out = jax.block_until_ready(out)

    ref = mbconv_reference(x, params, kernel=kernel, stride=stride,
                           has_skip=has_skip)
    assert out.shape == (2, w_out, 16, 16)
    # tolerance covers MXU default-precision (bf16-input) matmul passes
    assert jnp.allclose(out, ref, rtol=2e-2, atol=2e-2), "mismatch vs reference"

    print("KERNEL_OK")
</pallas_src>

<mosaic_0001>
module attributes {stable_mosaic.version = 11 : i64} {
  func.func @mbconv_kernel(%arg0: i32, %arg1: memref<16x128xf32, #tpu.memory_space<vmem>>, %arg2: memref<128x512xf32, #tpu.memory_space<vmem>>, %arg3: memref<1x512xf32, #tpu.memory_space<vmem>>, %arg4: memref<3x16x16xf32, #tpu.memory_space<vmem>>, %arg5: memref<3x512x512xf32, #tpu.memory_space<vmem>>, %arg6: memref<1x512xf32, #tpu.memory_space<vmem>>, %arg7: memref<32x2xf32, #tpu.memory_space<vmem>>, %arg8: memref<1x2xf32, #tpu.memory_space<vmem>>, %arg9: memref<2x32xf32, #tpu.memory_space<vmem>>, %arg10: memref<1x32xf32, #tpu.memory_space<vmem>>, %arg11: memref<512x32xf32, #tpu.memory_space<vmem>>, %arg12: memref<32x512xf32, #tpu.memory_space<vmem>>, %arg13: memref<512x128xf32, #tpu.memory_space<vmem>>, %arg14: memref<1x128xf32, #tpu.memory_space<vmem>>, %arg15: memref<16x128xf32, #tpu.memory_space<vmem>>) attributes {dimension_semantics = [#tpu.dimension_semantics<parallel>], iteration_bounds = array<i64: 2>, scalar_prefetch = 0 : i64, scratch_operands = 0 : i64, tpu.core_type = #tpu.core_type<tc>, window_params = [{transform_indices = @transform_0, window_bounds = array<i64: 16, 128>}, {pipeline_mode = #tpu.pipeline_mode<synchronous>, transform_indices = @transform_1, window_bounds = array<i64: 128, 512>}, {pipeline_mode = #tpu.pipeline_mode<synchronous>, transform_indices = @transform_2, window_bounds = array<i64: 1, 512>}, {pipeline_mode = #tpu.pipeline_mode<synchronous>, transform_indices = @transform_3, window_bounds = array<i64: 3, 16, 16>}, {pipeline_mode = #tpu.pipeline_mode<synchronous>, transform_indices = @transform_4, window_bounds = array<i64: 3, 512, 512>}, {pipeline_mode = #tpu.pipeline_mode<synchronous>, transform_indices = @transform_5, window_bounds = array<i64: 1, 512>}, {pipeline_mode = #tpu.pipeline_mode<synchronous>, transform_indices = @transform_6, window_bounds = array<i64: 32, 2>}, {pipeline_mode = #tpu.pipeline_mode<synchronous>, transform_indices = @transform_7, window_bounds = array<i64: 1, 2>}, {pipeline_mode = #tpu.pipeline_mode<synchronous>, transform_indices = @transform_8, window_bounds = array<i64: 2, 32>}, {pipeline_mode = #tpu.pipeline_mode<synchronous>, transform_indices = @transform_9, window_bounds = array<i64: 1, 32>}, {pipeline_mode = #tpu.pipeline_mode<synchronous>, transform_indices = @transform_10, window_bounds = array<i64: 512, 32>}, {pipeline_mode = #tpu.pipeline_mode<synchronous>, transform_indices = @transform_11, window_bounds = array<i64: 32, 512>}, {pipeline_mode = #tpu.pipeline_mode<synchronous>, transform_indices = @transform_12, window_bounds = array<i64: 512, 128>}, {pipeline_mode = #tpu.pipeline_mode<synchronous>, transform_indices = @transform_13, window_bounds = array<i64: 1, 128>}, {transform_indices = @transform_14, window_bounds = array<i64: 16, 128>}]} {
    %c0 = arith.constant 0 : index
    %c0_0 = arith.constant 0 : index
    %0 = vector.load %arg1[%c0, %c0_0] : memref<16x128xf32, #tpu.memory_space<vmem>>, vector<16x128xf32>
    %c0_1 = arith.constant 0 : index
    %c0_2 = arith.constant 0 : index
    %1 = vector.load %arg2[%c0_1, %c0_2] : memref<128x512xf32, #tpu.memory_space<vmem>>, vector<128x512xf32>
    %cst = arith.constant dense<0.000000e+00> : vector<16x512xf32>
    %2 = tpu.matmul %0, %1, %cst {dimension_numbers = #tpu.dot_dimension_numbers<[1], [0], [0], [1], [0, 0, 1, 1], [], []>} : vector<16x128xf32>, vector<128x512xf32>, vector<16x512xf32> -> vector<16x512xf32>
    %c0_3 = arith.constant 0 : index
    %c0_4 = arith.constant 0 : index
    %3 = vector.load %arg3[%c0_3, %c0_4] : memref<1x512xf32, #tpu.memory_space<vmem>>, vector<1x512xf32>
    %4 = vector.broadcast %3 : vector<1x512xf32> to vector<16x512xf32>
    %5 = arith.addf %2, %4 : vector<16x512xf32>
    %6 = arith.negf %5 : vector<16x512xf32>
    %7 = math.exp %6 : vector<16x512xf32>
    %cst_5 = arith.constant 1.000000e+00 : f32
    %8 = vector.broadcast %cst_5 : f32 to vector<16x512xf32>
    %9 = arith.addf %8, %7 : vector<16x512xf32>
    %10 = arith.divf %8, %9 : vector<16x512xf32>
    %11 = arith.mulf %5, %10 : vector<16x512xf32>
    %c0_6 = arith.constant 0 : index
    %c0_7 = arith.constant 0 : index
    %c0_8 = arith.constant 0 : index
    %12 = vector.load %arg4[%c0_6, %c0_7, %c0_8] : memref<3x16x16xf32, #tpu.memory_space<vmem>>, vector<1x16x16xf32>
    %13 = vector.shape_cast %12 : vector<1x16x16xf32> to vector<16x16xf32>
    %cst_9 = arith.constant dense<0.000000e+00> : vector<16x512xf32>
    %14 = tpu.matmul %13, %11, %cst_9 {dimension_numbers = #tpu.dot_dimension_numbers<[1], [0], [0], [1], [0, 0, 1, 1], [], []>} : vector<16x16xf32>, vector<16x512xf32>, vector<16x512xf32> -> vector<16x512xf32>
    %c0_10 = arith.constant 0 : index
    %c0_11 = arith.constant 0 : index
    %c0_12 = arith.constant 0 : index
    %15 = vector.load %arg5[%c0_10, %c0_11, %c0_12] : memref<3x512x512xf32, #tpu.memory_space<vmem>>, vector<1x512x512xf32>
    %16 = vector.shape_cast %15 : vector<1x512x512xf32> to vector<512x512xf32>
    %cst_13 = arith.constant dense<0.000000e+00> : vector<16x512xf32>
    %17 = tpu.matmul %14, %16, %cst_13 {dimension_numbers = #tpu.dot_dimension_numbers<[1], [0], [0], [1], [0, 0, 1, 1], [], []>} : vector<16x512xf32>, vector<512x512xf32>, vector<16x512xf32> -> vector<16x512xf32>
    %c1 = arith.constant 1 : index
    %c0_14 = arith.constant 0 : index
    %c0_15 = arith.constant 0 : index
    %18 = vector.load %arg5[%c1, %c0_14, %c0_15] : memref<3x512x512xf32, #tpu.memory_space<vmem>>, vector<1x512x512xf32>
    %19 = vector.shape_cast %18 : vector<1x512x512xf32> to vector<512x512xf32>
    %cst_16 = arith.constant dense<0.000000e+00> : vector<16x512xf32>
    %20 = tpu.matmul %11, %19, %cst_16 {dimension_numbers = #tpu.dot_dimension_numbers<[1], [0], [0], [1], [0, 0, 1, 1], [], []>} : vector<16x512xf32>, vector<512x512xf32>, vector<16x512xf32> -> vector<16x512xf32>
    %21 = arith.addf %17, %20 : vector<16x512xf32>
    %c2 = arith.constant 2 : index
    %c0_17 = arith.constant 0 : index
    %c0_18 = arith.constant 0 : index
    %22 = vector.load %arg4[%c2, %c0_17, %c0_18] : memref<3x16x16xf32, #tpu.memory_space<vmem>>, vector<1x16x16xf32>
    %23 = vector.shape_cast %22 : vector<1x16x16xf32> to vector<16x16xf32>
    %cst_19 = arith.constant dense<0.000000e+00> : vector<16x512xf32>
    %24 = tpu.matmul %23, %11, %cst_19 {dimension_numbers = #tpu.dot_dimension_numbers<[1], [0], [0], [1], [0, 0, 1, 1], [], []>} : vector<16x16xf32>, vector<16x512xf32>, vector<16x512xf32> -> vector<16x512xf32>
    %c2_20 = arith.constant 2 : index
    %c0_21 = arith.constant 0 : index
    %c0_22 = arith.constant 0 : index
    %25 = vector.load %arg5[%c2_20, %c0_21, %c0_22] : memref<3x512x512xf32, #tpu.memory_space<vmem>>, vector<1x512x512xf32>
    %26 = vector.shape_cast %25 : vector<1x512x512xf32> to vector<512x512xf32>
    %cst_23 = arith.constant dense<0.000000e+00> : vector<16x512xf32>
    %27 = tpu.matmul %24, %26, %cst_23 {dimension_numbers = #tpu.dot_dimension_numbers<[1], [0], [0], [1], [0, 0, 1, 1], [], []>} : vector<16x512xf32>, vector<512x512xf32>, vector<16x512xf32> -> vector<16x512xf32>
    %28 = arith.addf %21, %27 : vector<16x512xf32>
    %c0_24 = arith.constant 0 : index
    %c0_25 = arith.constant 0 : index
    %29 = vector.load %arg6[%c0_24, %c0_25] : memref<1x512xf32, #tpu.memory_space<vmem>>, vector<1x512xf32>
    %30 = vector.broadcast %29 : vector<1x512xf32> to vector<16x512xf32>
    %31 = arith.addf %28, %30 : vector<16x512xf32>
    %32 = arith.negf %31 : vector<16x512xf32>
    %33 = math.exp %32 : vector<16x512xf32>
    %cst_26 = arith.constant 1.000000e+00 : f32
    %34 = vector.broadcast %cst_26 : f32 to vector<16x512xf32>
    %35 = arith.addf %34, %33 : vector<16x512xf32>
    %36 = arith.divf %34, %35 : vector<16x512xf32>
    %37 = arith.mulf %31, %36 : vector<16x512xf32>
    %cst_27 = arith.constant dense<0.000000e+00> : vector<512xf32>
    %38 = vector.multi_reduction <add>, %37, %cst_27 [0] : vector<16x512xf32> to vector<512xf32>
    %39 = vector.shape_cast %38 : vector<512xf32> to vector<1x512xf32>
    %c0_28 = arith.constant 0 : index
    %c0_29 = arith.constant 0 : index
    %40 = vector.load %arg11[%c0_28, %c0_29] : memref<512x32xf32, #tpu.memory_space<vmem>>, vector<512x32xf32>
    %cst_30 = arith.constant dense<0.000000e+00> : vector<1x32xf32>
    %41 = tpu.matmul %39, %40, %cst_30 {dimension_numbers = #tpu.dot_dimension_numbers<[1], [0], [0], [1], [0, 0, 1, 1], [], []>} : vector<1x512xf32>, vector<512x32xf32>, vector<1x32xf32> -> vector<1x32xf32>
    %c0_31 = arith.constant 0 : index
    %c0_32 = arith.constant 0 : index
    %42 = vector.load %arg7[%c0_31, %c0_32] : memref<32x2xf32, #tpu.memory_space<vmem>>, vector<32x2xf32>
    %cst_33 = arith.constant dense<0.000000e+00> : vector<1x2xf32>
    %43 = tpu.matmul %41, %42, %cst_33 {dimension_numbers = #tpu.dot_dimension_numbers<[1], [0], [0], [1], [0, 0, 1, 1], [], []>} : vector<1x32xf32>, vector<32x2xf32>, vector<1x2xf32> -> vector<1x2xf32>
    %c0_34 = arith.constant 0 : index
    %c0_35 = arith.constant 0 : index
    %44 = vector.load %arg8[%c0_34, %c0_35] : memref<1x2xf32, #tpu.memory_space<vmem>>, vector<1x2xf32>
    %45 = arith.addf %43, %44 : vector<1x2xf32>
    %46 = arith.negf %45 : vector<1x2xf32>
    %47 = math.exp %46 : vector<1x2xf32>
    %cst_36 = arith.constant 1.000000e+00 : f32
    %48 = vector.broadcast %cst_36 : f32 to vector<1x2xf32>
    %49 = arith.addf %48, %47 : vector<1x2xf32>
    %50 = arith.divf %48, %49 : vector<1x2xf32>
    %51 = arith.mulf %45, %50 : vector<1x2xf32>
    %c0_37 = arith.constant 0 : index
    %c0_38 = arith.constant 0 : index
    %52 = vector.load %arg9[%c0_37, %c0_38] : memref<2x32xf32, #tpu.memory_space<vmem>>, vector<2x32xf32>
    %cst_39 = arith.constant dense<0.000000e+00> : vector<1x32xf32>
    %53 = tpu.matmul %51, %52, %cst_39 {dimension_numbers = #tpu.dot_dimension_numbers<[1], [0], [0], [1], [0, 0, 1, 1], [], []>} : vector<1x2xf32>, vector<2x32xf32>, vector<1x32xf32> -> vector<1x32xf32>
    %c0_40 = arith.constant 0 : index
    %c0_41 = arith.constant 0 : index
    %54 = vector.load %arg10[%c0_40, %c0_41] : memref<1x32xf32, #tpu.memory_space<vmem>>, vector<1x32xf32>
    %55 = arith.addf %53, %54 : vector<1x32xf32>
    %56 = arith.negf %55 : vector<1x32xf32>
    %57 = math.exp %56 : vector<1x32xf32>
    %cst_42 = arith.constant 1.000000e+00 : f32
    %58 = vector.broadcast %cst_42 : f32 to vector<1x32xf32>
    %59 = arith.addf %58, %57 : vector<1x32xf32>
    %60 = arith.divf %58, %59 : vector<1x32xf32>
    %c0_43 = arith.constant 0 : index
    %c0_44 = arith.constant 0 : index
    %61 = vector.load %arg12[%c0_43, %c0_44] : memref<32x512xf32, #tpu.memory_space<vmem>>, vector<32x512xf32>
    %cst_45 = arith.constant dense<0.000000e+00> : vector<1x512xf32>
    %62 = tpu.matmul %60, %61, %cst_45 {dimension_numbers = #tpu.dot_dimension_numbers<[1], [0], [0], [1], [0, 0, 1, 1], [], []>} : vector<1x32xf32>, vector<32x512xf32>, vector<1x512xf32> -> vector<1x512xf32>
    %63 = vector.broadcast %62 : vector<1x512xf32> to vector<16x512xf32>
    %64 = arith.mulf %37, %63 : vector<16x512xf32>
    %c0_46 = arith.constant 0 : index
    %c0_47 = arith.constant 0 : index
    %65 = vector.load %arg13[%c0_46, %c0_47] : memref<512x128xf32, #tpu.memory_space<vmem>>, vector<512x128xf32>
    %cst_48 = arith.constant dense<0.000000e+00> : vector<16x128xf32>
    %66 = tpu.matmul %64, %65, %cst_48 {dimension_numbers = #tpu.dot_dimension_numbers<[1], [0], [0], [1], [0, 0, 1, 1], [], []>} : vector<16x512xf32>, vector<512x128xf32>, vector<16x128xf32> -> vector<16x128xf32>
    %c0_49 = arith.constant 0 : index
    %c0_50 = arith.constant 0 : index
    %67 = vector.load %arg14[%c0_49, %c0_50] : memref<1x128xf32, #tpu.memory_space<vmem>>, vector<1x128xf32>
    %68 = vector.broadcast %67 : vector<1x128xf32> to vector<16x128xf32>
    %69 = arith.addf %66, %68 : vector<16x128xf32>
    %70 = arith.addf %69, %0 : vector<16x128xf32>
    %c0_51 = arith.constant 0 : index
    %c0_52 = arith.constant 0 : index
    %71 = vector.load %arg15[%c0_51, %c0_52] : memref<16x128xf32, #tpu.memory_space<vmem>>, vector<16x128xf32>
    tpu.vector_store %arg15[%c0_51, %c0_52], %70 {strides = array<i32>} : memref<16x128xf32, #tpu.memory_space<vmem>>, vector<16x128xf32>,
    return
  }
  func.func @transform_0(%arg0: i32) -> (i32, i32) {
    %c0_i32 = arith.constant 0 : i32
    %c0_i32_0 = arith.constant 0 : i32
    return %arg0, %c0_i32 : i32, i32
  }
  func.func @transform_1(%arg0: i32) -> (i32, i32) {
    %c0_i32 = arith.constant 0 : i32
    %c0_i32_0 = arith.constant 0 : i32
    %c0_i32_1 = arith.constant 0 : i32
    return %c0_i32, %c0_i32_0 : i32, i32
  }
  func.func @transform_2(%arg0: i32) -> (i32, i32) {
    %c0_i32 = arith.constant 0 : i32
    %c0_i32_0 = arith.constant 0 : i32
    %c0_i32_1 = arith.constant 0 : i32
    return %c0_i32, %c0_i32_0 : i32, i32
  }
  func.func @transform_3(%arg0: i32) -> (i32, i32, i32) {
    %c0_i32 = arith.constant 0 : i32
    %c0_i32_0 = arith.constant 0 : i32
    %c0_i32_1 = arith.constant 0 : i32
    %c0_i32_2 = arith.constant 0 : i32
    return %c0_i32, %c0_i32_0, %c0_i32_1 : i32, i32, i32
  }
  func.func @transform_4(%arg0: i32) -> (i32, i32, i32) {
    %c0_i32 = arith.constant 0 : i32
    %c0_i32_0 = arith.constant 0 : i32
    %c0_i32_1 = arith.constant 0 : i32
    %c0_i32_2 = arith.constant 0 : i32
    return %c0_i32, %c0_i32_0, %c0_i32_1 : i32, i32, i32
  }
  func.func @transform_5(%arg0: i32) -> (i32, i32) {
    %c0_i32 = arith.constant 0 : i32
    %c0_i32_0 = arith.constant 0 : i32
    %c0_i32_1 = arith.constant 0 : i32
    return %c0_i32, %c0_i32_0 : i32, i32
  }
  func.func @transform_6(%arg0: i32) -> (i32, i32) {
    %c0_i32 = arith.constant 0 : i32
    %c0_i32_0 = arith.constant 0 : i32
    %c0_i32_1 = arith.constant 0 : i32
    return %c0_i32, %c0_i32_0 : i32, i32
  }
  func.func @transform_7(%arg0: i32) -> (i32, i32) {
    %c0_i32 = arith.constant 0 : i32
    %c0_i32_0 = arith.constant 0 : i32
    %c0_i32_1 = arith.constant 0 : i32
    return %c0_i32, %c0_i32_0 : i32, i32
  }
  func.func @transform_8(%arg0: i32) -> (i32, i32) {
    %c0_i32 = arith.constant 0 : i32
    %c0_i32_0 = arith.constant 0 : i32
    %c0_i32_1 = arith.constant 0 : i32
    return %c0_i32, %c0_i32_0 : i32, i32
  }
  func.func @transform_9(%arg0: i32) -> (i32, i32) {
    %c0_i32 = arith.constant 0 : i32
    %c0_i32_0 = arith.constant 0 : i32
    %c0_i32_1 = arith.constant 0 : i32
    return %c0_i32, %c0_i32_0 : i32, i32
  }
  func.func @transform_10(%arg0: i32) -> (i32, i32) {
    %c0_i32 = arith.constant 0 : i32
    %c0_i32_0 = arith.constant 0 : i32
    %c0_i32_1 = arith.constant 0 : i32
    return %c0_i32, %c0_i32_0 : i32, i32
  }
  func.func @transform_11(%arg0: i32) -> (i32, i32) {
    %c0_i32 = arith.constant 0 : i32
    %c0_i32_0 = arith.constant 0 : i32
    %c0_i32_1 = arith.constant 0 : i32
    return %c0_i32, %c0_i32_0 : i32, i32
  }
  func.func @transform_12(%arg0: i32) -> (i32, i32) {
    %c0_i32 = arith.constant 0 : i32
    %c0_i32_0 = arith.constant 0 : i32
    %c0_i32_1 = arith.constant 0 : i32
    return %c0_i32, %c0_i32_0 : i32, i32
  }
  func.func @transform_13(%arg0: i32) -> (i32, i32) {
    %c0_i32 = arith.constant 0 : i32
    %c0_i32_0 = arith.constant 0 : i32
    %c0_i32_1 = arith.constant 0 : i32
    return %c0_i32, %c0_i32_0 : i32, i32
  }
  func.func @transform_14(%arg0: i32) -> (i32, i32) {
    %c0_i32 = arith.constant 0 : i32
    %c0_i32_0 = arith.constant 0 : i32
    return %arg0, %c0_i32 : i32, i32
  }
}

</mosaic_0001>

<llo_original>
// kernel: tpu_custom_call.1
$region0: #{tpu_custom_call.1}
  #allocation0 [shape = 'u32[]', space=smem, size = 0x4, offset = 0x4, fixed_abs, tag = 'smem constant byte address 0x4 - core index']
  #allocation1 [shape = 'u32[144,128]{1,0:T(1,128)}', space=vmem, size = 0x12000, scoped, tag = 'internal scratch']
  %s0 = inlined_call_operand.hbm [shape: f32[32,128], index: 0, kind: input, shape index: {}]
  %s1 = inlined_call_operand.hbm [shape: f32[128,512], index: 1, kind: input, shape index: {}]
  %s2 = inlined_call_operand.hbm [shape: f32[1,512], index: 2, kind: input, shape index: {}]
  %s3 = inlined_call_operand.hbm [shape: f32[3,16,16], index: 3, kind: input, shape index: {}]
  %s4 = inlined_call_operand.hbm [shape: f32[3,512,512], index: 4, kind: input, shape index: {}]
  %s5 = inlined_call_operand.hbm [shape: f32[1,512], index: 5, kind: input, shape index: {}]
  %s6 = inlined_call_operand.vmem [shape: f32[32,2], index: 6, kind: input, shape index: {}]
  %s7 = inlined_call_operand.hbm [shape: f32[1,2], index: 7, kind: input, shape index: {}]
  %s8 = inlined_call_operand.hbm [shape: f32[2,32], index: 8, kind: input, shape index: {}]
  %s9 = inlined_call_operand.hbm [shape: f32[1,32], index: 9, kind: input, shape index: {}]
  %s10 = inlined_call_operand.vmem [shape: f32[512,32], index: 10, kind: input, shape index: {}]
  %s11 = inlined_call_operand.hbm [shape: f32[32,512], index: 11, kind: input, shape index: {}]
  %s12 = inlined_call_operand.hbm [shape: f32[512,128], index: 12, kind: input, shape index: {}]
  %s13 = inlined_call_operand.hbm [shape: f32[1,128], index: 13, kind: input, shape index: {}]
  %s14 = inlined_call_operand.hbm [shape: f32[32,128], index: 14, kind: output, shape index: {}]
  %s15 = sld [smem:[#allocation0]]
  $region137: #{tpu_custom_call.1} parent=0
    _
  %s17 = ssub.s32 1, %s15
  %s18 = scalar_select 0, %s17, %s15
  $region1: #{tpu_custom_call.1} parent=0
    #allocation2 [shape = 'u8[16384]{0}', space=vmem, size = 0x4000, scoped, tag = 'input window, operand 0']
    #allocation3 [shape = 's32[2]{0}', space=sflag, size = 0x8, scoped, tag = 'scoped memory for tpu_custom_call.1']
    #allocation4 [shape = 's32[2]{0}', space=sflag, size = 0x8, scoped, tag = 'scoped memory for tpu_custom_call.1']
    #allocation5 [shape = 'u8[262144]{0}', space=vmem, size = 0x40000, scoped, tag = 'input window, operand 1, single buffered']
    #allocation6 [shape = 's32[1]{0}', space=sflag, size = 0x4, scoped, tag = 'scoped memory for tpu_custom_call.1']
    #allocation7 [shape = 'u8[2048]{0}', space=vmem, size = 0x800, scoped, tag = 'input window, operand 2, single buffered']
    #allocation8 [shape = 'u8[24576]{0}', space=vmem, size = 0x6000, scoped, tag = 'input window, operand 3, single buffered']
    #allocation9 [shape = 's32[1]{0}', space=sflag, size = 0x4, scoped, tag = 'scoped memory for tpu_custom_call.1']
    #allocation10 [shape = 'u8[3145728]{0}', space=vmem, size = 0x300000, scoped, tag = 'input window, operand 4, single buffered']
    #allocation11 [shape = 'u8[2048]{0}', space=vmem, size = 0x800, scoped, tag = 'input window, operand 5, single buffered']
    #allocation12 [shape = 's32[1]{0}', space=sflag, size = 0x4, scoped, tag = 'scoped memory for tpu_custom_call.1']
    #allocation13 [shape = 'u8[512]{0}', space=vmem, size = 0x400, scoped, tag = 'input window, operand 7, single buffered']
    #allocation14 [shape = 'u8[1024]{0}', space=vmem, size = 0x400, scoped, tag = 'input window, operand 8, single buffered']
    #allocation15 [shape = 's32[1]{0}', space=sflag, size = 0x4, scoped, tag = 'scoped memory for tpu_custom_call.1']
    #allocation16 [shape = 'u8[512]{0}', space=vmem, size = 0x400, scoped, tag = 'input window, operand 9, single buffered']
    #allocation17 [shape = 'u8[65536]{0}', space=vmem, size = 0x10000, scoped, tag = 'input window, operand 11, single buffered']
    #allocation18 [shape = 's32[1]{0}', space=sflag, size = 0x4, scoped, tag = 'scoped memory for tpu_custom_call.1']
    #allocation19 [shape = 'u8[262144]{0}', space=vmem, size = 0x40000, scoped, tag = 'input window, operand 12, single buffered']
    #allocation20 [shape = 'u8[512]{0}', space=vmem, size = 0x400, scoped, tag = 'input window, operand 13, single buffered']
    #allocation21 [shape = 's32[1]{0}', space=sflag, size = 0x4, scoped, tag = 'scoped memory for tpu_custom_call.1']
    #allocation22 [shape = 'u8[16384]{0}', space=vmem, size = 0x4000, scoped, tag = 'output window, operand 0']
    %19 = vsyncpa [#allocation3], 0
    %s20 = scalar_lea.sflag [#allocation3], 1
    %21 = vsyncpa %s20, 0
    %22 = vsyncpa [#allocation6], 0
    %23 = vsyncpa [#allocation9], 0
    %24 = vsyncpa [#allocation12], 0
    %25 = vsyncpa [#allocation15], 0
    %26 = vsyncpa [#allocation18], 0
    %27 = vsyncpa [#allocation21], 0
    %28 = vsyncpa [#allocation4], 0
    %s29 = scalar_lea.sflag [#allocation4], 1
    %30 = vsyncpa %s29, 0
    loop: start=0, step=1, limit=4
    $region2: #{tpu_custom_call.1} parent=1 // loop_pre_header
      _
    $region3: #{tpu_custom_call.1} parent=1 // loop_header
      %s32 = sphi 0, %s36
      %p33 = scmp.ge.s32.totalorder %s32, 4
      %s42 = sphi 0, %s44
      %s45 = sphi 0, %s42
      %s46 = sphi 0, %s45
      %s62 = sphi 0, %s46
      %s66 = sphi 0, %s66
      %s68 = sphi 0, %s66
      %s69 = sphi 0, %s68
      %s83 = sphi 0, %s69
      %s87 = sphi 0, %s87
      %s89 = sphi 0, %s87
      %s90 = sphi 0, %s89
      %s104 = sphi 0, %s90
      %s108 = sphi 0, %s108
      %s110 = sphi 0, %s108
      %s111 = sphi 0, %s110
      %s125 = sphi 0, %s111
      %s129 = sphi 0, %s129
      %s131 = sphi 0, %s129
      %s132 = sphi 0, %s131
      %s146 = sphi 0, %s132
      %s150 = sphi 0, %s150
      %s152 = sphi 0, %s150
      %s153 = sphi 0, %s152
      %s167 = sphi 0, %s153
      %s171 = sphi 0, %s171
      %s173 = sphi 0, %s171
      %s174 = sphi 0, %s173
      %s188 = sphi 0, %s174
      %s192 = sphi 0, %s192
      %s194 = sphi 0, %s192
      %s195 = sphi 0, %s194
      %s209 = sphi 0, %s195
      %s213 = sphi 0, %s213
      %s215 = sphi 0, %s213
      %s216 = sphi 0, %s215
      %s230 = sphi 0, %s216
      %s234 = sphi 0, %s234
      %s236 = sphi 0, %s234
      %s237 = sphi 0, %s236
      %s251 = sphi 0, %s237
      %s255 = sphi 0, %s255
      %s257 = sphi 0, %s255
      %s258 = sphi 0, %s257
      %s272 = sphi 0, %s258
      %s276 = sphi 0, %s276
      %s278 = sphi 0, %s276
      %s279 = sphi 0, %s278
      %s293 = sphi 0, %s279
      %s297 = sphi 0, %s297
      %s299 = sphi 0, %s297
      %s300 = sphi 0, %s299
      %s314 = sphi 0, %s300
      %s318 = sphi 0, %s318
      %s320 = sphi 0, %s318
      %s321 = sphi 0, %s320
      %s335 = sphi 0, %s321
      %s341 = sphi 0, %s343
      %s344 = sphi 0, %s341
      %s345 = sphi 0, %s344
      %s361 = sphi 0, %s345
    $region4: #{tpu_custom_call.1} parent=1 // loop_header_branch
      %35 = sbr.rel (%p33) target = $region8
    $region5: #{tpu_custom_call.1} parent=1 // loop_body
      %s37 = ssub.s32 %s32, 1
      %s38 = ssub.s32 %s32, 2
      %s39 = sadd.s32 %s32, 1
      %s40 = ssub.s32 %s32, %s39
      %p41 = scmp.eq.s32.totalorder %s40, 0
      %s43 = sadd.s32 %s42, 1
      %s44 = scalar_select %p41, %s42, %s43
      %p47 = pneg %p41
      %p48 = scmp.eq.s32.totalorder %s32, 1
      %p49 = por %p47, %p48
      %p50 = scmp.ne.s32.totalorder %s42, %s45
      %p51 = scmp.eq.s32.totalorder %s32, 0
      %p52 = por %p50, %p51
      %p53 = scmp.ne.s32.totalorder %s42, %s45
      %p54 = scmp.eq.s32.totalorder %s37, 1
      %p55 = por %p53, %p54
      %p56 = scmp.ne.s32.totalorder %s45, %s46
      %p57 = scmp.eq.s32.totalorder %s37, 0
      %p58 = por %p56, %p57
      %p59 = scmp.ne.s32.totalorder %s45, %s46
      %p60 = scmp.eq.s32.totalorder %s38, 1
      %p61 = por %p59, %p60
      %p63 = scmp.ne.s32.totalorder %s46, %s62
      %p64 = scmp.eq.s32.totalorder %s38, 0
      %p65 = por %p63, %p64
      %s67 = sadd.s32 %s66, 1
      %p70 = scmp.eq.s32.totalorder %s32, 1
      %p71 = scmp.ne.s32.totalorder %s66, %s68
      %p72 = scmp.eq.s32.totalorder %s32, 0
      %p73 = por %p71, %p72
      %p74 = scmp.ne.s32.totalorder %s66, %s68
      %p75 = scmp.eq.s32.totalorder %s37, 1
      %p76 = por %p74, %p75
      %p77 = scmp.ne.s32.totalorder %s68, %s69
      %p78 = scmp.eq.s32.totalorder %s37, 0
      %p79 = por %p77, %p78
      %p80 = scmp.ne.s32.totalorder %s68, %s69
      %p81 = scmp.eq.s32.totalorder %s38, 1
      %p82 = por %p80, %p81
      %p84 = scmp.ne.s32.totalorder %s69, %s83
      %p85 = scmp.eq.s32.totalorder %s38, 0
      %p86 = por %p84, %p85
      %s88 = sadd.s32 %s87, 1
      %p91 = scmp.eq.s32.totalorder %s32, 1
      %p92 = scmp.ne.s32.totalorder %s87, %s89
      %p93 = scmp.eq.s32.totalorder %s32, 0
      %p94 = por %p92, %p93
      %p95 = scmp.ne.s32.totalorder %s87, %s89
      %p96 = scmp.eq.s32.totalorder %s37, 1
      %p97 = por %p95, %p96
      %p98 = scmp.ne.s32.totalorder %s89, %s90
      %p99 = scmp.eq.s32.totalorder %s37, 0
      %p100 = por %p98, %p99
      %p101 = scmp.ne.s32.totalorder %s89, %s90
      %p102 = scmp.eq.s32.totalorder %s38, 1
      %p103 = por %p101, %p102
      %p105 = scmp.ne.s32.totalorder %s90, %s104
      %p106 = scmp.eq.s32.totalorder %s38, 0
      %p107 = por %p105, %p106
      %s109 = sadd.s32 %s108, 1
      %p112 = scmp.eq.s32.totalorder %s32, 1
      %p113 = scmp.ne.s32.totalorder %s108, %s110
      %p114 = scmp.eq.s32.totalorder %s32, 0
      %p115 = por %p113, %p114
      %p116 = scmp.ne.s32.totalorder %s108, %s110
      %p117 = scmp.eq.s32.totalorder %s37, 1
      %p118 = por %p116, %p117
      %p119 = scmp.ne.s32.totalorder %s110, %s111
      %p120 = scmp.eq.s32.totalorder %s37, 0
      %p121 = por %p119, %p120
      %p122 = scmp.ne.s32.totalorder %s110, %s111
      %p123 = scmp.eq.s32.totalorder %s38, 1
      %p124 = por %p122, %p123
      %p126 = scmp.ne.s32.totalorder %s111, %s125
      %p127 = scmp.eq.s32.totalorder %s38, 0
      %p128 = por %p126, %p127
      %s130 = sadd.s32 %s129, 1
      %p133 = scmp.eq.s32.totalorder %s32, 1
      %p134 = scmp.ne.s32.totalorder %s129, %s131
      %p135 = scmp.eq.s32.totalorder %s32, 0
      %p136 = por %p134, %p135
      %p137 = scmp.ne.s32.totalorder %s129, %s131
      %p138 = scmp.eq.s32.totalorder %s37, 1
      %p139 = por %p137, %p138
      %p140 = scmp.ne.s32.totalorder %s131, %s132
      %p141 = scmp.eq.s32.totalorder %s37, 0
      %p142 = por %p140, %p141
      %p143 = scmp.ne.s32.totalorder %s131, %s132
      %p144 = scmp.eq.s32.totalorder %s38, 1
      %p145 = por %p143, %p144
      %p147 = scmp.ne.s32.totalorder %s132, %s146
      %p148 = scmp.eq.s32.totalorder %s38, 0
      %p149 = por %p147, %p148
      %s151 = sadd.s32 %s150, 1
      %p154 = scmp.eq.s32.totalorder %s32, 1
      %p155 = scmp.ne.s32.totalorder %s150, %s152
      %p156 = scmp.eq.s32.totalorder %s32, 0
      %p157 = por %p155, %p156
      %p158 = scmp.ne.s32.totalorder %s150, %s152
      %p159 = scmp.eq.s32.totalorder %s37, 1
      %p160 = por %p158, %p159
      %p161 = scmp.ne.s32.totalorder %s152, %s153
      %p162 = scmp.eq.s32.totalorder %s37, 0
      %p163 = por %p161, %p162
      %p164 = scmp.ne.s32.totalorder %s152, %s153
      %p165 = scmp.eq.s32.totalorder %s38, 1
      %p166 = por %p164, %p165
      %p168 = scmp.ne.s32.totalorder %s153, %s167
      %p169 = scmp.eq.s32.totalorder %s38, 0
      %p170 = por %p168, %p169
      %s172 = sadd.s32 %s171, 1
      %p175 = scmp.eq.s32.totalorder %s32, 1
      %p176 = scmp.ne.s32.totalorder %s171, %s173
      %p177 = scmp.eq.s32.totalorder %s32, 0
      %p178 = por %p176, %p177
      %p179 = scmp.ne.s32.totalorder %s171, %s173
      %p180 = scmp.eq.s32.totalorder %s37, 1
      %p181 = por %p179, %p180
      %p182 = scmp.ne.s32.totalorder %s173, %s174
      %p183 = scmp.eq.s32.totalorder %s37, 0
      %p184 = por %p182, %p183
      %p185 = scmp.ne.s32.totalorder %s173, %s174
      %p186 = scmp.eq.s32.totalorder %s38, 1
      %p187 = por %p185, %p186
      %p189 = scmp.ne.s32.totalorder %s174, %s188
      %p190 = scmp.eq.s32.totalorder %s38, 0
      %p191 = por %p189, %p190
      %s193 = sadd.s32 %s192, 1
      %p196 = scmp.eq.s32.totalorder %s32, 1
      %p197 = scmp.ne.s32.totalorder %s192, %s194
      %p198 = scmp.eq.s32.totalorder %s32, 0
      %p199 = por %p197, %p198
      %p200 = scmp.ne.s32.totalorder %s192, %s194
      %p201 = scmp.eq.s32.totalorder %s37, 1
      %p202 = por %p200, %p201
      %p203 = scmp.ne.s32.totalorder %s194, %s195
      %p204 = scmp.eq.s32.totalorder %s37, 0
      %p205 = por %p203, %p204
      %p206 = scmp.ne.s32.totalorder %s194, %s195
      %p207 = scmp.eq.s32.totalorder %s38, 1
      %p208 = por %p206, %p207
      %p210 = scmp.ne.s32.totalorder %s195, %s209
      %p211 = scmp.eq.s32.totalorder %s38, 0
      %p212 = por %p210, %p211
      %s214 = sadd.s32 %s213, 1
      %p217 = scmp.eq.s32.totalorder %s32, 1
      %p218 = scmp.ne.s32.totalorder %s213, %s215
      %p219 = scmp.eq.s32.totalorder %s32, 0
      %p220 = por %p218, %p219
      %p221 = scmp.ne.s32.totalorder %s213, %s215
      %p222 = scmp.eq.s32.totalorder %s37, 1
      %p223 = por %p221, %p222
      %p224 = scmp.ne.s32.totalorder %s215, %s216
      %p225 = scmp.eq.s32.totalorder %s37, 0
      %p226 = por %p224, %p225
      %p227 = scmp.ne.s32.totalorder %s215, %s216
      %p228 = scmp.eq.s32.totalorder %s38, 1
      %p229 = por %p227, %p228
      %p231 = scmp.ne.s32.totalorder %s216, %s230
      %p232 = scmp.eq.s32.totalorder %s38, 0
      %p233 = por %p231, %p232
      %s235 = sadd.s32 %s234, 1
      %p238 = scmp.eq.s32.totalorder %s32, 1
      %p239 = scmp.ne.s32.totalorder %s234, %s236
      %p240 = scmp.eq.s32.totalorder %s32, 0
      %p241 = por %p239, %p240
      %p242 = scmp.ne.s32.totalorder %s234, %s236
      %p243 = scmp.eq.s32.totalorder %s37, 1
      %p244 = por %p242, %p243
      %p245 = scmp.ne.s32.totalorder %s236, %s237
      %p246 = scmp.eq.s32.totalorder %s37, 0
      %p247 = por %p245, %p246
      %p248 = scmp.ne.s32.totalorder %s236, %s237
      %p249 = scmp.eq.s32.totalorder %s38, 1
      %p250 = por %p248, %p249
      %p252 = scmp.ne.s32.totalorder %s237, %s251
      %p253 = scmp.eq.s32.totalorder %s38, 0
      %p254 = por %p252, %p253
      %s256 = sadd.s32 %s255, 1
      %p259 = scmp.eq.s32.totalorder %s32, 1
      %p260 = scmp.ne.s32.totalorder %s255, %s257
      %p261 = scmp.eq.s32.totalorder %s32, 0
      %p262 = por %p260, %p261
      %p263 = scmp.ne.s32.totalorder %s255, %s257
      %p264 = scmp.eq.s32.totalorder %s37, 1
      %p265 = por %p263, %p264
      %p266 = scmp.ne.s32.totalorder %s257, %s258
      %p267 = scmp.eq.s32.totalorder %s37, 0
      %p268 = por %p266, %p267
      %p269 = scmp.ne.s32.totalorder %s257, %s258
      %p270 = scmp.eq.s32.totalorder %s38, 1
      %p271 = por %p269, %p270
      %p273 = scmp.ne.s32.totalorder %s258, %s272
      %p274 = scmp.eq.s32.totalorder %s38, 0
      %p275 = por %p273, %p274
      %s277 = sadd.s32 %s276, 1
      %p280 = scmp.eq.s32.totalorder %s32, 1
      %p281 = scmp.ne.s32.totalorder %s276, %s278
      %p282 = scmp.eq.s32.totalorder %s32, 0
      %p283 = por %p281, %p282
      %p284 = scmp.ne.s32.totalorder %s276, %s278
      %p285 = scmp.eq.s32.totalorder %s37, 1
      %p286 = por %p284, %p285
      %p287 = scmp.ne.s32.totalorder %s278, %s279
      %p288 = scmp.eq.s32.totalorder %s37, 0
      %p289 = por %p287, %p288
      %p290 = scmp.ne.s32.totalorder %s278, %s279
      %p291 = scmp.eq.s32.totalorder %s38, 1
      %p292 = por %p290, %p291
      %p294 = scmp.ne.s32.totalorder %s279, %s293
      %p295 = scmp.eq.s32.totalorder %s38, 0
      %p296 = por %p294, %p295
      %s298 = sadd.s32 %s297, 1
      %p301 = scmp.eq.s32.totalorder %s32, 1
      %p302 = scmp.ne.s32.totalorder %s297, %s299
      %p303 = scmp.eq.s32.totalorder %s32, 0
      %p304 = por %p302, %p303
      %p305 = scmp.ne.s32.totalorder %s297, %s299
      %p306 = scmp.eq.s32.totalorder %s37, 1
      %p307 = por %p305, %p306
      %p308 = scmp.ne.s32.totalorder %s299, %s300
      %p309 = scmp.eq.s32.totalorder %s37, 0
      %p310 = por %p308, %p309
      %p311 = scmp.ne.s32.totalorder %s299, %s300
      %p312 = scmp.eq.s32.totalorder %s38, 1
      %p313 = por %p311, %p312
      %p315 = scmp.ne.s32.totalorder %s300, %s314
      %p316 = scmp.eq.s32.totalorder %s38, 0
      %p317 = por %p315, %p316
      %s319 = sadd.s32 %s318, 1
      %p322 = scmp.eq.s32.totalorder %s32, 1
      %p323 = scmp.ne.s32.totalorder %s318, %s320
      %p324 = scmp.eq.s32.totalorder %s32, 0
      %p325 = por %p323, %p324
      %p326 = scmp.ne.s32.totalorder %s318, %s320
      %p327 = scmp.eq.s32.totalorder %s37, 1
      %p328 = por %p326, %p327
      %p329 = scmp.ne.s32.totalorder %s320, %s321
      %p330 = scmp.eq.s32.totalorder %s37, 0
      %p331 = por %p329, %p330
      %p332 = scmp.ne.s32.totalorder %s320, %s321
      %p333 = scmp.eq.s32.totalorder %s38, 1
      %p334 = por %p332, %p333
      %p336 = scmp.ne.s32.totalorder %s321, %s335
      %p337 = scmp.eq.s32.totalorder %s38, 0
      %p338 = por %p336, %p337
      %s339 = ssub.s32 %s32, %s39
      %p340 = scmp.eq.s32.totalorder %s339, 0
      %s342 = sadd.s32 %s341, 1
      %s343 = scalar_select %p340, %s341, %s342
      %p346 = pneg %p340
      %p347 = scmp.eq.s32.totalorder %s32, 1
      %p348 = por %p346, %p347
      %p349 = scmp.ne.s32.totalorder %s341, %s344
      %p350 = scmp.eq.s32.totalorder %s32, 0
      %p351 = por %p349, %p350
      %p352 = scmp.ne.s32.totalorder %s341, %s344
      %p353 = scmp.eq.s32.totalorder %s37, 1
      %p354 = por %p352, %p353
      %p355 = scmp.ne.s32.totalorder %s344, %s345
      %p356 = scmp.eq.s32.totalorder %s37, 0
      %p357 = por %p355, %p356
      %p358 = scmp.ne.s32.totalorder %s344, %s345
      %p359 = scmp.eq.s32.totalorder %s38, 1
      %p360 = por %p358, %p359
      %p362 = scmp.ne.s32.totalorder %s345, %s361
      %p363 = scmp.eq.s32.totalorder %s38, 0
      %p364 = por %p362, %p363
      %p365 = scmp.le.s32.totalorder 1, %s32
      %p366 = scmp.lt.s32.totalorder %s32, 3
      %p367 = pnand %p365, %p366
      %p368 = pneg %p367
      // Predicated region
      $region9: #{tpu_custom_call.1} parent=5 // pred_check
        _
      $region10: #{tpu_custom_call.1} parent=5 // pred_check_branch
        %370 = sbr.rel (%p367) target = $region12
      $region11: #{tpu_custom_call.1} parent=5 // pred_region
        %s371 = ssub.s32 %s32, 1
        // Predicated region
        $region13: #{tpu_custom_call.1} parent=11 // pred_check
          %p372 = pneg %p79
        $region14: #{tpu_custom_call.1} parent=11 // pred_check_branch
          %374 = sbr.rel (%p372) target = $region16
        $region15: #{tpu_custom_call.1} parent=11 // pred_region
          %s376 = ssub.s32 8192, 8192
          %377 = vsyncadd [#allocation6], %s376
          %s378 = sshll.u32 [#allocation5], 4
          %s379 = int_to_ptr.vmem [resolvable:$true] %s378
          %384 = dma.hbm_to_vmem [thread:$0]  %s1, 8192, %s379, [#allocation6], 512, 512, 32
        $region16: #{tpu_custom_call.1} parent=11 // pred_fallthru
          _
        // Predicated region
        $region17: #{tpu_custom_call.1} parent=11 // pred_check
          %p385 = pneg %p100
        $region18: #{tpu_custom_call.1} parent=11 // pred_check_branch
          %387 = sbr.rel (%p385) target = $region20
        $region19: #{tpu_custom_call.1} parent=11 // pred_region
          %s389 = ssub.s32 64, 64
          %390 = vsyncadd [#allocation6], %s389
          %s392 = sshll.u32 [#allocation7], 4
          %s393 = int_to_ptr.vmem [resolvable:$true] %s392
          %395 = dma.hbm_to_vmem [thread:$0]  %s2, 64, %s393, [#allocation6]
        $region20: #{tpu_custom_call.1} parent=11 // pred_fallthru
          _
        // Predicated region
        $region21: #{tpu_custom_call.1} parent=11 // pred_check
          %p396 = pneg %p121
        $region22: #{tpu_custom_call.1} parent=11 // pred_check_branch
          %398 = sbr.rel (%p396) target = $region24
        $region23: #{tpu_custom_call.1} parent=11 // pred_region
          %s400 = ssub.s32 768, 768
          %401 = vsyncadd [#allocation9], %s400
          %s402 = sshll.u32 [#allocation8], 4
          %s403 = int_to_ptr.vmem [resolvable:$true] %s402
          %408 = dma.hbm_to_vmem [thread:$0]  %s3, 768, %s403, [#allocation9], 128, 128, 8
        $region24: #{tpu_custom_call.1} parent=11 // pred_fallthru
          _
        // Predicated region
        $region25: #{tpu_custom_call.1} parent=11 // pred_check
          %p409 = pneg %p142
        $region26: #{tpu_custom_call.1} parent=11 // pred_check_branch
          %411 = sbr.rel (%p409) target = $region28
        $region27: #{tpu_custom_call.1} parent=11 // pred_region
          %s413 = ssub.s32 98304, 98304
          %414 = vsyncadd [#allocation9], %s413
          %s415 = sshll.u32 [#allocation10], 4
          %s416 = int_to_ptr.vmem [resolvable:$true] %s415
          %421 = dma.hbm_to_vmem [thread:$0]  %s4, 98304, %s416, [#allocation9], 512, 512, 32
        $region28: #{tpu_custom_call.1} parent=11 // pred_fallthru
          _
        // Predicated region
        $region29: #{tpu_custom_call.1} parent=11 // pred_check
          %p422 = pneg %p163
        $region30: #{tpu_custom_call.1} parent=11 // pred_check_branch
          %424 = sbr.rel (%p422) target = $region32
        $region31: #{tpu_custom_call.1} parent=11 // pred_region
          %s426 = ssub.s32 64, 64
          %427 = vsyncadd [#allocation12], %s426
          %s429 = sshll.u32 [#allocation11], 4
          %s430 = int_to_ptr.vmem [resolvable:$true] %s429
          %432 = dma.hbm_to_vmem [thread:$0]  %s5, 64, %s430, [#allocation12]
        $region32: #{tpu_custom_call.1} parent=11 // pred_fallthru
          _
        // Predicated region
        $region33: #{tpu_custom_call.1} parent=11 // pred_check
          %p433 = pneg %p184
        $region34: #{tpu_custom_call.1} parent=11 // pred_check_branch
          %435 = sbr.rel (%p433) target = $region36
        $region35: #{tpu_custom_call.1} parent=11 // pred_region
          _
        $region36: #{tpu_custom_call.1} parent=11 // pred_fallthru
          _
        // Predicated region
        $region37: #{tpu_custom_call.1} parent=11 // pred_check
          %p436 = pneg %p205
        $region38: #{tpu_custom_call.1} parent=11 // pred_check_branch
          %438 = sbr.rel (%p436) target = $region40
        $region39: #{tpu_custom_call.1} parent=11 // pred_region
          %s440 = ssub.s32 16, 16
          %441 = vsyncadd [#allocation12], %s440
          %s443 = sshll.u32 [#allocation13], 4
          %s444 = int_to_ptr.vmem [resolvable:$true] %s443
          %446 = dma.hbm_to_vmem [thread:$0]  %s7, 16, %s444, [#allocation12]
        $region40: #{tpu_custom_call.1} parent=11 // pred_fallthru
          _
        // Predicated region
        $region41: #{tpu_custom_call.1} parent=11 // pred_check
          %p447 = pneg %p226
        $region42: #{tpu_custom_call.1} parent=11 // pred_check_branch
          %449 = sbr.rel (%p447) target = $region44
        $region43: #{tpu_custom_call.1} parent=11 // pred_region
          %s451 = ssub.s32 32, 32
          %452 = vsyncadd [#allocation15], %s451
          %s454 = sshll.u32 [#allocation14], 4
          %s455 = int_to_ptr.vmem [resolvable:$true] %s454
          %457 = dma.hbm_to_vmem [thread:$0]  %s8, 32, %s455, [#allocation15]
        $region44: #{tpu_custom_call.1} parent=11 // pred_fallthru
          _
        // Predicated region
        $region45: #{tpu_custom_call.1} parent=11 // pred_check
          %p458 = pneg %p247
        $region46: #{tpu_custom_call.1} parent=11 // pred_check_branch
          %460 = sbr.rel (%p458) target = $region48
        $region47: #{tpu_custom_call.1} parent=11 // pred_region
          %s462 = ssub.s32 16, 16
          %463 = vsyncadd [#allocation15], %s462
          %s465 = sshll.u32 [#allocation16], 4
          %s466 = int_to_ptr.vmem [resolvable:$true] %s465
          %468 = dma.hbm_to_vmem [thread:$0]  %s9, 16, %s466, [#allocation15]
        $region48: #{tpu_custom_call.1} parent=11 // pred_fallthru
          _
        // Predicated region
        $region49: #{tpu_custom_call.1} parent=11 // pred_check
          %p469 = pneg %p268
        $region50: #{tpu_custom_call.1} parent=11 // pred_check_branch
          %471 = sbr.rel (%p469) target = $region52
        $region51: #{tpu_custom_call.1} parent=11 // pred_region
          _
        $region52: #{tpu_custom_call.1} parent=11 // pred_fallthru
          _
        // Predicated region
        $region53: #{tpu_custom_call.1} parent=11 // pred_check
          %p472 = pneg %p289
        $region54: #{tpu_custom_call.1} parent=11 // pred_check_branch
          %474 = sbr.rel (%p472) target = $region56
        $region55: #{tpu_custom_call.1} parent=11 // pred_region
          %s476 = ssub.s32 2048, 2048
          %477 = vsyncadd [#allocation18], %s476
          %s478 = sshll.u32 [#allocation17], 4
          %s479 = int_to_ptr.vmem [resolvable:$true] %s478
          %484 = dma.hbm_to_vmem [thread:$0]  %s11, 2048, %s479, [#allocation18], 512, 512, 32
        $region56: #{tpu_custom_call.1} parent=11 // pred_fallthru
          _
        // Predicated region
        $region57: #{tpu_custom_call.1} parent=11 // pred_check
          %p485 = pneg %p310
        $region58: #{tpu_custom_call.1} parent=11 // pred_check_branch
          %487 = sbr.rel (%p485) target = $region60
        $region59: #{tpu_custom_call.1} parent=11 // pred_region
          %s489 = ssub.s32 8192, 8192
          %490 = vsyncadd [#allocation18], %s489
          %s491 = sshll.u32 [#allocation19], 4
          %s492 = int_to_ptr.vmem [resolvable:$true] %s491
          %497 = dma.hbm_to_vmem [thread:$0]  %s12, 8192, %s492, [#allocation18], 128, 128, 8
        $region60: #{tpu_custom_call.1} parent=11 // pred_fallthru
          _
        // Predicated region
        $region61: #{tpu_custom_call.1} parent=11 // pred_check
          %p498 = pneg %p331
        $region62: #{tpu_custom_call.1} parent=11 // pred_check_branch
          %500 = sbr.rel (%p498) target = $region64
        $region63: #{tpu_custom_call.1} parent=11 // pred_region
          %s502 = ssub.s32 16, 16
          %503 = vsyncadd [#allocation21], %s502
          %s505 = sshll.u32 [#allocation20], 4
          %s506 = int_to_ptr.vmem [resolvable:$true] %s505
          %508 = dma.hbm_to_vmem [thread:$0]  %s13, 16, %s506, [#allocation21]
        $region64: #{tpu_custom_call.1} parent=11 // pred_fallthru
          _
      $region12: #{tpu_custom_call.1} parent=5 // pred_fallthru
        _
      %p509 = scmp.lt.s32.totalorder %s32, 2
      // Predicated region
      $region65: #{tpu_custom_call.1} parent=5 // pred_check
        %p510 = pneg %p509
      $region66: #{tpu_custom_call.1} parent=5 // pred_check_branch
        %512 = sbr.rel (%p510) target = $region68
      $region67: #{tpu_custom_call.1} parent=5 // pred_region
        // Predicated region
        $region69: #{tpu_custom_call.1} parent=67 // pred_check
          %p513 = pneg %p52
        $region70: #{tpu_custom_call.1} parent=67 // pred_check_branch
          %515 = sbr.rel (%p513) target = $region72
        $region71: #{tpu_custom_call.1} parent=67 // pred_region
          %s516 = sand.u32 %s42, 1
          %s517 = scalar_lea.sflag [#allocation3], %s516
          %s518 = sand.u32 %s42, 1
          %s519 = smul.addr %s518, 16
          %s520 = scalar_lea.vmem [#allocation2], %s519
          %s521 = smul.u32 2, %s32
          %s523 = ssub.s32 256, 256
          %524 = vsyncadd %s517, %s523
          %s525 = smul.addr %s521, 128
          %s526 = scalar_lea.hbm %s0, %s525
          %s527 = sshll.u32 %s520, 4
          %s528 = int_to_ptr.vmem [resolvable:$true] %s527
          %533 = dma.hbm_to_vmem [thread:$0]  %s526, 256, %s528, %s517, 128, 128, 8
        $region72: #{tpu_custom_call.1} parent=67 // pred_fallthru
          _
      $region68: #{tpu_custom_call.1} parent=5 // pred_fallthru
        _
      %p534 = scmp.le.s32.totalorder 1, %s32
      %p535 = scmp.lt.s32.totalorder %s32, 3
      %p536 = pnand %p534, %p535
      %p537 = pneg %p536
      // Predicated region
      $region73: #{tpu_custom_call.1} parent=5 // pred_check
        _
      $region74: #{tpu_custom_call.1} parent=5 // pred_check_branch
        %539 = sbr.rel (%p536) target = $region76
      $region75: #{tpu_custom_call.1} parent=5 // pred_region
        %s540 = ssub.s32 %s32, 1
        %s541 = sand.u32 %s45, 1
        %s542 = scalar_lea.sflag [#allocation3], %s541
        %s543 = sand.u32 %s45, 1
        %s544 = smul.addr %s543, 16
        %s545 = scalar_lea.vmem [#allocation2], %s544
        // Predicated region
        $region77: #{tpu_custom_call.1} parent=75 // pred_check
          %p546 = pneg %p58
        $region78: #{tpu_custom_call.1} parent=75 // pred_check_branch
          %548 = sbr.rel (%p546) target = $region80
        $region79: #{tpu_custom_call.1} parent=75 // pred_region
          %549 = dma.done %s542, 256
        $region80: #{tpu_custom_call.1} parent=75 // pred_fallthru
          _
        // Predicated region
        $region81: #{tpu_custom_call.1} parent=75 // pred_check
          %p550 = pneg %p79
        $region82: #{tpu_custom_call.1} parent=75 // pred_check_branch
          %552 = sbr.rel (%p550) target = $region84
        $region83: #{tpu_custom_call.1} parent=75 // pred_region
          %553 = dma.done [#allocation6], 8192
        $region84: #{tpu_custom_call.1} parent=75 // pred_fallthru
          _
        // Predicated region
        $region85: #{tpu_custom_call.1} parent=75 // pred_check
          %p554 = pneg %p100
        $region86: #{tpu_custom_call.1} parent=75 // pred_check_branch
          %556 = sbr.rel (%p554) target = $region88
        $region87: #{tpu_custom_call.1} parent=75 // pred_region
          %557 = dma.done [#allocation6], 64
        $region88: #{tpu_custom_call.1} parent=75 // pred_fallthru
          _
        // Predicated region
        $region89: #{tpu_custom_call.1} parent=75 // pred_check
          %p558 = pneg %p121
        $region90: #{tpu_custom_call.1} parent=75 // pred_check_branch
          %560 = sbr.rel (%p558) target = $region92
        $region91: #{tpu_custom_call.1} parent=75 // pred_region
          %561 = dma.done [#allocation9], 768
        $region92: #{tpu_custom_call.1} parent=75 // pred_fallthru
          _
        // Predicated region
        $region93: #{tpu_custom_call.1} parent=75 // pred_check
          %p562 = pneg %p142
        $region94: #{tpu_custom_call.1} parent=75 // pred_check_branch
          %564 = sbr.rel (%p562) target = $region96
        $region95: #{tpu_custom_call.1} parent=75 // pred_region
          %565 = dma.done [#allocation9], 98304
        $region96: #{tpu_custom_call.1} parent=75 // pred_fallthru
          _
        // Predicated region
        $region97: #{tpu_custom_call.1} parent=75 // pred_check
          %p566 = pneg %p163
        $region98: #{tpu_custom_call.1} parent=75 // pred_check_branch
          %568 = sbr.rel (%p566) target = $region100
        $region99: #{tpu_custom_call.1} parent=75 // pred_region
          %569 = dma.done [#allocation12], 64
        $region100: #{tpu_custom_call.1} parent=75 // pred_fallthru
          _
        // Predicated region
        $region101: #{tpu_custom_call.1} parent=75 // pred_check
          %p570 = pneg %p205
        $region102: #{tpu_custom_call.1} parent=75 // pred_check_branch
          %572 = sbr.rel (%p570) target = $region104
        $region103: #{tpu_custom_call.1} parent=75 // pred_region
          %573 = dma.done [#allocation12], 16
        $region104: #{tpu_custom_call.1} parent=75 // pred_fallthru
          _
        // Predicated region
        $region105: #{tpu_custom_call.1} parent=75 // pred_check
          %p574 = pneg %p226
        $region106: #{tpu_custom_call.1} parent=75 // pred_check_branch
          %576 = sbr.rel (%p574) target = $region108
        $region107: #{tpu_custom_call.1} parent=75 // pred_region
          %577 = dma.done [#allocation15], 32
        $region108: #{tpu_custom_call.1} parent=75 // pred_fallthru
          _
        // Predicated region
        $region109: #{tpu_custom_call.1} parent=75 // pred_check
          %p578 = pneg %p247
        $region110: #{tpu_custom_call.1} parent=75 // pred_check_branch
          %580 = sbr.rel (%p578) target = $region112
        $region111: #{tpu_custom_call.1} parent=75 // pred_region
          %581 = dma.done [#allocation15], 16
        $region112: #{tpu_custom_call.1} parent=75 // pred_fallthru
          _
        // Predicated region
        $region113: #{tpu_custom_call.1} parent=75 // pred_check
          %p582 = pneg %p289
        $region114: #{tpu_custom_call.1} parent=75 // pred_check_branch
          %584 = sbr.rel (%p582) target = $region116
        $region115: #{tpu_custom_call.1} parent=75 // pred_region
          %585 = dma.done [#allocation18], 2048
        $region116: #{tpu_custom_call.1} parent=75 // pred_fallthru
          _
        // Predicated region
        $region117: #{tpu_custom_call.1} parent=75 // pred_check
          %p586 = pneg %p310
        $region118: #{tpu_custom_call.1} parent=75 // pred_check_branch
          %588 = sbr.rel (%p586) target = $region120
        $region119: #{tpu_custom_call.1} parent=75 // pred_region
          %589 = dma.done [#allocation18], 8192
        $region120: #{tpu_custom_call.1} parent=75 // pred_fallthru
          _
        // Predicated region
        $region121: #{tpu_custom_call.1} parent=75 // pred_check
          %p590 = pneg %p331
        $region122: #{tpu_custom_call.1} parent=75 // pred_check_branch
          %592 = sbr.rel (%p590) target = $region124
        $region123: #{tpu_custom_call.1} parent=75 // pred_region
          %593 = dma.done [#allocation21], 16
        $region124: #{tpu_custom_call.1} parent=75 // pred_fallthru
          _
        %s594 = sand.u32 %s45, 1
        %s595 = scalar_lea.sflag [#allocation3], %s594
        %s596 = sand.u32 %s45, 1
        %s597 = smul.addr %s596, 16
        %s598 = scalar_lea.vmem [#allocation2], %s597
        %p599 = pneg %p58
        %p600 = pneg %p55
        %p601 = pneg %p79
        %p602 = pneg %p76
        %p603 = pneg %p100
        %p604 = pneg %p97
        %p605 = pneg %p121
        %p606 = pneg %p118
        %p607 = pneg %p142
        %p608 = pneg %p139
        %p609 = pneg %p163
        %p610 = pneg %p160
        %p611 = pneg %p184
        %p612 = pneg %p181
        %p613 = pneg %p205
        %p614 = pneg %p202
        %p615 = pneg %p226
        %p616 = pneg %p223
        %p617 = pneg %p247
        %p618 = pneg %p244
        %p619 = pneg %p268
        %p620 = pneg %p265
        %p621 = pneg %p289
        %p622 = pneg %p286
        %p623 = pneg %p310
        %p624 = pneg %p307
        %p625 = pneg %p331
        %p626 = pneg %p328
        %p627 = pneg %p357
        %p628 = pneg %p354
        %s629 = sand.u32 %s344, 1
        %s630 = scalar_lea.sflag [#allocation4], %s629
        %s631 = sand.u32 %s344, 1
        %s632 = smul.addr %s631, 16
        %s633 = scalar_lea.vmem [#allocation22], %s632
        %s634 = smul.u32 2, %s37
        %s635 = smul.u32 2, %s37
        %v636 = vld [vmem:[%s545] sm:$0xff]
        %v637 = vld [vmem:[%s545 + $0x8] sm:$0xff]
        %v638 = vld [vmem:[#allocation5] sm:$0xff]
        %v639 = vld [vmem:[#allocation5 + $0x8] sm:$0xff]
        %v640 = vld [vmem:[#allocation5 + $0x10] sm:$0xff]
        %v641 = vld [vmem:[#allocation5 + $0x18] sm:$0xff]
        %v642 = vld [vmem:[#allocation5 + $0x20] sm:$0xff]
        %v643 = vld [vmem:[#allocation5 + $0x28] sm:$0xff]
        %v644 = vld [vmem:[#allocation5 + $0x30] sm:$0xff]
        %v645 = vld [vmem:[#allocation5 + $0x38] sm:$0xff]
        %v646 = vld [vmem:[#allocation5 + $0x40] sm:$0xff]
        %v647 = vld [vmem:[#allocation5 + $0x48] sm:$0xff]
        %v648 = vld [vmem:[#allocation5 + $0x50] sm:$0xff]
        %v649 = vld [vmem:[#allocation5 + $0x58] sm:$0xff]
        %v650 = vld [vmem:[#allocation5 + $0x60] sm:$0xff]
        %v651 = vld [vmem:[#allocation5 + $0x68] sm:$0xff]
        %v652 = vld [vmem:[#allocation5 + $0x70] sm:$0xff]
        %v653 = vld [vmem:[#allocation5 + $0x78] sm:$0xff]
        %v654 = vld [vmem:[#allocation5 + $0x80] sm:$0xff]
        %v655 = vld [vmem:[#allocation5 + $0x88] sm:$0xff]
        %v656 = vld [vmem:[#allocation5 + $0x90] sm:$0xff]
        %v657 = vld [vmem:[#allocation5 + $0x98] sm:$0xff]
        %v658 = vld [vmem:[#allocation5 + $0xa0] sm:$0xff]
        %v659 = vld [vmem:[#allocation5 + $0xa8] sm:$0xff]
        %v660 = vld [vmem:[#allocation5 + $0xb0] sm:$0xff]
        %v661 = vld [vmem:[#allocation5 + $0xb8] sm:$0xff]
        %v662 = vld [vmem:[#allocation5 + $0xc0] sm:$0xff]
        %v663 = vld [vmem:[#allocation5 + $0xc8] sm:$0xff]
        %v664 = vld [vmem:[#allocation5 + $0xd0] sm:$0xff]
        %v665 = vld [vmem:[#allocation5 + $0xd8] sm:$0xff]
        %v666 = vld [vmem:[#allocation5 + $0xe0] sm:$0xff]
        %v667 = vld [vmem:[#allocation5 + $0xe8] sm:$0xff]
        %v668 = vld [vmem:[#allocation5 + $0xf0] sm:$0xff]
        %v669 = vld [vmem:[#allocation5 + $0xf8] sm:$0xff]
        %v670 = vld [vmem:[#allocation5 + $0x100] sm:$0xff]
        %v671 = vld [vmem:[#allocation5 + $0x108] sm:$0xff]
        %v672 = vld [vmem:[#allocation5 + $0x110] sm:$0xff]
        %v673 = vld [vmem:[#allocation5 + $0x118] sm:$0xff]
        %v674 = vld [vmem:[#allocation5 + $0x120] sm:$0xff]
        %v675 = vld [vmem:[#allocation5 + $0x128] sm:$0xff]
        %v676 = vld [vmem:[#allocation5 + $0x130] sm:$0xff]
        %v677 = vld [vmem:[#allocation5 + $0x138] sm:$0xff]
        %v678 = vld [vmem:[#allocation5 + $0x140] sm:$0xff]
        %v679 = vld [vmem:[#allocation5 + $0x148] sm:$0xff]
        %v680 = vld [vmem:[#allocation5 + $0x150] sm:$0xff]
        %v681 = vld [vmem:[#allocation5 + $0x158] sm:$0xff]
        %v682 = vld [vmem:[#allocation5 + $0x160] sm:$0xff]
        %v683 = vld [vmem:[#allocation5 + $0x168] sm:$0xff]
        %v684 = vld [vmem:[#allocation5 + $0x170] sm:$0xff]
        %v685 = vld [vmem:[#allocation5 + $0x178] sm:$0xff]
        %v686 = vld [vmem:[#allocation5 + $0x180] sm:$0xff]
        %v687 = vld [vmem:[#allocation5 + $0x188] sm:$0xff]
        %v688 = vld [vmem:[#allocation5 + $0x190] sm:$0xff]
        %v689 = vld [vmem:[#allocation5 + $0x198] sm:$0xff]
        %v690 = vld [vmem:[#allocation5 + $0x1a0] sm:$0xff]
        %v691 = vld [vmem:[#allocation5 + $0x1a8] sm:$0xff]
        %v692 = vld [vmem:[#allocation5 + $0x1b0] sm:$0xff]
        %v693 = vld [vmem:[#allocation5 + $0x1b8] sm:$0xff]
        %v694 = vld [vmem:[#allocation5 + $0x1c0] sm:$0xff]
        %v695 = vld [vmem:[#allocation5 + $0x1c8] sm:$0xff]
        %v696 = vld [vmem:[#allocation5 + $0x1d0] sm:$0xff]
        %v697 = vld [vmem:[#allocation5 + $0x1d8] sm:$0xff]
        %v698 = vld [vmem:[#allocation5 + $0x1e0] sm:$0xff]
        %v699 = vld [vmem:[#allocation5 + $0x1e8] sm:$0xff]
        %v700 = vld [vmem:[#allocation5 + $0x1f0] sm:$0xff]
        %v701 = vld [vmem:[#allocation5 + $0x1f8] sm:$0xff]
        %v702 = vld [vmem:[#allocation7] sm:$0xf]
        %v704 = vlaneseq
        %v705 = vshrl.u32 %v704, 7
        %v706 = vsub.s32 0, %v705
        %v707 = vrot.slane %v702, %v706
        %v708 = vlaneseq
        %v709 = vshrl.u32 %v708, 7
        %v710 = vsub.s32 1, %v709
        %v711 = vrot.slane %v702, %v710
        %v712 = vlaneseq
        %v713 = vshrl.u32 %v712, 7
        %v714 = vsub.s32 2, %v713
        %v715 = vrot.slane %v702, %v714
        %v716 = vlaneseq
        %v717 = vshrl.u32 %v716, 7
        %v718 = vsub.s32 3, %v717
        %v719 = vrot.slane %v702, %v718
        %724 = vmatprep.subr.mxu0 %v699
        %725 = vmatpush1.msra.mxu0 %v698
        %726 = vmatprep.subr.mxu0 %v695
        %727 = vmatpush1.msra.mxu0 %v694
        %728 = vmatprep.subr.mxu0 %v691
        %729 = vmatpush1.msra.mxu0 %v690
        %730 = vmatprep.subr.mxu0 %v687
        %731 = vmatpush1.msra.mxu0 %v686
        %732 = vmatprep.subr.mxu0 %v683
        %733 = vmatpush1.msra.mxu0 %v682
        %734 = vmatprep.subr.mxu0 %v679
        %735 = vmatpush1.msra.mxu0 %v678
        %736 = vmatprep.subr.mxu0 %v675
        %737 = vmatpush1.msra.mxu0 %v674
        %738 = vmatprep.subr.mxu0 %v671
        %739 = vmatpush1.msra.mxu0 %v670
        %740 = vmatprep.subr.mxu0 %v667
        %741 = vmatpush1.msra.mxu0 %v666
        %742 = vmatprep.subr.mxu0 %v663
        %743 = vmatpush1.msra.mxu0 %v662
        %744 = vmatprep.subr.mxu0 %v659
        %745 = vmatpush1.msra.mxu0 %v658
        %746 = vmatprep.subr.mxu0 %v655
        %747 = vmatpush1.msra.mxu0 %v654
        %748 = vmatprep.subr.mxu0 %v651
        %749 = vmatpush1.msra.mxu0 %v650
        %750 = vmatprep.subr.mxu0 %v647
        %751 = vmatpush1.msra.mxu0 %v646
        %752 = vmatprep.subr.mxu0 %v643
        %753 = vmatpush1.msra.mxu0 %v642
        %754 = vmatprep.subr.mxu0 %v639
        %755 = vmatpush1.msra.mxu0 %v638
        %756 = vmatprep.subr.mxu0 0.0
        %757 = vmatpush2.msra.mxu0 0.0
        %758 = vmatprep.subr.mxu0 0.0
        %759 = vmatpush2.msra.mxu0 0.0
        %760 = vmatprep.subr.mxu0 0.0
        %761 = vmatpush2.msra.mxu0 0.0
        %762 = vmatprep.subr.mxu0 0.0
        %763 = vmatpush2.msra.mxu0 0.0
        %764 = vmatprep.subr.mxu0 0.0
        %765 = vmatpush2.msra.mxu0 0.0
        %766 = vmatprep.subr.mxu0 0.0
        %767 = vmatpush2.msra.mxu0 0.0
        %768 = vmatprep.subr.mxu0 0.0
        %769 = vmatpush2.msra.mxu0 0.0
        %770 = vmatprep.subr.mxu0 0.0
        %771 = vmatpush2.msra.mxu0 0.0
        %772 = vmatprep.subr.mxu0 0.0
        %773 = vmatpush2.msra.mxu0 0.0
        %774 = vmatprep.subr.mxu0 0.0
        %775 = vmatpush2.msra.mxu0 0.0
        %776 = vmatprep.subr.mxu0 0.0
        %777 = vmatpush2.msra.mxu0 0.0
        %778 = vmatprep.subr.mxu0 0.0
        %779 = vmatpush2.msra.mxu0 0.0
        %780 = vmatprep.subr.mxu0 0.0
        %781 = vmatpush2.msra.mxu0 0.0
        %782 = vmatprep.subr.mxu0 0.0
        %783 = vmatpush2.msra.mxu0 0.0
        %784 = vmatprep.subr.mxu0 0.0
        %785 = vmatpush2.msra.mxu0 0.0
        %786 = vmatprep.subr.mxu0 0.0
        %787 = vmatpush2.msra.mxu0 0.0
        %788 = vmatprep.mubr.f32.mxu0 0.0
        %789 = vmatmul.mubr.f32.gmra.mxu0 %v636
        %v790 = vpop.f32.mrf.mxu0
        %v791 = vadd.f32 %v707, %v790
        %v792 = vpop.f32.mrf.mxu0
        %v793 = vadd.f32 %v711, %v792
        %794 = vmatprep.mubr.f32.mxu0 0.0
        %795 = vmatmul.mubr.f32.gmra.mxu0 %v637
        %v796 = vpop.f32.mrf.mxu0
        %v797 = vadd.f32 %v707, %v796
        %v798 = vpop.f32.mrf.mxu0
        %v799 = vadd.f32 %v711, %v798
        %800 = vdwg.mxu0
        %801 = vmatprep.subr.mxu0 %v701
        %802 = vmatpush1.msra.mxu0 %v700
        %803 = vmatprep.subr.mxu0 %v697
        %804 = vmatpush1.msra.mxu0 %v696
        %805 = vmatprep.subr.mxu0 %v693
        %806 = vmatpush1.msra.mxu0 %v692
        %807 = vmatprep.subr.mxu0 %v689
        %808 = vmatpush1.msra.mxu0 %v688
        %809 = vmatprep.subr.mxu0 %v685
        %810 = vmatpush1.msra.mxu0 %v684
        %811 = vmatprep.subr.mxu0 %v681
        %812 = vmatpush1.msra.mxu0 %v680
        %813 = vmatprep.subr.mxu0 %v677
        %814 = vmatpush1.msra.mxu0 %v676
        %815 = vmatprep.subr.mxu0 %v673
        %816 = vmatpush1.msra.mxu0 %v672
        %817 = vmatprep.subr.mxu0 %v669
        %818 = vmatpush1.msra.mxu0 %v668
        %819 = vmatprep.subr.mxu0 %v665
        %820 = vmatpush1.msra.mxu0 %v664
        %821 = vmatprep.subr.mxu0 %v661
        %822 = vmatpush1.msra.mxu0 %v660
        %823 = vmatprep.subr.mxu0 %v657
        %824 = vmatpush1.msra.mxu0 %v656
        %825 = vmatprep.subr.mxu0 %v653
        %826 = vmatpush1.msra.mxu0 %v652
        %827 = vmatprep.subr.mxu0 %v649
        %828 = vmatpush1.msra.mxu0 %v648
        %829 = vmatprep.subr.mxu0 %v645
        %830 = vmatpush1.msra.mxu0 %v644
        %831 = vmatprep.subr.mxu0 %v641
        %832 = vmatpush1.msra.mxu0 %v640
        %833 = vmatprep.subr.mxu0 0.0
        %834 = vmatpush2.msra.mxu0 0.0
        %835 = vmatprep.subr.mxu0 0.0
        %836 = vmatpush2.msra.mxu0 0.0
        %837 = vmatprep.subr.mxu0 0.0
        %838 = vmatpush2.msra.mxu0 0.0
        %839 = vmatprep.subr.mxu0 0.0
        %840 = vmatpush2.msra.mxu0 0.0
        %841 = vmatprep.subr.mxu0 0.0
        %842 = vmatpush2.msra.mxu0 0.0
        %843 = vmatprep.subr.mxu0 0.0
        %844 = vmatpush2.msra.mxu0 0.0
        %845 = vmatprep.subr.mxu0 0.0
        %846 = vmatpush2.msra.mxu0 0.0
        %847 = vmatprep.subr.mxu0 0.0
        %848 = vmatpush2.msra.mxu0 0.0
        %849 = vmatprep.subr.mxu0 0.0
        %850 = vmatpush2.msra.mxu0 0.0
        %851 = vmatprep.subr.mxu0 0.0
        %852 = vmatpush2.msra.mxu0 0.0
        %853 = vmatprep.subr.mxu0 0.0
        %854 = vmatpush2.msra.mxu0 0.0
        %855 = vmatprep.subr.mxu0 0.0
        %856 = vmatpush2.msra.mxu0 0.0
        %857 = vmatprep.subr.mxu0 0.0
        %858 = vmatpush2.msra.mxu0 0.0
        %859 = vmatprep.subr.mxu0 0.0
        %860 = vmatpush2.msra.mxu0 0.0
        %861 = vmatprep.subr.mxu0 0.0
        %862 = vmatpush2.msra.mxu0 0.0
        %863 = vmatprep.subr.mxu0 0.0
        %864 = vmatpush2.msra.mxu0 0.0
        %865 = vmatprep.mubr.f32.mxu0 0.0
        %866 = vmatmul.mubr.f32.gmra.mxu0 %v636
        %v867 = vpop.f32.mrf.mxu0
        %v868 = vadd.f32 %v715, %v867
        %v869 = vpop.f32.mrf.mxu0
        %v870 = vadd.f32 %v719, %v869
        %871 = vmatprep.mubr.f32.mxu0 0.0
        %872 = vmatmul.mubr.f32.gmra.mxu0 %v637
        %v873 = vpop.f32.mrf.mxu0
        %v874 = vadd.f32 %v715, %v873
        %v875 = vpop.f32.mrf.mxu0
        %v876 = vadd.f32 %v719, %v875
        %877 = vdwg.mxu0
        %v878 = vxor.u32 %v791, 2147483648
        %v879 = vxor.u32 %v793, 2147483648
        %v880 = vxor.u32 %v868, 2147483648
        %v881 = vxor.u32 %v870, 2147483648
        %v882 = vxor.u32 %v797, 2147483648
        %v883 = vxor.u32 %v799, 2147483648
        %v884 = vxor.u32 %v874, 2147483648
        %v885 = vxor.u32 %v876, 2147483648
        %v886 = vmul.f32 %v878, 1.442695
        %v887 = vpow.pop %v886
        %v888 = vmul.f32 %v879, 1.442695
        %v889 = vpow.pop %v888
        %v890 = vmul.f32 %v880, 1.442695
        %v891 = vpow.pop %v890
        %v892 = vmul.f32 %v881, 1.442695
        %v893 = vpow.pop %v892
        %v894 = vmul.f32 %v882, 1.442695
        %v895 = vpow.pop %v894
        %v896 = vmul.f32 %v883, 1.442695
        %v897 = vpow.pop %v896
        %v898 = vmul.f32 %v884, 1.442695
        %v899 = vpow.pop %v898
        %v900 = vmul.f32 %v885, 1.442695
        %v901 = vpow.pop %v900
        %v902 = vadd.f32 %v887, 1.0
        %v903 = vadd.f32 %v889, 1.0
        %v904 = vadd.f32 %v891, 1.0
        %v905 = vadd.f32 %v893, 1.0
        %v906 = vadd.f32 %v895, 1.0
        %v907 = vadd.f32 %v897, 1.0
        %v908 = vadd.f32 %v899, 1.0
        %v909 = vadd.f32 %v901, 1.0
        %v910 = vrcp.pop %v902
        %v911 = vmul.f32 1.0, %v910
        %v912 = vrcp.pop %v903
        %v913 = vmul.f32 1.0, %v912
        %v914 = vrcp.pop %v904
        %v915 = vmul.f32 1.0, %v914
        %v916 = vrcp.pop %v905
        %v917 = vmul.f32 1.0, %v916
        %v918 = vrcp.pop %v906
        %v919 = vmul.f32 1.0, %v918
        %v920 = vrcp.pop %v907
        %v921 = vmul.f32 1.0, %v920
        %v922 = vrcp.pop %v908
        %v923 = vmul.f32 1.0, %v922
        %v924 = vrcp.pop %v909
        %v925 = vmul.f32 1.0, %v924
        %v926 = vmul.f32 %v791, %v911
        %v927 = vmul.f32 %v793, %v913
        %v928 = vmul.f32 %v868, %v915
        %v929 = vmul.f32 %v870, %v917
        %v930 = vmul.f32 %v797, %v919
        %v931 = vmul.f32 %v799, %v921
        %v932 = vmul.f32 %v874, %v923
        %v933 = vmul.f32 %v876, %v925
        %v934 = vld [vmem:[#allocation8] sm:$0xff]
        %v935 = vld [vmem:[#allocation8 + $0x8] sm:$0xff]
        %vm936 = vcmask 130048
        %v938 = vsel %vm936, %v934, 0
        %v941 = vsel %vm936, %v935, 0
        %943 = vmatprep.subr.mxu0 0.0
        %944 = vmatpush1.msra.mxu0 0.0
        %945 = vmatprep.subr.mxu0 0.0
        %946 = vmatpush1.msra.mxu0 0.0
        %947 = vmatprep.subr.mxu0 0.0
        %948 = vmatpush1.msra.mxu0 0.0
        %949 = vmatprep.subr.mxu0 0.0
        %950 = vmatpush1.msra.mxu0 0.0
        %951 = vmatprep.subr.mxu0 0.0
        %952 = vmatpush1.msra.mxu0 0.0
        %953 = vmatprep.subr.mxu0 0.0
        %954 = vmatpush1.msra.mxu0 0.0
        %955 = vmatprep.subr.mxu0 0.0
        %956 = vmatpush1.msra.mxu0 0.0
        %957 = vmatprep.subr.mxu0 0.0
        %958 = vmatpush1.msra.mxu0 0.0
        %959 = vmatprep.subr.mxu0 0.0
        %960 = vmatpush1.msra.mxu0 0.0
        %961 = vmatprep.subr.mxu0 0.0
        %962 = vmatpush1.msra.mxu0 0.0
        %963 = vmatprep.subr.mxu0 0.0
        %964 = vmatpush1.msra.mxu0 0.0
        %965 = vmatprep.subr.mxu0 0.0
        %966 = vmatpush1.msra.mxu0 0.0
        %967 = vmatprep.subr.mxu0 0.0
        %968 = vmatpush1.msra.mxu0 0.0
        %969 = vmatprep.subr.mxu0 0.0
        %970 = vmatpush1.msra.mxu0 0.0
        %971 = vmatprep.subr.mxu0 %v931
        %972 = vmatpush1.msra.mxu0 %v930
        %973 = vmatprep.subr.mxu0 %v927
        %974 = vmatpush1.msra.mxu0 %v926
        %975 = vmatprep.subr.mxu0 0.0
        %976 = vmatpush2.msra.mxu0 0.0
        %977 = vmatprep.subr.mxu0 0.0
        %978 = vmatpush2.msra.mxu0 0.0
        %979 = vmatprep.subr.mxu0 0.0
        %980 = vmatpush2.msra.mxu0 0.0
        %981 = vmatprep.subr.mxu0 0.0
        %982 = vmatpush2.msra.mxu0 0.0
        %983 = vmatprep.subr.mxu0 0.0
        %984 = vmatpush2.msra.mxu0 0.0
        %985 = vmatprep.subr.mxu0 0.0
        %986 = vmatpush2.msra.mxu0 0.0
        %987 = vmatprep.subr.mxu0 0.0
        %988 = vmatpush2.msra.mxu0 0.0
        %989 = vmatprep.subr.mxu0 0.0
        %990 = vmatpush2.msra.mxu0 0.0
        %991 = vmatprep.subr.mxu0 0.0
        %992 = vmatpush2.msra.mxu0 0.0
        %993 = vmatprep.subr.mxu0 0.0
        %994 = vmatpush2.msra.mxu0 0.0
        %995 = vmatprep.subr.mxu0 0.0
        %996 = vmatpush2.msra.mxu0 0.0
        %997 = vmatprep.subr.mxu0 0.0
        %998 = vmatpush2.msra.mxu0 0.0
        %999 = vmatprep.subr.mxu0 0.0
        %1000 = vmatpush2.msra.mxu0 0.0
        %1001 = vmatprep.subr.mxu0 0.0
        %1002 = vmatpush2.msra.mxu0 0.0
        %1003 = vmatprep.subr.mxu0 0.0
        %1004 = vmatpush2.msra.mxu0 0.0
        %1005 = vmatprep.subr.mxu0 0.0
        %1006 = vmatpush2.msra.mxu0 0.0
        %1007 = vmatprep.mubr.f32.mxu0 0.0
        %1008 = vmatmul.mubr.f32.gmra.mxu0 %v938
        %v1009 = vpop.f32.mrf.mxu0
        %v1010 = vadd.f32 0.0, %v1009
        %v1011 = vpop.f32.mrf.mxu0
        %v1012 = vadd.f32 0.0, %v1011
        %1013 = vmatprep.mubr.f32.mxu0 0.0
        %1014 = vmatmul.mubr.f32.gmra.mxu0 %v941
        %v1015 = vpop.f32.mrf.mxu0
        %v1016 = vadd.f32 0.0, %v1015
        %v1017 = vpop.f32.mrf.mxu0
        %v1018 = vadd.f32 0.0, %v1017
        %1019 = vdwg.mxu0
        %1020 = vmatprep.subr.mxu0 0.0
        %1021 = vmatpush1.msra.mxu0 0.0
        %1022 = vmatprep.subr.mxu0 0.0
        %1023 = vmatpush1.msra.mxu0 0.0
        %1024 = vmatprep.subr.mxu0 0.0
        %1025 = vmatpush1.msra.mxu0 0.0
        %1026 = vmatprep.subr.mxu0 0.0
        %1027 = vmatpush1.msra.mxu0 0.0
        %1028 = vmatprep.subr.mxu0 0.0
        %1029 = vmatpush1.msra.mxu0 0.0
        %1030 = vmatprep.subr.mxu0 0.0
        %1031 = vmatpush1.msra.mxu0 0.0
        %1032 = vmatprep.subr.mxu0 0.0
        %1033 = vmatpush1.msra.mxu0 0.0
        %1034 = vmatprep.subr.mxu0 0.0
        %1035 = vmatpush1.msra.mxu0 0.0
        %1036 = vmatprep.subr.mxu0 0.0
        %1037 = vmatpush1.msra.mxu0 0.0
        %1038 = vmatprep.subr.mxu0 0.0
        %1039 = vmatpush1.msra.mxu0 0.0
        %1040 = vmatprep.subr.mxu0 0.0
        %1041 = vmatpush1.msra.mxu0 0.0
        %1042 = vmatprep.subr.mxu0 0.0
        %1043 = vmatpush1.msra.mxu0 0.0
        %1044 = vmatprep.subr.mxu0 0.0
        %1045 = vmatpush1.msra.mxu0 0.0
        %1046 = vmatprep.subr.mxu0 0.0
        %1047 = vmatpush1.msra.mxu0 0.0
        %1048 = vmatprep.subr.mxu0 %v933
        %1049 = vmatpush1.msra.mxu0 %v932
        %1050 = vmatprep.subr.mxu0 %v929
        %1051 = vmatpush1.msra.mxu0 %v928
        %1052 = vmatprep.subr.mxu0 0.0
        %1053 = vmatpush2.msra.mxu0 0.0
        %1054 = vmatprep.subr.mxu0 0.0
        %1055 = vmatpush2.msra.mxu0 0.0
        %1056 = vmatprep.subr.mxu0 0.0
        %1057 = vmatpush2.msra.mxu0 0.0
        %1058 = vmatprep.subr.mxu0 0.0
        %1059 = vmatpush2.msra.mxu0 0.0
        %1060 = vmatprep.subr.mxu0 0.0
        %1061 = vmatpush2.msra.mxu0 0.0
        %1062 = vmatprep.subr.mxu0 0.0
        %1063 = vmatpush2.msra.mxu0 0.0
        %1064 = vmatprep.subr.mxu0 0.0
        %1065 = vmatpush2.msra.mxu0 0.0
        %1066 = vmatprep.subr.mxu0 0.0
        %1067 = vmatpush2.msra.mxu0 0.0
        %1068 = vmatprep.subr.mxu0 0.0
        %1069 = vmatpush2.msra.mxu0 0.0
        %1070 = vmatprep.subr.mxu0 0.0
        %1071 = vmatpush2.msra.mxu0 0.0
        %1072 = vmatprep.subr.mxu0 0.0
        %1073 = vmatpush2.msra.mxu0 0.0
        %1074 = vmatprep.subr.mxu0 0.0
        %1075 = vmatpush2.msra.mxu0 0.0
        %1076 = vmatprep.subr.mxu0 0.0
        %1077 = vmatpush2.msra.mxu0 0.0
        %1078 = vmatprep.subr.mxu0 0.0
        %1079 = vmatpush2.msra.mxu0 0.0
        %1080 = vmatprep.subr.mxu0 0.0
        %1081 = vmatpush2.msra.mxu0 0.0
        %1082 = vmatprep.subr.mxu0 0.0
        %1083 = vmatpush2.msra.mxu0 0.0
        %1084 = vmatprep.mubr.f32.mxu0 0.0
        %1085 = vmatmul.mubr.f32.gmra.mxu0 %v938
        %v1086 = vpop.f32.mrf.mxu0
        %v1087 = vadd.f32 0.0, %v1086
        %v1088 = vpop.f32.mrf.mxu0
        %v1089 = vadd.f32 0.0, %v1088
        %1090 = vmatprep.mubr.f32.mxu0 0.0
        %1091 = vmatmul.mubr.f32.gmra.mxu0 %v941
        %v1092 = vpop.f32.mrf.mxu0
        %v1093 = vadd.f32 0.0, %v1092
        %v1094 = vpop.f32.mrf.mxu0
        %v1095 = vadd.f32 0.0, %v1094
        %1096 = vdwg.mxu0
        %v1097 = vld [vmem:[#allocation10] sm:$0xff]
        %v1098 = vld [vmem:[#allocation10 + $0x8] sm:$0xff]
        %v1099 = vld [vmem:[#allocation10 + $0x10] sm:$0xff]
        %v1100 = vld [vmem:[#allocation10 + $0x18] sm:$0xff]
        %v1101 = vld [vmem:[#allocation10 + $0x20] sm:$0xff]
        %v1102 = vld [vmem:[#allocation10 + $0x28] sm:$0xff]
        %v1103 = vld [vmem:[#allocation10 + $0x30] sm:$0xff]
        %v1104 = vld [vmem:[#allocation10 + $0x38] sm:$0xff]
        %v1105 = vld [vmem:[#allocation10 + $0x40] sm:$0xff]
        %v1106 = vld [vmem:[#allocation10 + $0x48] sm:$0xff]
        %v1107 = vld [vmem:[#allocation10 + $0x50] sm:$0xff]
        %v1108 = vld [vmem:[#allocation10 + $0x58] sm:$0xff]
        %v1109 = vld [vmem:[#allocation10 + $0x60] sm:$0xff]
        %v1110 = vld [vmem:[#allocation10 + $0x68] sm:$0xff]
        %v1111 = vld [vmem:[#allocation10 + $0x70] sm:$0xff]
        %v1112 = vld [vmem:[#allocation10 + $0x78] sm:$0xff]
        %v1113 = vld [vmem:[#allocation10 + $0x80] sm:$0xff]
        %v1114 = vld [vmem:[#allocation10 + $0x88] sm:$0xff]
        %v1115 = vld [vmem:[#allocation10 + $0x90] sm:$0xff]
        %v1116 = vld [vmem:[#allocation10 + $0x98] sm:$0xff]
        %v1117 = vld [vmem:[#allocation10 + $0xa0] sm:$0xff]
        %v1118 = vld [vmem:[#allocation10 + $0xa8] sm:$0xff]
        %v1119 = vld [vmem:[#allocation10 + $0xb0] sm:$0xff]
        %v1120 = vld [vmem:[#allocation10 + $0xb8] sm:$0xff]
        %v1121 = vld [vmem:[#allocation10 + $0xc0] sm:$0xff]
        %v1122 = vld [vmem:[#allocation10 + $0xc8] sm:$0xff]
        %v1123 = vld [vmem:[#allocation10 + $0xd0] sm:$0xff]
        %v1124 = vld [vmem:[#allocation10 + $0xd8] sm:$0xff]
        %v1125 = vld [vmem:[#allocation10 + $0xe0] sm:$0xff]
        %v1126 = vld [vmem:[#allocation10 + $0xe8] sm:$0xff]
        %v1127 = vld [vmem:[#allocation10 + $0xf0] sm:$0xff]
        %v1128 = vld [vmem:[#allocation10 + $0xf8] sm:$0xff]
        %v1129 = vld [vmem:[#allocation10 + $0x100] sm:$0xff]
        %v1130 = vld [vmem:[#allocation10 + $0x108] sm:$0xff]
        %v1131 = vld [vmem:[#allocation10 + $0x110] sm:$0xff]
        %v1132 = vld [vmem:[#allocation10 + $0x118] sm:$0xff]
        %v1133 = vld [vmem:[#allocation10 + $0x120] sm:$0xff]
        %v1134 = vld [vmem:[#allocation10 + $0x128] sm:$0xff]
        %v1135 = vld [vmem:[#allocation10 + $0x130] sm:$0xff]
        %v1136 = vld [vmem:[#allocation10 + $0x138] sm:$0xff]
        %v1137 = vld [vmem:[#allocation10 + $0x140] sm:$0xff]
        %v1138 = vld [vmem:[#allocation10 + $0x148] sm:$0xff]
        %v1139 = vld [vmem:[#allocation10 + $0x150] sm:$0xff]
        %v1140 = vld [vmem:[#allocation10 + $0x158] sm:$0xff]
        %v1141 = vld [vmem:[#allocation10 + $0x160] sm:$0xff]
        %v1142 = vld [vmem:[#allocation10 + $0x168] sm:$0xff]
        %v1143 = vld [vmem:[#allocation10 + $0x170] sm:$0xff]
        %v1144 = vld [vmem:[#allocation10 + $0x178] sm:$0xff]
        %v1145 = vld [vmem:[#allocation10 + $0x180] sm:$0xff]
        %v1146 = vld [vmem:[#allocation10 + $0x188] sm:$0xff]
        %v1147 = vld [vmem:[#allocation10 + $0x190] sm:$0xff]
        %v1148 = vld [vmem:[#allocation10 + $0x198] sm:$0xff]
        %v1149 = vld [vmem:[#allocation10 + $0x1a0] sm:$0xff]
        %v1150 = vld [vmem:[#allocation10 + $0x1a8] sm:$0xff]
        %v1151 = vld [vmem:[#allocation10 + $0x1b0] sm:$0xff]
        %v1152 = vld [vmem:[#allocation10 + $0x1b8] sm:$0xff]
        %v1153 = vld [vmem:[#allocation10 + $0x1c0] sm:$0xff]
        %v1154 = vld [vmem:[#allocation10 + $0x1c8] sm:$0xff]
        %v1155 = vld [vmem:[#allocation10 + $0x1d0] sm:$0xff]
        %v1156 = vld [vmem:[#allocation10 + $0x1d8] sm:$0xff]
        %v1157 = vld [vmem:[#allocation10 + $0x1e0] sm:$0xff]
        %v1158 = vld [vmem:[#allocation10 + $0x1e8] sm:$0xff]
        %v1159 = vld [vmem:[#allocation10 + $0x1f0] sm:$0xff]
        %v1160 = vld [vmem:[#allocation10 + $0x1f8] sm:$0xff]
        %v1161 = vld [vmem:[#allocation10 + $0x200] sm:$0xff]
        %v1162 = vld [vmem:[#allocation10 + $0x208] sm:$0xff]
        %v1163 = vld [vmem:[#allocation10 + $0x210] sm:$0xff]
        %v1164 = vld [vmem:[#allocation10 + $0x218] sm:$0xff]
        %v1165 = vld [vmem:[#allocation10 + $0x220] sm:$0xff]
        %v1166 = vld [vmem:[#allocation10 + $0x228] sm:$0xff]
        %v1167 = vld [vmem:[#allocation10 + $0x230] sm:$0xff]
        %v1168 = vld [vmem:[#allocation10 + $0x238] sm:$0xff]
        %v1169 = vld [vmem:[#allocation10 + $0x240] sm:$0xff]
        %v1170 = vld [vmem:[#allocation10 + $0x248] sm:$0xff]
        %v1171 = vld [vmem:[#allocation10 + $0x250] sm:$0xff]
        %v1172 = vld [vmem:[#allocation10 + $0x258] sm:$0xff]
        %v1173 = vld [vmem:[#allocation10 + $0x260] sm:$0xff]
        %v1174 = vld [vmem:[#allocation10 + $0x268] sm:$0xff]
        %v1175 = vld [vmem:[#allocation10 + $0x270] sm:$0xff]
        %v1176 = vld [vmem:[#allocation10 + $0x278] sm:$0xff]
        %v1177 = vld [vmem:[#allocation10 + $0x280] sm:$0xff]
        %v1178 = vld [vmem:[#allocation10 + $0x288] sm:$0xff]
        %v1179 = vld [vmem:[#allocation10 + $0x290] sm:$0xff]
        %v1180 = vld [vmem:[#allocation10 + $0x298] sm:$0xff]
        %v1181 = vld [vmem:[#allocation10 + $0x2a0] sm:$0xff]
        %v1182 = vld [vmem:[#allocation10 + $0x2a8] sm:$0xff]
        %v1183 = vld [vmem:[#allocation10 + $0x2b0] sm:$0xff]
        %v1184 = vld [vmem:[#allocation10 + $0x2b8] sm:$0xff]
        %v1185 = vld [vmem:[#allocation10 + $0x2c0] sm:$0xff]
        %v1186 = vld [vmem:[#allocation10 + $0x2c8] sm:$0xff]
        %v1187 = vld [vmem:[#allocation10 + $0x2d0] sm:$0xff]
        %v1188 = vld [vmem:[#allocation10 + $0x2d8] sm:$0xff]
        %v1189 = vld [vmem:[#allocation10 + $0x2e0] sm:$0xff]
        %v1190 = vld [vmem:[#allocation10 + $0x2e8] sm:$0xff]
        %v1191 = vld [vmem:[#allocation10 + $0x2f0] sm:$0xff]
        %v1192 = vld [vmem:[#allocation10 + $0x2f8] sm:$0xff]
        %v1193 = vld [vmem:[#allocation10 + $0x300] sm:$0xff]
        %v1194 = vld [vmem:[#allocation10 + $0x308] sm:$0xff]
        %v1195 = vld [vmem:[#allocation10 + $0x310] sm:$0xff]
        %v1196 = vld [vmem:[#allocation10 + $0x318] sm:$0xff]
        %v1197 = vld [vmem:[#allocation10 + $0x320] sm:$0xff]
        %v1198 = vld [vmem:[#allocation10 + $0x328] sm:$0xff]
        %v1199 = vld [vmem:[#allocation10 + $0x330] sm:$0xff]
        %v1200 = vld [vmem:[#allocation10 + $0x338] sm:$0xff]
        %v1201 = vld [vmem:[#allocation10 + $0x340] sm:$0xff]
        %v1202 = vld [vmem:[#allocation10 + $0x348] sm:$0xff]
        %v1203 = vld [vmem:[#allocation10 + $0x350] sm:$0xff]
        %v1204 = vld [vmem:[#allocation10 + $0x358] sm:$0xff]
        %v1205 = vld [vmem:[#allocation10 + $0x360] sm:$0xff]
        %v1206 = vld [vmem:[#allocation10 + $0x368] sm:$0xff]
        %v1207 = vld [vmem:[#allocation10 + $0x370] sm:$0xff]
        %v1208 = vld [vmem:[#allocation10 + $0x378] sm:$0xff]
        %v1209 = vld [vmem:[#allocation10 + $0x380] sm:$0xff]
        %v1210 = vld [vmem:[#allocation10 + $0x388] sm:$0xff]
        %v1211 = vld [vmem:[#allocation10 + $0x390] sm:$0xff]
        %v1212 = vld [vmem:[#allocation10 + $0x398] sm:$0xff]
        %v1213 = vld [vmem:[#allocation10 + $0x3a0] sm:$0xff]
        %v1214 = vld [vmem:[#allocation10 + $0x3a8] sm:$0xff]
        %v1215 = vld [vmem:[#allocation10 + $0x3b0] sm:$0xff]
        %v1216 = vld [vmem:[#allocation10 + $0x3b8] sm:$0xff]
        %v1217 = vld [vmem:[#allocation10 + $0x3c0] sm:$0xff]
        %v1218 = vld [vmem:[#allocation10 + $0x3c8] sm:$0xff]
        %v1219 = vld [vmem:[#allocation10 + $0x3d0] sm:$0xff]
        %v1220 = vld [vmem:[#allocation10 + $0x3d8] sm:$0xff]
        %v1221 = vld [vmem:[#allocation10 + $0x3e0] sm:$0xff]
        %v1222 = vld [vmem:[#allocation10 + $0x3e8] sm:$0xff]
        %v1223 = vld [vmem:[#allocation10 + $0x3f0] sm:$0xff]
        %v1224 = vld [vmem:[#allocation10 + $0x3f8] sm:$0xff]
        %v1225 = vld [vmem:[#allocation10 + $0x400] sm:$0xff]
        %v1226 = vld [vmem:[#allocation10 + $0x408] sm:$0xff]
        %v1227 = vld [vmem:[#allocation10 + $0x410] sm:$0xff]
        %v1228 = vld [vmem:[#allocation10 + $0x418] sm:$0xff]
        %v1229 = vld [vmem:[#allocation10 + $0x420] sm:$0xff]
        %v1230 = vld [vmem:[#allocation10 + $0x428] sm:$0xff]
        %v1231 = vld [vmem:[#allocation10 + $0x430] sm:$0xff]
        %v1232 = vld [vmem:[#allocation10 + $0x438] sm:$0xff]
        %v1233 = vld [vmem:[#allocation10 + $0x440] sm:$0xff]
        %v1234 = vld [vmem:[#allocation10 + $0x448] sm:$0xff]
        %v1235 = vld [vmem:[#allocation10 + $0x450] sm:$0xff]
        %v1236 = vld [vmem:[#allocation10 + $0x458] sm:$0xff]
        %v1237 = vld [vmem:[#allocation10 + $0x460] sm:$0xff]
        %v1238 = vld [vmem:[#allocation10 + $0x468] sm:$0xff]
        %v1239 = vld [vmem:[#allocation10 + $0x470] sm:$0xff]
        %v1240 = vld [vmem:[#allocation10 + $0x478] sm:$0xff]
        %v1241 = vld [vmem:[#allocation10 + $0x480] sm:$0xff]
        %v1242 = vld [vmem:[#allocation10 + $0x488] sm:$0xff]
        %v1243 = vld [vmem:[#allocation10 + $0x490] sm:$0xff]
        %v1244 = vld [vmem:[#allocation10 + $0x498] sm:$0xff]
        %v1245 = vld [vmem:[#allocation10 + $0x4a0] sm:$0xff]
        %v1246 = vld [vmem:[#allocation10 + $0x4a8] sm:$0xff]
        %v1247 = vld [vmem:[#allocation10 + $0x4b0] sm:$0xff]
        %v1248 = vld [vmem:[#allocation10 + $0x4b8] sm:$0xff]
        %v1249 = vld [vmem:[#allocation10 + $0x4c0] sm:$0xff]
        %v1250 = vld [vmem:[#allocation10 + $0x4c8] sm:$0xff]
        %v1251 = vld [vmem:[#allocation10 + $0x4d0] sm:$0xff]
        %v1252 = vld [vmem:[#allocation10 + $0x4d8] sm:$0xff]
        %v1253 = vld [vmem:[#allocation10 + $0x4e0] sm:$0xff]
        %v1254 = vld [vmem:[#allocation10 + $0x4e8] sm:$0xff]
        %v1255 = vld [vmem:[#allocation10 + $0x4f0] sm:$0xff]
        %v1256 = vld [vmem:[#allocation10 + $0x4f8] sm:$0xff]
        %v1257 = vld [vmem:[#allocation10 + $0x500] sm:$0xff]
        %v1258 = vld [vmem:[#allocation10 + $0x508] sm:$0xff]
        %v1259 = vld [vmem:[#allocation10 + $0x510] sm:$0xff]
        %v1260 = vld [vmem:[#allocation10 + $0x518] sm:$0xff]
        %v1261 = vld [vmem:[#allocation10 + $0x520] sm:$0xff]
        %v1262 = vld [vmem:[#allocation10 + $0x528] sm:$0xff]
        %v1263 = vld [vmem:[#allocation10 + $0x530] sm:$0xff]
        %v1264 = vld [vmem:[#allocation10 + $0x538] sm:$0xff]
        %v1265 = vld [vmem:[#allocation10 + $0x540] sm:$0xff]
        %v1266 = vld [vmem:[#allocation10 + $0x548] sm:$0xff]
        %v1267 = vld [vmem:[#allocation10 + $0x550] sm:$0xff]
        %v1268 = vld [vmem:[#allocation10 + $0x558] sm:$0xff]
        %v1269 = vld [vmem:[#allocation10 + $0x560] sm:$0xff]
        %v1270 = vld [vmem:[#allocation10 + $0x568] sm:$0xff]
        %v1271 = vld [vmem:[#allocation10 + $0x570] sm:$0xff]
        %v1272 = vld [vmem:[#allocation10 + $0x578] sm:$0xff]
        %v1273 = vld [vmem:[#allocation10 + $0x580] sm:$0xff]
        %v1274 = vld [vmem:[#allocation10 + $0x588] sm:$0xff]
        %v1275 = vld [vmem:[#allocation10 + $0x590] sm:$0xff]
        %v1276 = vld [vmem:[#allocation10 + $0x598] sm:$0xff]
        %v1277 = vld [vmem:[#allocation10 + $0x5a0] sm:$0xff]
        %v1278 = vld [vmem:[#allocation10 + $0x5a8] sm:$0xff]
        %v1279 = vld [vmem:[#allocation10 + $0x5b0] sm:$0xff]
        %v1280 = vld [vmem:[#allocation10 + $0x5b8] sm:$0xff]
        %v1281 = vld [vmem:[#allocation10 + $0x5c0] sm:$0xff]
        %v1282 = vld [vmem:[#allocation10 + $0x5c8] sm:$0xff]
        %v1283 = vld [vmem:[#allocation10 + $0x5d0] sm:$0xff]
        %v1284 = vld [vmem:[#allocation10 + $0x5d8] sm:$0xff]
        %v1285 = vld [vmem:[#allocation10 + $0x5e0] sm:$0xff]
        %v1286 = vld [vmem:[#allocation10 + $0x5e8] sm:$0xff]
        %v1287 = vld [vmem:[#allocation10 + $0x5f0] sm:$0xff]
        %v1288 = vld [vmem:[#allocation10 + $0x5f8] sm:$0xff]
        %v1289 = vld [vmem:[#allocation10 + $0x600] sm:$0xff]
        %v1290 = vld [vmem:[#allocation10 + $0x608] sm:$0xff]
        %v1291 = vld [vmem:[#allocation10 + $0x610] sm:$0xff]
        %v1292 = vld [vmem:[#allocation10 + $0x618] sm:$0xff]
        %v1293 = vld [vmem:[#allocation10 + $0x620] sm:$0xff]
        %v1294 = vld [vmem:[#allocation10 + $0x628] sm:$0xff]
        %v1295 = vld [vmem:[#allocation10 + $0x630] sm:$0xff]
        %v1296 = vld [vmem:[#allocation10 + $0x638] sm:$0xff]
        %v1297 = vld [vmem:[#allocation10 + $0x640] sm:$0xff]
        %v1298 = vld [vmem:[#allocation10 + $0x648] sm:$0xff]
        %v1299 = vld [vmem:[#allocation10 + $0x650] sm:$0xff]
        %v1300 = vld [vmem:[#allocation10 + $0x658] sm:$0xff]
        %v1301 = vld [vmem:[#allocation10 + $0x660] sm:$0xff]
        %v1302 = vld [vmem:[#allocation10 + $0x668] sm:$0xff]
        %v1303 = vld [vmem:[#allocation10 + $0x670] sm:$0xff]
        %v1304 = vld [vmem:[#allocation10 + $0x678] sm:$0xff]
        %v1305 = vld [vmem:[#allocation10 + $0x680] sm:$0xff]
        %v1306 = vld [vmem:[#allocation10 + $0x688] sm:$0xff]
        %v1307 = vld [vmem:[#allocation10 + $0x690] sm:$0xff]
        %v1308 = vld [vmem:[#allocation10 + $0x698] sm:$0xff]
        %v1309 = vld [vmem:[#allocation10 + $0x6a0] sm:$0xff]
        %v1310 = vld [vmem:[#allocation10 + $0x6a8] sm:$0xff]
        %v1311 = vld [vmem:[#allocation10 + $0x6b0] sm:$0xff]
        %v1312 = vld [vmem:[#allocation10 + $0x6b8] sm:$0xff]
        %v1313 = vld [vmem:[#allocation10 + $0x6c0] sm:$0xff]
        %v1314 = vld [vmem:[#allocation10 + $0x6c8] sm:$0xff]
        %v1315 = vld [vmem:[#allocation10 + $0x6d0] sm:$0xff]
        %v1316 = vld [vmem:[#allocation10 + $0x6d8] sm:$0xff]
        %v1317 = vld [vmem:[#allocation10 + $0x6e0] sm:$0xff]
        %v1318 = vld [vmem:[#allocation10 + $0x6e8] sm:$0xff]
        %v1319 = vld [vmem:[#allocation10 + $0x6f0] sm:$0xff]
        %v1320 = vld [vmem:[#allocation10 + $0x6f8] sm:$0xff]
        %v1321 = vld [vmem:[#allocation10 + $0x700] sm:$0xff]
        %v1322 = vld [vmem:[#allocation10 + $0x708] sm:$0xff]
        %v1323 = vld [vmem:[#allocation10 + $0x710] sm:$0xff]
        %v1324 = vld [vmem:[#allocation10 + $0x718] sm:$0xff]
        %v1325 = vld [vmem:[#allocation10 + $0x720] sm:$0xff]
        %v1326 = vld [vmem:[#allocation10 + $0x728] sm:$0xff]
        %v1327 = vld [vmem:[#allocation10 + $0x730] sm:$0xff]
        %v1328 = vld [vmem:[#allocation10 + $0x738] sm:$0xff]
        %v1329 = vld [vmem:[#allocation10 + $0x740] sm:$0xff]
        %v1330 = vld [vmem:[#allocation10 + $0x748] sm:$0xff]
        %v1331 = vld [vmem:[#allocation10 + $0x750] sm:$0xff]
        %v1332 = vld [vmem:[#allocation10 + $0x758] sm:$0xff]
        %v1333 = vld [vmem:[#allocation10 + $0x760] sm:$0xff]
        %v1334 = vld [vmem:[#allocation10 + $0x768] sm:$0xff]
        %v1335 = vld [vmem:[#allocation10 + $0x770] sm:$0xff]
        %v1336 = vld [vmem:[#allocation10 + $0x778] sm:$0xff]
        %v1337 = vld [vmem:[#allocation10 + $0x780] sm:$0xff]
        %v1338 = vld [vmem:[#allocation10 + $0x788] sm:$0xff]
        %v1339 = vld [vmem:[#allocation10 + $0x790] sm:$0xff]
        %v1340 = vld [vmem:[#allocation10 + $0x798] sm:$0xff]
        %v1341 = vld [vmem:[#allocation10 + $0x7a0] sm:$0xff]
        %v1342 = vld [vmem:[#allocation10 + $0x7a8] sm:$0xff]
        %v1343 = vld [vmem:[#allocation10 + $0x7b0] sm:$0xff]
        %v1344 = vld [vmem:[#allocation10 + $0x7b8] sm:$0xff]
        %v1345 = vld [vmem:[#allocation10 + $0x7c0] sm:$0xff]
        %v1346 = vld [vmem:[#allocation10 + $0x7c8] sm:$0xff]
        %v1347 = vld [vmem:[#allocation10 + $0x7d0] sm:$0xff]
        %v1348 = vld [vmem:[#allocation10 + $0x7d8] sm:$0xff]
        %v1349 = vld [vmem:[#allocation10 + $0x7e0] sm:$0xff]
        %v1350 = vld [vmem:[#allocation10 + $0x7e8] sm:$0xff]
        %v1351 = vld [vmem:[#allocation10 + $0x7f0] sm:$0xff]
        %v1352 = vld [vmem:[#allocation10 + $0x7f8] sm:$0xff]
        %s1353 = scalar_lea.vmem [#allocation10], 2048
        %v1354 = vld [vmem:[%s1353] sm:$0xff]
        %v1355 = vld [vmem:[%s1353 + $0x8] sm:$0xff]
        %v1356 = vld [vmem:[%s1353 + $0x10] sm:$0xff]
        %v1357 = vld [vmem:[%s1353 + $0x18] sm:$0xff]
        %v1358 = vld [vmem:[%s1353 + $0x20] sm:$0xff]
        %v1359 = vld [vmem:[%s1353 + $0x28] sm:$0xff]
        %v1360 = vld [vmem:[%s1353 + $0x30] sm:$0xff]
        %v1361 = vld [vmem:[%s1353 + $0x38] sm:$0xff]
        %v1362 = vld [vmem:[%s1353 + $0x40] sm:$0xff]
        %v1363 = vld [vmem:[%s1353 + $0x48] sm:$0xff]
        %v1364 = vld [vmem:[%s1353 + $0x50] sm:$0xff]
        %v1365 = vld [vmem:[%s1353 + $0x58] sm:$0xff]
        %v1366 = vld [vmem:[%s1353 + $0x60] sm:$0xff]
        %v1367 = vld [vmem:[%s1353 + $0x68] sm:$0xff]
        %v1368 = vld [vmem:[%s1353 + $0x70] sm:$0xff]
        %v1369 = vld [vmem:[%s1353 + $0x78] sm:$0xff]
        %v1370 = vld [vmem:[%s1353 + $0x80] sm:$0xff]
        %v1371 = vld [vmem:[%s1353 + $0x88] sm:$0xff]
        %v1372 = vld [vmem:[%s1353 + $0x90] sm:$0xff]
        %v1373 = vld [vmem:[%s1353 + $0x98] sm:$0xff]
        %v1374 = vld [vmem:[%s1353 + $0xa0] sm:$0xff]
        %v1375 = vld [vmem:[%s1353 + $0xa8] sm:$0xff]
        %v1376 = vld [vmem:[%s1353 + $0xb0] sm:$0xff]
        %v1377 = vld [vmem:[%s1353 + $0xb8] sm:$0xff]
        %v1378 = vld [vmem:[%s1353 + $0xc0] sm:$0xff]
        %v1379 = vld [vmem:[%s1353 + $0xc8] sm:$0xff]
        %v1380 = vld [vmem:[%s1353 + $0xd0] sm:$0xff]
        %v1381 = vld [vmem:[%s1353 + $0xd8] sm:$0xff]
        %v1382 = vld [vmem:[%s1353 + $0xe0] sm:$0xff]
        %v1383 = vld [vmem:[%s1353 + $0xe8] sm:$0xff]
        %v1384 = vld [vmem:[%s1353 + $0xf0] sm:$0xff]
        %v1385 = vld [vmem:[%s1353 + $0xf8] sm:$0xff]
        %v1386 = vld [vmem:[%s1353 + $0x100] sm:$0xff]
        %v1387 = vld [vmem:[%s1353 + $0x108] sm:$0xff]
        %v1388 = vld [vmem:[%s1353 + $0x110] sm:$0xff]
        %v1389 = vld [vmem:[%s1353 + $0x118] sm:$0xff]
        %v1390 = vld [vmem:[%s1353 + $0x120] sm:$0xff]
        %v1391 = vld [vmem:[%s1353 + $0x128] sm:$0xff]
        %v1392 = vld [vmem:[%s1353 + $0x130] sm:$0xff]
        %v1393 = vld [vmem:[%s1353 + $0x138] sm:$0xff]
        %v1394 = vld [vmem:[%s1353 + $0x140] sm:$0xff]
        %v1395 = vld [vmem:[%s1353 + $0x148] sm:$0xff]
        %v1396 = vld [vmem:[%s1353 + $0x150] sm:$0xff]
        %v1397 = vld [vmem:[%s1353 + $0x158] sm:$0xff]
        %v1398 = vld [vmem:[%s1353 + $0x160] sm:$0xff]
        %v1399 = vld [vmem:[%s1353 + $0x168] sm:$0xff]
        %v1400 = vld [vmem:[%s1353 + $0x170] sm:$0xff]
        %v1401 = vld [vmem:[%s1353 + $0x178] sm:$0xff]
        %v1402 = vld [vmem:[%s1353 + $0x180] sm:$0xff]
        %v1403 = vld [vmem:[%s1353 + $0x188] sm:$0xff]
        %v1404 = vld [vmem:[%s1353 + $0x190] sm:$0xff]
        %v1405 = vld [vmem:[%s1353 + $0x198] sm:$0xff]
        %v1406 = vld [vmem:[%s1353 + $0x1a0] sm:$0xff]
        %v1407 = vld [vmem:[%s1353 + $0x1a8] sm:$0xff]
        %v1408 = vld [vmem:[%s1353 + $0x1b0] sm:$0xff]
        %v1409 = vld [vmem:[%s1353 + $0x1b8] sm:$0xff]
        %v1410 = vld [vmem:[%s1353 + $0x1c0] sm:$0xff]
        %v1411 = vld [vmem:[%s1353 + $0x1c8] sm:$0xff]
        %v1412 = vld [vmem:[%s1353 + $0x1d0] sm:$0xff]
        %v1413 = vld [vmem:[%s1353 + $0x1d8] sm:$0xff]
        %v1414 = vld [vmem:[%s1353 + $0x1e0] sm:$0xff]
        %v1415 = vld [vmem:[%s1353 + $0x1e8] sm:$0xff]
        %v1416 = vld [vmem:[%s1353 + $0x1f0] sm:$0xff]
        %v1417 = vld [vmem:[%s1353 + $0x1f8] sm:$0xff]
        %v1418 = vld [vmem:[%s1353 + $0x200] sm:$0xff]
        %v1419 = vld [vmem:[%s1353 + $0x208] sm:$0xff]
        %v1420 = vld [vmem:[%s1353 + $0x210] sm:$0xff]
        %v1421 = vld [vmem:[%s1353 + $0x218] sm:$0xff]
        %v1422 = vld [vmem:[%s1353 + $0x220] sm:$0xff]
        %v1423 = vld [vmem:[%s1353 + $0x228] sm:$0xff]
        %v1424 = vld [vmem:[%s1353 + $0x230] sm:$0xff]
        %v1425 = vld [vmem:[%s1353 + $0x238] sm:$0xff]
        %v1426 = vld [vmem:[%s1353 + $0x240] sm:$0xff]
        %v1427 = vld [vmem:[%s1353 + $0x248] sm:$0xff]
        %v1428 = vld [vmem:[%s1353 + $0x250] sm:$0xff]
        %v1429 = vld [vmem:[%s1353 + $0x258] sm:$0xff]
        %v1430 = vld [vmem:[%s1353 + $0x260] sm:$0xff]
        %v1431 = vld [vmem:[%s1353 + $0x268] sm:$0xff]
        %v1432 = vld [vmem:[%s1353 + $0x270] sm:$0xff]
        %v1433 = vld [vmem:[%s1353 + $0x278] sm:$0xff]
        %v1434 = vld [vmem:[%s1353 + $0x280] sm:$0xff]
        %v1435 = vld [vmem:[%s1353 + $0x288] sm:$0xff]
        %v1436 = vld [vmem:[%s1353 + $0x290] sm:$0xff]
        %v1437 = vld [vmem:[%s1353 + $0x298] sm:$0xff]
        %v1438 = vld [vmem:[%s1353 + $0x2a0] sm:$0xff]
        %v1439 = vld [vmem:[%s1353 + $0x2a8] sm:$0xff]
        %v1440 = vld [vmem:[%s1353 + $0x2b0] sm:$0xff]
        %v1441 = vld [vmem:[%s1353 + $0x2b8] sm:$0xff]
        %v1442 = vld [vmem:[%s1353 + $0x2c0] sm:$0xff]
        %v1443 = vld [vmem:[%s1353 + $0x2c8] sm:$0xff]
        %v1444 = vld [vmem:[%s1353 + $0x2d0] sm:$0xff]
        %v1445 = vld [vmem:[%s1353 + $0x2d8] sm:$0xff]
        %v1446 = vld [vmem:[%s1353 + $0x2e0] sm:$0xff]
        %v1447 = vld [vmem:[%s1353 + $0x2e8] sm:$0xff]
        %v1448 = vld [vmem:[%s1353 + $0x2f0] sm:$0xff]
        %v1449 = vld [vmem:[%s1353 + $0x2f8] sm:$0xff]
        %v1450 = vld [vmem:[%s1353 + $0x300] sm:$0xff]
        %v1451 = vld [vmem:[%s1353 + $0x308] sm:$0xff]
        %v1452 = vld [vmem:[%s1353 + $0x310] sm:$0xff]
        %v1453 = vld [vmem:[%s1353 + $0x318] sm:$0xff]
        %v1454 = vld [vmem:[%s1353 + $0x320] sm:$0xff]
        %v1455 = vld [vmem:[%s1353 + $0x328] sm:$0xff]
        %v1456 = vld [vmem:[%s1353 + $0x330] sm:$0xff]
        %v1457 = vld [vmem:[%s1353 + $0x338] sm:$0xff]
        %v1458 = vld [vmem:[%s1353 + $0x340] sm:$0xff]
        %v1459 = vld [vmem:[%s1353 + $0x348] sm:$0xff]
        %v1460 = vld [vmem:[%s1353 + $0x350] sm:$0xff]
        %v1461 = vld [vmem:[%s1353 + $0x358] sm:$0xff]
        %v1462 = vld [vmem:[%s1353 + $0x360] sm:$0xff]
        %v1463 = vld [vmem:[%s1353 + $0x368] sm:$0xff]
        %v1464 = vld [vmem:[%s1353 + $0x370] sm:$0xff]
        %v1465 = vld [vmem:[%s1353 + $0x378] sm:$0xff]
        %v1466 = vld [vmem:[%s1353 + $0x380] sm:$0xff]
        %v1467 = vld [vmem:[%s1353 + $0x388] sm:$0xff]
        %v1468 = vld [vmem:[%s1353 + $0x390] sm:$0xff]
        %v1469 = vld [vmem:[%s1353 + $0x398] sm:$0xff]
        %v1470 = vld [vmem:[%s1353 + $0x3a0] sm:$0xff]
        %v1471 = vld [vmem:[%s1353 + $0x3a8] sm:$0xff]
        %v1472 = vld [vmem:[%s1353 + $0x3b0] sm:$0xff]
        %v1473 = vld [vmem:[%s1353 + $0x3b8] sm:$0xff]
        %v1474 = vld [vmem:[%s1353 + $0x3c0] sm:$0xff]
        %v1475 = vld [vmem:[%s1353 + $0x3c8] sm:$0xff]
        %v1476 = vld [vmem:[%s1353 + $0x3d0] sm:$0xff]
        %v1477 = vld [vmem:[%s1353 + $0x3d8] sm:$0xff]
        %v1478 = vld [vmem:[%s1353 + $0x3e0] sm:$0xff]
        %v1479 = vld [vmem:[%s1353 + $0x3e8] sm:$0xff]
        %v1480 = vld [vmem:[%s1353 + $0x3f0] sm:$0xff]
        %v1481 = vld [vmem:[%s1353 + $0x3f8] sm:$0xff]
        %v1482 = vld [vmem:[%s1353 + $0x400] sm:$0xff]
        %v1483 = vld [vmem:[%s1353 + $0x408] sm:$0xff]
        %v1484 = vld [vmem:[%s1353 + $0x410] sm:$0xff]
        %v1485 = vld [vmem:[%s1353 + $0x418] sm:$0xff]
        %v1486 = vld [vmem:[%s1353 + $0x420] sm:$0xff]
        %v1487 = vld [vmem:[%s1353 + $0x428] sm:$0xff]
        %v1488 = vld [vmem:[%s1353 + $0x430] sm:$0xff]
        %v1489 = vld [vmem:[%s1353 + $0x438] sm:$0xff]
        %v1490 = vld [vmem:[%s1353 + $0x440] sm:$0xff]
        %v1491 = vld [vmem:[%s1353 + $0x448] sm:$0xff]
        %v1492 = vld [vmem:[%s1353 + $0x450] sm:$0xff]
        %v1493 = vld [vmem:[%s1353 + $0x458] sm:$0xff]
        %v1494 = vld [vmem:[%s1353 + $0x460] sm:$0xff]
        %v1495 = vld [vmem:[%s1353 + $0x468] sm:$0xff]
        %v1496 = vld [vmem:[%s1353 + $0x470] sm:$0xff]
        %v1497 = vld [vmem:[%s1353 + $0x478] sm:$0xff]
        %v1498 = vld [vmem:[%s1353 + $0x480] sm:$0xff]
        %v1499 = vld [vmem:[%s1353 + $0x488] sm:$0xff]
        %v1500 = vld [vmem:[%s1353 + $0x490] sm:$0xff]
        %v1501 = vld [vmem:[%s1353 + $0x498] sm:$0xff]
        %v1502 = vld [vmem:[%s1353 + $0x4a0] sm:$0xff]
        %v1503 = vld [vmem:[%s1353 + $0x4a8] sm:$0xff]
        %v1504 = vld [vmem:[%s1353 + $0x4b0] sm:$0xff]
        %v1505 = vld [vmem:[%s1353 + $0x4b8] sm:$0xff]
        %v1506 = vld [vmem:[%s1353 + $0x4c0] sm:$0xff]
        %v1507 = vld [vmem:[%s1353 + $0x4c8] sm:$0xff]
        %v1508 = vld [vmem:[%s1353 + $0x4d0] sm:$0xff]
        %v1509 = vld [vmem:[%s1353 + $0x4d8] sm:$0xff]
        %v1510 = vld [vmem:[%s1353 + $0x4e0] sm:$0xff]
        %v1511 = vld [vmem:[%s1353 + $0x4e8] sm:$0xff]
        %v1512 = vld [vmem:[%s1353 + $0x4f0] sm:$0xff]
        %v1513 = vld [vmem:[%s1353 + $0x4f8] sm:$0xff]
        %v1514 = vld [vmem:[%s1353 + $0x500] sm:$0xff]
        %v1515 = vld [vmem:[%s1353 + $0x508] sm:$0xff]
        %v1516 = vld [vmem:[%s1353 + $0x510] sm:$0xff]
        %v1517 = vld [vmem:[%s1353 + $0x518] sm:$0xff]
        %v1518 = vld [vmem:[%s1353 + $0x520] sm:$0xff]
        %v1519 = vld [vmem:[%s1353 + $0x528] sm:$0xff]
        %v1520 = vld [vmem:[%s1353 + $0x530] sm:$0xff]
        %v1521 = vld [vmem:[%s1353 + $0x538] sm:$0xff]
        %v1522 = vld [vmem:[%s1353 + $0x540] sm:$0xff]
        %v1523 = vld [vmem:[%s1353 + $0x548] sm:$0xff]
        %v1524 = vld [vmem:[%s1353 + $0x550] sm:$0xff]
        %v1525 = vld [vmem:[%s1353 + $0x558] sm:$0xff]
        %v1526 = vld [vmem:[%s1353 + $0x560] sm:$0xff]
        %v1527 = vld [vmem:[%s1353 + $0x568] sm:$0xff]
        %v1528 = vld [vmem:[%s1353 + $0x570] sm:$0xff]
        %v1529 = vld [vmem:[%s1353 + $0x578] sm:$0xff]
        %v1530 = vld [vmem:[%s1353 + $0x580] sm:$0xff]
        %v1531 = vld [vmem:[%s1353 + $0x588] sm:$0xff]
        %v1532 = vld [vmem:[%s1353 + $0x590] sm:$0xff]
        %v1533 = vld [vmem:[%s1353 + $0x598] sm:$0xff]
        %v1534 = vld [vmem:[%s1353 + $0x5a0] sm:$0xff]
        %v1535 = vld [vmem:[%s1353 + $0x5a8] sm:$0xff]
        %v1536 = vld [vmem:[%s1353 + $0x5b0] sm:$0xff]
        %v1537 = vld [vmem:[%s1353 + $0x5b8] sm:$0xff]
        %v1538 = vld [vmem:[%s1353 + $0x5c0] sm:$0xff]
        %v1539 = vld [vmem:[%s1353 + $0x5c8] sm:$0xff]
        %v1540 = vld [vmem:[%s1353 + $0x5d0] sm:$0xff]
        %v1541 = vld [vmem:[%s1353 + $0x5d8] sm:$0xff]
        %v1542 = vld [vmem:[%s1353 + $0x5e0] sm:$0xff]
        %v1543 = vld [vmem:[%s1353 + $0x5e8] sm:$0xff]
        %v1544 = vld [vmem:[%s1353 + $0x5f0] sm:$0xff]
        %v1545 = vld [vmem:[%s1353 + $0x5f8] sm:$0xff]
        %v1546 = vld [vmem:[%s1353 + $0x600] sm:$0xff]
        %v1547 = vld [vmem:[%s1353 + $0x608] sm:$0xff]
        %v1548 = vld [vmem:[%s1353 + $0x610] sm:$0xff]
        %v1549 = vld [vmem:[%s1353 + $0x618] sm:$0xff]
        %v1550 = vld [vmem:[%s1353 + $0x620] sm:$0xff]
        %v1551 = vld [vmem:[%s1353 + $0x628] sm:$0xff]
        %v1552 = vld [vmem:[%s1353 + $0x630] sm:$0xff]
        %v1553 = vld [vmem:[%s1353 + $0x638] sm:$0xff]
        %v1554 = vld [vmem:[%s1353 + $0x640] sm:$0xff]
        %v1555 = vld [vmem:[%s1353 + $0x648] sm:$0xff]
        %v1556 = vld [vmem:[%s1353 + $0x650] sm:$0xff]
        %v1557 = vld [vmem:[%s1353 + $0x658] sm:$0xff]
        %v1558 = vld [vmem:[%s1353 + $0x660] sm:$0xff]
        %v1559 = vld [vmem:[%s1353 + $0x668] sm:$0xff]
        %v1560 = vld [vmem:[%s1353 + $0x670] sm:$0xff]
        %v1561 = vld [vmem:[%s1353 + $0x678] sm:$0xff]
        %v1562 = vld [vmem:[%s1353 + $0x680] sm:$0xff]
        %v1563 = vld [vmem:[%s1353 + $0x688] sm:$0xff]
        %v1564 = vld [vmem:[%s1353 + $0x690] sm:$0xff]
        %v1565 = vld [vmem:[%s1353 + $0x698] sm:$0xff]
        %v1566 = vld [vmem:[%s1353 + $0x6a0] sm:$0xff]
        %v1567 = vld [vmem:[%s1353 + $0x6a8] sm:$0xff]
        %v1568 = vld [vmem:[%s1353 + $0x6b0] sm:$0xff]
        %v1569 = vld [vmem:[%s1353 + $0x6b8] sm:$0xff]
        %v1570 = vld [vmem:[%s1353 + $0x6c0] sm:$0xff]
        %v1571 = vld [vmem:[%s1353 + $0x6c8] sm:$0xff]
        %v1572 = vld [vmem:[%s1353 + $0x6d0] sm:$0xff]
        %v1573 = vld [vmem:[%s1353 + $0x6d8] sm:$0xff]
        %v1574 = vld [vmem:[%s1353 + $0x6e0] sm:$0xff]
        %v1575 = vld [vmem:[%s1353 + $0x6e8] sm:$0xff]
        %v1576 = vld [vmem:[%s1353 + $0x6f0] sm:$0xff]
        %v1577 = vld [vmem:[%s1353 + $0x6f8] sm:$0xff]
        %v1578 = vld [vmem:[%s1353 + $0x700] sm:$0xff]
        %v1579 = vld [vmem:[%s1353 + $0x708] sm:$0xff]
        %v1580 = vld [vmem:[%s1353 + $0x710] sm:$0xff]
        %v1581 = vld [vmem:[%s1353 + $0x718] sm:$0xff]
        %v1582 = vld [vmem:[%s1353 + $0x720] sm:$0xff]
        %v1583 = vld [vmem:[%s1353 + $0x728] sm:$0xff]
        %v1584 = vld [vmem:[%s1353 + $0x730] sm:$0xff]
        %v1585 = vld [vmem:[%s1353 + $0x738] sm:$0xff]
        %v1586 = vld [vmem:[%s1353 + $0x740] sm:$0xff]
        %v1587 = vld [vmem:[%s1353 + $0x748] sm:$0xff]
        %v1588 = vld [vmem:[%s1353 + $0x750] sm:$0xff]
        %v1589 = vld [vmem:[%s1353 + $0x758] sm:$0xff]
        %v1590 = vld [vmem:[%s1353 + $0x760] sm:$0xff]
        %v1591 = vld [vmem:[%s1353 + $0x768] sm:$0xff]
        %v1592 = vld [vmem:[%s1353 + $0x770] sm:$0xff]
        %v1593 = vld [vmem:[%s1353 + $0x778] sm:$0xff]
        %v1594 = vld [vmem:[%s1353 + $0x780] sm:$0xff]
        %v1595 = vld [vmem:[%s1353 + $0x788] sm:$0xff]
        %v1596 = vld [vmem:[%s1353 + $0x790] sm:$0xff]
        %v1597 = vld [vmem:[%s1353 + $0x798] sm:$0xff]
        %v1598 = vld [vmem:[%s1353 + $0x7a0] sm:$0xff]
        %v1599 = vld [vmem:[%s1353 + $0x7a8] sm:$0xff]
        %v1600 = vld [vmem:[%s1353 + $0x7b0] sm:$0xff]
        %v1601 = vld [vmem:[%s1353 + $0x7b8] sm:$0xff]
        %v1602 = vld [vmem:[%s1353 + $0x7c0] sm:$0xff]
        %v1603 = vld [vmem:[%s1353 + $0x7c8] sm:$0xff]
        %v1604 = vld [vmem:[%s1353 + $0x7d0] sm:$0xff]
        %v1605 = vld [vmem:[%s1353 + $0x7d8] sm:$0xff]
        %v1606 = vld [vmem:[%s1353 + $0x7e0] sm:$0xff]
        %v1607 = vld [vmem:[%s1353 + $0x7e8] sm:$0xff]
        %v1608 = vld [vmem:[%s1353 + $0x7f0] sm:$0xff]
        %v1609 = vld [vmem:[%s1353 + $0x7f8] sm:$0xff]
        %1610 = vmatprep.subr.mxu0 %v1415
        %1611 = vmatpush1.msra.mxu0 %v1414
        %1612 = vmatprep.subr.mxu0 %v1411
        %1613 = vmatpush1.msra.mxu0 %v1410
        %1614 = vmatprep.subr.mxu0 %v1407
        %1615 = vmatpush1.msra.mxu0 %v1406
        %1616 = vmatprep.subr.mxu0 %v1403
        %1617 = vmatpush1.msra.mxu0 %v1402
        %1618 = vmatprep.subr.mxu0 %v1399
        %1619 = vmatpush1.msra.mxu0 %v1398
        %1620 = vmatprep.subr.mxu0 %v1395
        %1621 = vmatpush1.msra.mxu0 %v1394
        %1622 = vmatprep.subr.mxu0 %v1391
        %1623 = vmatpush1.msra.mxu0 %v1390
        %1624 = vmatprep.subr.mxu0 %v1387
        %1625 = vmatpush1.msra.mxu0 %v1386
        %1626 = vmatprep.subr.mxu0 %v1383
        %1627 = vmatpush1.msra.mxu0 %v1382
        %1628 = vmatprep.subr.mxu0 %v1379
        %1629 = vmatpush1.msra.mxu0 %v1378
        %1630 = vmatprep.subr.mxu0 %v1375
        %1631 = vmatpush1.msra.mxu0 %v1374
        %1632 = vmatprep.subr.mxu0 %v1371
        %1633 = vmatpush1.msra.mxu0 %v1370
        %1634 = vmatprep.subr.mxu0 %v1367
        %1635 = vmatpush1.msra.mxu0 %v1366
        %1636 = vmatprep.subr.mxu0 %v1363
        %1637 = vmatpush1.msra.mxu0 %v1362
        %1638 = vmatprep.subr.mxu0 %v1359
        %1639 = vmatpush1.msra.mxu0 %v1358
        %1640 = vmatprep.subr.mxu0 %v1355
        %1641 = vmatpush1.msra.mxu0 %v1354
        %1642 = vmatprep.subr.mxu0 %v1479
        %1643 = vmatpush2.msra.mxu0 %v1478
        %1644 = vmatprep.subr.mxu0 %v1475
        %1645 = vmatpush2.msra.mxu0 %v1474
        %1646 = vmatprep.subr.mxu0 %v1471
        %1647 = vmatpush2.msra.mxu0 %v1470
        %1648 = vmatprep.subr.mxu0 %v1467
        %1649 = vmatpush2.msra.mxu0 %v1466
        %1650 = vmatprep.subr.mxu0 %v1463
        %1651 = vmatpush2.msra.mxu0 %v1462
        %1652 = vmatprep.subr.mxu0 %v1459
        %1653 = vmatpush2.msra.mxu0 %v1458
        %1654 = vmatprep.subr.mxu0 %v1455
        %1655 = vmatpush2.msra.mxu0 %v1454
        %1656 = vmatprep.subr.mxu0 %v1451
        %1657 = vmatpush2.msra.mxu0 %v1450
        %1658 = vmatprep.subr.mxu0 %v1447
        %1659 = vmatpush2.msra.mxu0 %v1446
        %1660 = vmatprep.subr.mxu0 %v1443
        %1661 = vmatpush2.msra.mxu0 %v1442
        %1662 = vmatprep.subr.mxu0 %v1439
        %1663 = vmatpush2.msra.mxu0 %v1438
        %1664 = vmatprep.subr.mxu0 %v1435
        %1665 = vmatpush2.msra.mxu0 %v1434
        %1666 = vmatprep.subr.mxu0 %v1431
        %1667 = vmatpush2.msra.mxu0 %v1430
        %1668 = vmatprep.subr.mxu0 %v1427
        %1669 = vmatpush2.msra.mxu0 %v1426
        %1670 = vmatprep.subr.mxu0 %v1423
        %1671 = vmatpush2.msra.mxu0 %v1422
        %1672 = vmatprep.subr.mxu0 %v1419
        %1673 = vmatpush2.msra.mxu0 %v1418
        %1674 = vmatprep.mubr.f32.mxu0 %v927
        %1675 = vmatmul.mubr.f32.gmra.mxu0 %v926
        %v1676 = vpop.f32.mrf.mxu0
        %v1677 = vadd.f32 0.0, %v1676
        %v1678 = vpop.f32.mrf.mxu0
        %v1679 = vadd.f32 0.0, %v1678
        %1680 = vmatprep.mubr.f32.mxu0 %v931
        %1681 = vmatmul.mubr.f32.gmra.mxu0 %v930
        %v1682 = vpop.f32.mrf.mxu0
        %v1683 = vadd.f32 0.0, %v1682
        %v1684 = vpop.f32.mrf.mxu0
        %v1685 = vadd.f32 0.0, %v1684
        %1686 = vdwg.mxu0
        %1687 = vmatprep.subr.mxu0 %v1543
        %1688 = vmatpush1.msra.mxu0 %v1542
        %1689 = vmatprep.subr.mxu0 %v1539
        %1690 = vmatpush1.msra.mxu0 %v1538
        %1691 = vmatprep.subr.mxu0 %v1535
        %1692 = vmatpush1.msra.mxu0 %v1534
        %1693 = vmatprep.subr.mxu0 %v1531
        %1694 = vmatpush1.msra.mxu0 %v1530
        %1695 = vmatprep.subr.mxu0 %v1527
        %1696 = vmatpush1.msra.mxu0 %v1526
        %1697 = vmatprep.subr.mxu0 %v1523
        %1698 = vmatpush1.msra.mxu0 %v1522
        %1699 = vmatprep.subr.mxu0 %v1519
        %1700 = vmatpush1.msra.mxu0 %v1518
        %1701 = vmatprep.subr.mxu0 %v1515
        %1702 = vmatpush1.msra.mxu0 %v1514
        %1703 = vmatprep.subr.mxu0 %v1511
        %1704 = vmatpush1.msra.mxu0 %v1510
        %1705 = vmatprep.subr.mxu0 %v1507
        %1706 = vmatpush1.msra.mxu0 %v1506
        %1707 = vmatprep.subr.mxu0 %v1503
        %1708 = vmatpush1.msra.mxu0 %v1502
        %1709 = vmatprep.subr.mxu0 %v1499
        %1710 = vmatpush1.msra.mxu0 %v1498
        %1711 = vmatprep.subr.mxu0 %v1495
        %1712 = vmatpush1.msra.mxu0 %v1494
        %1713 = vmatprep.subr.mxu0 %v1491
        %1714 = vmatpush1.msra.mxu0 %v1490
        %1715 = vmatprep.subr.mxu0 %v1487
        %1716 = vmatpush1.msra.mxu0 %v1486
        %1717 = vmatprep.subr.mxu0 %v1483
        %1718 = vmatpush1.msra.mxu0 %v1482
        %1719 = vmatprep.subr.mxu0 %v1607
        %1720 = vmatpush2.msra.mxu0 %v1606
        %1721 = vmatprep.subr.mxu0 %v1603
        %1722 = vmatpush2.msra.mxu0 %v1602
        %1723 = vmatprep.subr.mxu0 %v1599
        %1724 = vmatpush2.msra.mxu0 %v1598
        %1725 = vmatprep.subr.mxu0 %v1595
        %1726 = vmatpush2.msra.mxu0 %v1594
        %1727 = vmatprep.subr.mxu0 %v1591
        %1728 = vmatpush2.msra.mxu0 %v1590
        %1729 = vmatprep.subr.mxu0 %v1587
        %1730 = vmatpush2.msra.mxu0 %v1586
        %1731 = vmatprep.subr.mxu0 %v1583
        %1732 = vmatpush2.msra.mxu0 %v1582
        %1733 = vmatprep.subr.mxu0 %v1579
        %1734 = vmatpush2.msra.mxu0 %v1578
        %1735 = vmatprep.subr.mxu0 %v1575
        %1736 = vmatpush2.msra.mxu0 %v1574
        %1737 = vmatprep.subr.mxu0 %v1571
        %1738 = vmatpush2.msra.mxu0 %v1570
        %1739 = vmatprep.subr.mxu0 %v1567
        %1740 = vmatpush2.msra.mxu0 %v1566
        %1741 = vmatprep.subr.mxu0 %v1563
        %1742 = vmatpush2.msra.mxu0 %v1562
        %1743 = vmatprep.subr.mxu0 %v1559
        %1744 = vmatpush2.msra.mxu0 %v1558
        %1745 = vmatprep.subr.mxu0 %v1555
        %1746 = vmatpush2.msra.mxu0 %v1554
        %1747 = vmatprep.subr.mxu0 %v1551
        %1748 = vmatpush2.msra.mxu0 %v1550
        %1749 = vmatprep.subr.mxu0 %v1547
        %1750 = vmatpush2.msra.mxu0 %v1546
        %1751 = vmatprep.mubr.f32.mxu0 %v929
        %1752 = vmatmul.mubr.f32.gmra.mxu0 %v928
        %v1753 = vpop.f32.mrf.mxu0
        %v1754 = vadd.f32 %v1677, %v1753
        %v1755 = vpop.f32.mrf.mxu0
        %v1756 = vadd.f32 %v1679, %v1755
        %1757 = vmatprep.mubr.f32.mxu0 %v933
        %1758 = vmatmul.mubr.f32.gmra.mxu0 %v932
        %v1759 = vpop.f32.mrf.mxu0
        %v1760 = vadd.f32 %v1683, %v1759
        %v1761 = vpop.f32.mrf.mxu0
        %v1762 = vadd.f32 %v1685, %v1761
        %1763 = vdwg.mxu0
        %1764 = vmatprep.subr.mxu0 %v1417
        %1765 = vmatpush1.msra.mxu0 %v1416
        %1766 = vmatprep.subr.mxu0 %v1413
        %1767 = vmatpush1.msra.mxu0 %v1412
        %1768 = vmatprep.subr.mxu0 %v1409
        %1769 = vmatpush1.msra.mxu0 %v1408
        %1770 = vmatprep.subr.mxu0 %v1405
        %1771 = vmatpush1.msra.mxu0 %v1404
        %1772 = vmatprep.subr.mxu0 %v1401
        %1773 = vmatpush1.msra.mxu0 %v1400
        %1774 = vmatprep.subr.mxu0 %v1397
        %1775 = vmatpush1.msra.mxu0 %v1396
        %1776 = vmatprep.subr.mxu0 %v1393
        %1777 = vmatpush1.msra.mxu0 %v1392
        %1778 = vmatprep.subr.mxu0 %v1389
        %1779 = vmatpush1.msra.mxu0 %v1388
        %1780 = vmatprep.subr.mxu0 %v1385
        %1781 = vmatpush1.msra.mxu0 %v1384
        %1782 = vmatprep.subr.mxu0 %v1381
        %1783 = vmatpush1.msra.mxu0 %v1380
        %1784 = vmatprep.subr.mxu0 %v1377
        %1785 = vmatpush1.msra.mxu0 %v1376
        %1786 = vmatprep.subr.mxu0 %v1373
        %1787 = vmatpush1.msra.mxu0 %v1372
        %1788 = vmatprep.subr.mxu0 %v1369
        %1789 = vmatpush1.msra.mxu0 %v1368
        %1790 = vmatprep.subr.mxu0 %v1365
        %1791 = vmatpush1.msra.mxu0 %v1364
        %1792 = vmatprep.subr.mxu0 %v1361
        %1793 = vmatpush1.msra.mxu0 %v1360
        %1794 = vmatprep.subr.mxu0 %v1357
        %1795 = vmatpush1.msra.mxu0 %v1356
        %1796 = vmatprep.subr.mxu0 %v1481
        %1797 = vmatpush2.msra.mxu0 %v1480
        %1798 = vmatprep.subr.mxu0 %v1477
        %1799 = vmatpush2.msra.mxu0 %v1476
        %1800 = vmatprep.subr.mxu0 %v1473
        %1801 = vmatpush2.msra.mxu0 %v1472
        %1802 = vmatprep.subr.mxu0 %v1469
        %1803 = vmatpush2.msra.mxu0 %v1468
        %1804 = vmatprep.subr.mxu0 %v1465
        %1805 = vmatpush2.msra.mxu0 %v1464
        %1806 = vmatprep.subr.mxu0 %v1461
        %1807 = vmatpush2.msra.mxu0 %v1460
        %1808 = vmatprep.subr.mxu0 %v1457
        %1809 = vmatpush2.msra.mxu0 %v1456
        %1810 = vmatprep.subr.mxu0 %v1453
        %1811 = vmatpush2.msra.mxu0 %v1452
        %1812 = vmatprep.subr.mxu0 %v1449
        %1813 = vmatpush2.msra.mxu0 %v1448
        %1814 = vmatprep.subr.mxu0 %v1445
        %1815 = vmatpush2.msra.mxu0 %v1444
        %1816 = vmatprep.subr.mxu0 %v1441
        %1817 = vmatpush2.msra.mxu0 %v1440
        %1818 = vmatprep.subr.mxu0 %v1437
        %1819 = vmatpush2.msra.mxu0 %v1436
        %1820 = vmatprep.subr.mxu0 %v1433
        %1821 = vmatpush2.msra.mxu0 %v1432
        %1822 = vmatprep.subr.mxu0 %v1429
        %1823 = vmatpush2.msra.mxu0 %v1428
        %1824 = vmatprep.subr.mxu0 %v1425
        %1825 = vmatpush2.msra.mxu0 %v1424
        %1826 = vmatprep.subr.mxu0 %v1421
        %1827 = vmatpush2.msra.mxu0 %v1420
        %1828 = vmatprep.mubr.f32.mxu0 %v927
        %1829 = vmatmul.mubr.f32.gmra.mxu0 %v926
        %v1830 = vpop.f32.mrf.mxu0
        %v1831 = vadd.f32 0.0, %v1830
        %v1832 = vpop.f32.mrf.mxu0
        %v1833 = vadd.f32 0.0, %v1832
        %1834 = vmatprep.mubr.f32.mxu0 %v931
        %1835 = vmatmul.mubr.f32.gmra.mxu0 %v930
        %v1836 = vpop.f32.mrf.mxu0
        %v1837 = vadd.f32 0.0, %v1836
        %v1838 = vpop.f32.mrf.mxu0
        %v1839 = vadd.f32 0.0, %v1838
        %1840 = vdwg.mxu0
        %1841 = vmatprep.subr.mxu0 %v1545
        %1842 = vmatpush1.msra.mxu0 %v1544
        %1843 = vmatprep.subr.mxu0 %v1541
        %1844 = vmatpush1.msra.mxu0 %v1540
        %1845 = vmatprep.subr.mxu0 %v1537
        %1846 = vmatpush1.msra.mxu0 %v1536
        %1847 = vmatprep.subr.mxu0 %v1533
        %1848 = vmatpush1.msra.mxu0 %v1532
        %1849 = vmatprep.subr.mxu0 %v1529
        %1850 = vmatpush1.msra.mxu0 %v1528
        %1851 = vmatprep.subr.mxu0 %v1525
        %1852 = vmatpush1.msra.mxu0 %v1524
        %1853 = vmatprep.subr.mxu0 %v1521
        %1854 = vmatpush1.msra.mxu0 %v1520
        %1855 = vmatprep.subr.mxu0 %v1517
        %1856 = vmatpush1.msra.mxu0 %v1516
        %1857 = vmatprep.subr.mxu0 %v1513
        %1858 = vmatpush1.msra.mxu0 %v1512
        %1859 = vmatprep.subr.mxu0 %v1509
        %1860 = vmatpush1.msra.mxu0 %v1508
        %1861 = vmatprep.subr.mxu0 %v1505
        %1862 = vmatpush1.msra.mxu0 %v1504
        %1863 = vmatprep.subr.mxu0 %v1501
        %1864 = vmatpush1.msra.mxu0 %v1500
        %1865 = vmatprep.subr.mxu0 %v1497
        %1866 = vmatpush1.msra.mxu0 %v1496
        %1867 = vmatprep.subr.mxu0 %v1493
        %1868 = vmatpush1.msra.mxu0 %v1492
        %1869 = vmatprep.subr.mxu0 %v1489
        %1870 = vmatpush1.msra.mxu0 %v1488
        %1871 = vmatprep.subr.mxu0 %v1485
        %1872 = vmatpush1.msra.mxu0 %v1484
        %1873 = vmatprep.subr.mxu0 %v1609
        %1874 = vmatpush2.msra.mxu0 %v1608
        %1875 = vmatprep.subr.mxu0 %v1605
        %1876 = vmatpush2.msra.mxu0 %v1604
        %1877 = vmatprep.subr.mxu0 %v1601
        %1878 = vmatpush2.msra.mxu0 %v1600
        %1879 = vmatprep.subr.mxu0 %v1597
        %1880 = vmatpush2.msra.mxu0 %v1596
        %1881 = vmatprep.subr.mxu0 %v1593
        %1882 = vmatpush2.msra.mxu0 %v1592
        %1883 = vmatprep.subr.mxu0 %v1589
        %1884 = vmatpush2.msra.mxu0 %v1588
        %1885 = vmatprep.subr.mxu0 %v1585
        %1886 = vmatpush2.msra.mxu0 %v1584
        %1887 = vmatprep.subr.mxu0 %v1581
        %1888 = vmatpush2.msra.mxu0 %v1580
        %1889 = vmatprep.subr.mxu0 %v1577
        %1890 = vmatpush2.msra.mxu0 %v1576
        %1891 = vmatprep.subr.mxu0 %v1573
        %1892 = vmatpush2.msra.mxu0 %v1572
        %1893 = vmatprep.subr.mxu0 %v1569
        %1894 = vmatpush2.msra.mxu0 %v1568
        %1895 = vmatprep.subr.mxu0 %v1565
        %1896 = vmatpush2.msra.mxu0 %v1564
        %1897 = vmatprep.subr.mxu0 %v1561
        %1898 = vmatpush2.msra.mxu0 %v1560
        %1899 = vmatprep.subr.mxu0 %v1557
        %1900 = vmatpush2.msra.mxu0 %v1556
        %1901 = vmatprep.subr.mxu0 %v1553
        %1902 = vmatpush2.msra.mxu0 %v1552
        %1903 = vmatprep.subr.mxu0 %v1549
        %1904 = vmatpush2.msra.mxu0 %v1548
        %1905 = vmatprep.mubr.f32.mxu0 %v929
        %1906 = vmatmul.mubr.f32.gmra.mxu0 %v928
        %v1907 = vpop.f32.mrf.mxu0
        %v1908 = vadd.f32 %v1831, %v1907
        %v1909 = vpop.f32.mrf.mxu0
        %v1910 = vadd.f32 %v1833, %v1909
        %1911 = vmatprep.mubr.f32.mxu0 %v933
        %1912 = vmatmul.mubr.f32.gmra.mxu0 %v932
        %v1913 = vpop.f32.mrf.mxu0
        %v1914 = vadd.f32 %v1837, %v1913
        %v1915 = vpop.f32.mrf.mxu0
        %v1916 = vadd.f32 %v1839, %v1915
        %1917 = vdwg.mxu0
        %1918 = vmatprep.subr.mxu0 %v1158
        %1919 = vmatpush1.msra.mxu0 %v1157
        %1920 = vmatprep.subr.mxu0 %v1154
        %1921 = vmatpush1.msra.mxu0 %v1153
        %1922 = vmatprep.subr.mxu0 %v1150
        %1923 = vmatpush1.msra.mxu0 %v1149
        %1924 = vmatprep.subr.mxu0 %v1146
        %1925 = vmatpush1.msra.mxu0 %v1145
        %1926 = vmatprep.subr.mxu0 %v1142
        %1927 = vmatpush1.msra.mxu0 %v1141
        %1928 = vmatprep.subr.mxu0 %v1138
        %1929 = vmatpush1.msra.mxu0 %v1137
        %1930 = vmatprep.subr.mxu0 %v1134
        %1931 = vmatpush1.msra.mxu0 %v1133
        %1932 = vmatprep.subr.mxu0 %v1130
        %1933 = vmatpush1.msra.mxu0 %v1129
        %1934 = vmatprep.subr.mxu0 %v1126
        %1935 = vmatpush1.msra.mxu0 %v1125
        %1936 = vmatprep.subr.mxu0 %v1122
        %1937 = vmatpush1.msra.mxu0 %v1121
        %1938 = vmatprep.subr.mxu0 %v1118
        %1939 = vmatpush1.msra.mxu0 %v1117
        %1940 = vmatprep.subr.mxu0 %v1114
        %1941 = vmatpush1.msra.mxu0 %v1113
        %1942 = vmatprep.subr.mxu0 %v1110
        %1943 = vmatpush1.msra.mxu0 %v1109
        %1944 = vmatprep.subr.mxu0 %v1106
        %1945 = vmatpush1.msra.mxu0 %v1105
        %1946 = vmatprep.subr.mxu0 %v1102
        %1947 = vmatpush1.msra.mxu0 %v1101
        %1948 = vmatprep.subr.mxu0 %v1098
        %1949 = vmatpush1.msra.mxu0 %v1097
        %1950 = vmatprep.subr.mxu0 %v1222
        %1951 = vmatpush2.msra.mxu0 %v1221
        %1952 = vmatprep.subr.mxu0 %v1218
        %1953 = vmatpush2.msra.mxu0 %v1217
        %1954 = vmatprep.subr.mxu0 %v1214
        %1955 = vmatpush2.msra.mxu0 %v1213
        %1956 = vmatprep.subr.mxu0 %v1210
        %1957 = vmatpush2.msra.mxu0 %v1209
        %1958 = vmatprep.subr.mxu0 %v1206
        %1959 = vmatpush2.msra.mxu0 %v1205
        %1960 = vmatprep.subr.mxu0 %v1202
        %1961 = vmatpush2.msra.mxu0 %v1201
        %1962 = vmatprep.subr.mxu0 %v1198
        %1963 = vmatpush2.msra.mxu0 %v1197
        %1964 = vmatprep.subr.mxu0 %v1194
        %1965 = vmatpush2.msra.mxu0 %v1193
        %1966 = vmatprep.subr.mxu0 %v1190
        %1967 = vmatpush2.msra.mxu0 %v1189
        %1968 = vmatprep.subr.mxu0 %v1186
        %1969 = vmatpush2.msra.mxu0 %v1185
        %1970 = vmatprep.subr.mxu0 %v1182
        %1971 = vmatpush2.msra.mxu0 %v1181
        %1972 = vmatprep.subr.mxu0 %v1178
        %1973 = vmatpush2.msra.mxu0 %v1177
        %1974 = vmatprep.subr.mxu0 %v1174
        %1975 = vmatpush2.msra.mxu0 %v1173
        %1976 = vmatprep.subr.mxu0 %v1170
        %1977 = vmatpush2.msra.mxu0 %v1169
        %1978 = vmatprep.subr.mxu0 %v1166
        %1979 = vmatpush2.msra.mxu0 %v1165
        %1980 = vmatprep.subr.mxu0 %v1162
        %1981 = vmatpush2.msra.mxu0 %v1161
        %1982 = vmatprep.mubr.f32.mxu0 %v1012
        %1983 = vmatmul.mubr.f32.gmra.mxu0 %v1010
        %v1984 = vpop.f32.mrf.mxu0
        %v1985 = vadd.f32 %v1754, %v1984
        %v1986 = vpop.f32.mrf.mxu0
        %v1987 = vadd.f32 %v1756, %v1986
        %1988 = vmatprep.mubr.f32.mxu0 %v1018
        %1989 = vmatmul.mubr.f32.gmra.mxu0 %v1016
        %v1990 = vpop.f32.mrf.mxu0
        %v1991 = vadd.f32 %v1760, %v1990
        %v1992 = vpop.f32.mrf.mxu0
        %v1993 = vadd.f32 %v1762, %v1992
        %1994 = vdwg.mxu0
        %1995 = vmatprep.subr.mxu0 %v1286
        %1996 = vmatpush1.msra.mxu0 %v1285
        %1997 = vmatprep.subr.mxu0 %v1282
        %1998 = vmatpush1.msra.mxu0 %v1281
        %1999 = vmatprep.subr.mxu0 %v1278
        %2000 = vmatpush1.msra.mxu0 %v1277
        %2001 = vmatprep.subr.mxu0 %v1274
        %2002 = vmatpush1.msra.mxu0 %v1273
        %2003 = vmatprep.subr.mxu0 %v1270
        %2004 = vmatpush1.msra.mxu0 %v1269
        %2005 = vmatprep.subr.mxu0 %v1266
        %2006 = vmatpush1.msra.mxu0 %v1265
        %2007 = vmatprep.subr.mxu0 %v1262
        %2008 = vmatpush1.msra.mxu0 %v1261
        %2009 = vmatprep.subr.mxu0 %v1258
        %2010 = vmatpush1.msra.mxu0 %v1257
        %2011 = vmatprep.subr.mxu0 %v1254
        %2012 = vmatpush1.msra.mxu0 %v1253
        %2013 = vmatprep.subr.mxu0 %v1250
        %2014 = vmatpush1.msra.mxu0 %v1249
        %2015 = vmatprep.subr.mxu0 %v1246
        %2016 = vmatpush1.msra.mxu0 %v1245
        %2017 = vmatprep.subr.mxu0 %v1242
        %2018 = vmatpush1.msra.mxu0 %v1241
        %2019 = vmatprep.subr.mxu0 %v1238
        %2020 = vmatpush1.msra.mxu0 %v1237
        %2021 = vmatprep.subr.mxu0 %v1234
        %2022 = vmatpush1.msra.mxu0 %v1233
        %2023 = vmatprep.subr.mxu0 %v1230
        %2024 = vmatpush1.msra.mxu0 %v1229
        %2025 = vmatprep.subr.mxu0 %v1226
        %2026 = vmatpush1.msra.mxu0 %v1225
        %2027 = vmatprep.subr.mxu0 %v1350
        %2028 = vmatpush2.msra.mxu0 %v1349
        %2029 = vmatprep.subr.mxu0 %v1346
        %2030 = vmatpush2.msra.mxu0 %v1345
        %2031 = vmatprep.subr.mxu0 %v1342
        %2032 = vmatpush2.msra.mxu0 %v1341
        %2033 = vmatprep.subr.mxu0 %v1338
        %2034 = vmatpush2.msra.mxu0 %v1337
        %2035 = vmatprep.subr.mxu0 %v1334
        %2036 = vmatpush2.msra.mxu0 %v1333
        %2037 = vmatprep.subr.mxu0 %v1330
        %2038 = vmatpush2.msra.mxu0 %v1329
        %2039 = vmatprep.subr.mxu0 %v1326
        %2040 = vmatpush2.msra.mxu0 %v1325
        %2041 = vmatprep.subr.mxu0 %v1322
        %2042 = vmatpush2.msra.mxu0 %v1321
        %2043 = vmatprep.subr.mxu0 %v1318
        %2044 = vmatpush2.msra.mxu0 %v1317
        %2045 = vmatprep.subr.mxu0 %v1314
        %2046 = vmatpush2.msra.mxu0 %v1313
        %2047 = vmatprep.subr.mxu0 %v1310
        %2048 = vmatpush2.msra.mxu0 %v1309
        %2049 = vmatprep.subr.mxu0 %v1306
        %2050 = vmatpush2.msra.mxu0 %v1305
        %2051 = vmatprep.subr.mxu0 %v1302
        %2052 = vmatpush2.msra.mxu0 %v1301
        %2053 = vmatprep.subr.mxu0 %v1298
        %2054 = vmatpush2.msra.mxu0 %v1297
        %2055 = vmatprep.subr.mxu0 %v1294
        %2056 = vmatpush2.msra.mxu0 %v1293
        %2057 = vmatprep.subr.mxu0 %v1290
        %2058 = vmatpush2.msra.mxu0 %v1289
        %2059 = vmatprep.mubr.f32.mxu0 %v1089
        %2060 = vmatmul.mubr.f32.gmra.mxu0 %v1087
        %v2061 = vpop.f32.mrf.mxu0
        %v2062 = vadd.f32 %v1985, %v2061
        %v2063 = vpop.f32.mrf.mxu0
        %v2064 = vadd.f32 %v1987, %v2063
        %2065 = vmatprep.mubr.f32.mxu0 %v1095
        %2066 = vmatmul.mubr.f32.gmra.mxu0 %v1093
        %v2067 = vpop.f32.mrf.mxu0
        %v2068 = vadd.f32 %v1991, %v2067
        %v2069 = vpop.f32.mrf.mxu0
        %v2070 = vadd.f32 %v1993, %v2069
        %2071 = vdwg.mxu0
        %2072 = vmatprep.subr.mxu0 %v1160
        %2073 = vmatpush1.msra.mxu0 %v1159
        %2074 = vmatprep.subr.mxu0 %v1156
        %2075 = vmatpush1.msra.mxu0 %v1155
        %2076 = vmatprep.subr.mxu0 %v1152
        %2077 = vmatpush1.msra.mxu0 %v1151
        %2078 = vmatprep.subr.mxu0 %v1148
        %2079 = vmatpush1.msra.mxu0 %v1147
        %2080 = vmatprep.subr.mxu0 %v1144
        %2081 = vmatpush1.msra.mxu0 %v1143
        %2082 = vmatprep.subr.mxu0 %v1140
        %2083 = vmatpush1.msra.mxu0 %v1139
        %2084 = vmatprep.subr.mxu0 %v1136
        %2085 = vmatpush1.msra.mxu0 %v1135
        %2086 = vmatprep.subr.mxu0 %v1132
        %2087 = vmatpush1.msra.mxu0 %v1131
        %2088 = vmatprep.subr.mxu0 %v1128
        %2089 = vmatpush1.msra.mxu0 %v1127
        %2090 = vmatprep.subr.mxu0 %v1124
        %2091 = vmatpush1.msra.mxu0 %v1123
        %2092 = vmatprep.subr.mxu0 %v1120
        %2093 = vmatpush1.msra.mxu0 %v1119
        %2094 = vmatprep.subr.mxu0 %v1116
        %2095 = vmatpush1.msra.mxu0 %v1115
        %2096 = vmatprep.subr.mxu0 %v1112
        %2097 = vmatpush1.msra.mxu0 %v1111
        %2098 = vmatprep.subr.mxu0 %v1108
        %2099 = vmatpush1.msra.mxu0 %v1107
        %2100 = vmatprep.subr.mxu0 %v1104
        %2101 = vmatpush1.msra.mxu0 %v1103
        %2102 = vmatprep.subr.mxu0 %v1100
        %2103 = vmatpush1.msra.mxu0 %v1099
        %2104 = vmatprep.subr.mxu0 %v1224
        %2105 = vmatpush2.msra.mxu0 %v1223
        %2106 = vmatprep.subr.mxu0 %v1220
        %2107 = vmatpush2.msra.mxu0 %v1219
        %2108 = vmatprep.subr.mxu0 %v1216
        %2109 = vmatpush2.msra.mxu0 %v1215
        %2110 = vmatprep.subr.mxu0 %v1212
        %2111 = vmatpush2.msra.mxu0 %v1211
        %2112 = vmatprep.subr.mxu0 %v1208
        %2113 = vmatpush2.msra.mxu0 %v1207
        %2114 = vmatprep.subr.mxu0 %v1204
        %2115 = vmatpush2.msra.mxu0 %v1203
        %2116 = vmatprep.subr.mxu0 %v1200
        %2117 = vmatpush2.msra.mxu0 %v1199
        %2118 = vmatprep.subr.mxu0 %v1196
        %2119 = vmatpush2.msra.mxu0 %v1195
        %2120 = vmatprep.subr.mxu0 %v1192
        %2121 = vmatpush2.msra.mxu0 %v1191
        %2122 = vmatprep.subr.mxu0 %v1188
        %2123 = vmatpush2.msra.mxu0 %v1187
        %2124 = vmatprep.subr.mxu0 %v1184
        %2125 = vmatpush2.msra.mxu0 %v1183
        %2126 = vmatprep.subr.mxu0 %v1180
        %2127 = vmatpush2.msra.mxu0 %v1179
        %2128 = vmatprep.subr.mxu0 %v1176
        %2129 = vmatpush2.msra.mxu0 %v1175
        %2130 = vmatprep.subr.mxu0 %v1172
        %2131 = vmatpush2.msra.mxu0 %v1171
        %2132 = vmatprep.subr.mxu0 %v1168
        %2133 = vmatpush2.msra.mxu0 %v1167
        %2134 = vmatprep.subr.mxu0 %v1164
        %2135 = vmatpush2.msra.mxu0 %v1163
        %2136 = vmatprep.mubr.f32.mxu0 %v1012
        %2137 = vmatmul.mubr.f32.gmra.mxu0 %v1010
        %v2138 = vpop.f32.mrf.mxu0
        %v2139 = vadd.f32 %v1908, %v2138
        %v2140 = vpop.f32.mrf.mxu0
        %v2141 = vadd.f32 %v1910, %v2140
        %2142 = vmatprep.mubr.f32.mxu0 %v1018
        %2143 = vmatmul.mubr.f32.gmra.mxu0 %v1016
        %v2144 = vpop.f32.mrf.mxu0
        %v2145 = vadd.f32 %v1914, %v2144
        %v2146 = vpop.f32.mrf.mxu0
        %v2147 = vadd.f32 %v1916, %v2146
        %2148 = vdwg.mxu0
        %2149 = vmatprep.subr.mxu0 %v1288
        %2150 = vmatpush1.msra.mxu0 %v1287
        %2151 = vmatprep.subr.mxu0 %v1284
        %2152 = vmatpush1.msra.mxu0 %v1283
        %2153 = vmatprep.subr.mxu0 %v1280
        %2154 = vmatpush1.msra.mxu0 %v1279
        %2155 = vmatprep.subr.mxu0 %v1276
        %2156 = vmatpush1.msra.mxu0 %v1275
        %2157 = vmatprep.subr.mxu0 %v1272
        %2158 = vmatpush1.msra.mxu0 %v1271
        %2159 = vmatprep.subr.mxu0 %v1268
        %2160 = vmatpush1.msra.mxu0 %v1267
        %2161 = vmatprep.subr.mxu0 %v1264
        %2162 = vmatpush1.msra.mxu0 %v1263
        %2163 = vmatprep.subr.mxu0 %v1260
        %2164 = vmatpush1.msra.mxu0 %v1259
        %2165 = vmatprep.subr.mxu0 %v1256
        %2166 = vmatpush1.msra.mxu0 %v1255
        %2167 = vmatprep.subr.mxu0 %v1252
        %2168 = vmatpush1.msra.mxu0 %v1251
        %2169 = vmatprep.subr.mxu0 %v1248
        %2170 = vmatpush1.msra.mxu0 %v1247
        %2171 = vmatprep.subr.mxu0 %v1244
        %2172 = vmatpush1.msra.mxu0 %v1243
        %2173 = vmatprep.subr.mxu0 %v1240
        %2174 = vmatpush1.msra.mxu0 %v1239
        %2175 = vmatprep.subr.mxu0 %v1236
        %2176 = vmatpush1.msra.mxu0 %v1235
        %2177 = vmatprep.subr.mxu0 %v1232
        %2178 = vmatpush1.msra.mxu0 %v1231
        %2179 = vmatprep.subr.mxu0 %v1228
        %2180 = vmatpush1.msra.mxu0 %v1227
        %2181 = vmatprep.subr.mxu0 %v1352
        %2182 = vmatpush2.msra.mxu0 %v1351
        %2183 = vmatprep.subr.mxu0 %v1348
        %2184 = vmatpush2.msra.mxu0 %v1347
        %2185 = vmatprep.subr.mxu0 %v1344
        %2186 = vmatpush2.msra.mxu0 %v1343
        %2187 = vmatprep.subr.mxu0 %v1340
        %2188 = vmatpush2.msra.mxu0 %v1339
        %2189 = vmatprep.subr.mxu0 %v1336
        %2190 = vmatpush2.msra.mxu0 %v1335
        %2191 = vmatprep.subr.mxu0 %v1332
        %2192 = vmatpush2.msra.mxu0 %v1331
        %2193 = vmatprep.subr.mxu0 %v1328
        %2194 = vmatpush2.msra.mxu0 %v1327
        %2195 = vmatprep.subr.mxu0 %v1324
        %2196 = vmatpush2.msra.mxu0 %v1323
        %2197 = vmatprep.subr.mxu0 %v1320
        %2198 = vmatpush2.msra.mxu0 %v1319
        %2199 = vmatprep.subr.mxu0 %v1316
        %2200 = vmatpush2.msra.mxu0 %v1315
        %2201 = vmatprep.subr.mxu0 %v1312
        %2202 = vmatpush2.msra.mxu0 %v1311
        %2203 = vmatprep.subr.mxu0 %v1308
        %2204 = vmatpush2.msra.mxu0 %v1307
        %2205 = vmatprep.subr.mxu0 %v1304
        %2206 = vmatpush2.msra.mxu0 %v1303
        %2207 = vmatprep.subr.mxu0 %v1300
        %2208 = vmatpush2.msra.mxu0 %v1299
        %2209 = vmatprep.subr.mxu0 %v1296
        %2210 = vmatpush2.msra.mxu0 %v1295
        %2211 = vmatprep.subr.mxu0 %v1292
        %2212 = vmatpush2.msra.mxu0 %v1291
        %2213 = vmatprep.mubr.f32.mxu0 %v1089
        %2214 = vmatmul.mubr.f32.gmra.mxu0 %v1087
        %v2215 = vpop.f32.mrf.mxu0
        %v2216 = vadd.f32 %v2139, %v2215
        %v2217 = vpop.f32.mrf.mxu0
        %v2218 = vadd.f32 %v2141, %v2217
        %2219 = vmatprep.mubr.f32.mxu0 %v1095
        %2220 = vmatmul.mubr.f32.gmra.mxu0 %v1093
        %v2221 = vpop.f32.mrf.mxu0
        %v2222 = vadd.f32 %v2145, %v2221
        %v2223 = vpop.f32.mrf.mxu0
        %v2224 = vadd.f32 %v2147, %v2223
        %2225 = vdwg.mxu0
        %s2226 = scalar_lea.vmem [#allocation8], 32
        %v2227 = vld [vmem:[%s2226] sm:$0xff]
        %v2228 = vld [vmem:[%s2226 + $0x8] sm:$0xff]
        %v2230 = vsel %vm936, %v2227, 0
        %v2233 = vsel %vm936, %v2228, 0
        %2235 = vmatprep.subr.mxu0 0.0
        %2236 = vmatpush1.msra.mxu0 0.0
        %2237 = vmatprep.subr.mxu0 0.0
        %2238 = vmatpush1.msra.mxu0 0.0
        %2239 = vmatprep.subr.mxu0 0.0
        %2240 = vmatpush1.msra.mxu0 0.0
        %2241 = vmatprep.subr.mxu0 0.0
        %2242 = vmatpush1.msra.mxu0 0.0
        %2243 = vmatprep.subr.mxu0 0.0
        %2244 = vmatpush1.msra.mxu0 0.0
        %2245 = vmatprep.subr.mxu0 0.0
        %2246 = vmatpush1.msra.mxu0 0.0
        %2247 = vmatprep.subr.mxu0 0.0
        %2248 = vmatpush1.msra.mxu0 0.0
        %2249 = vmatprep.subr.mxu0 0.0
        %2250 = vmatpush1.msra.mxu0 0.0
        %2251 = vmatprep.subr.mxu0 0.0
        %2252 = vmatpush1.msra.mxu0 0.0
        %2253 = vmatprep.subr.mxu0 0.0
        %2254 = vmatpush1.msra.mxu0 0.0
        %2255 = vmatprep.subr.mxu0 0.0
        %2256 = vmatpush1.msra.mxu0 0.0
        %2257 = vmatprep.subr.mxu0 0.0
        %2258 = vmatpush1.msra.mxu0 0.0
        %2259 = vmatprep.subr.mxu0 0.0
        %2260 = vmatpush1.msra.mxu0 0.0
        %2261 = vmatprep.subr.mxu0 0.0
        %2262 = vmatpush1.msra.mxu0 0.0
        %2263 = vmatprep.subr.mxu0 %v931
        %2264 = vmatpush1.msra.mxu0 %v930
        %2265 = vmatprep.subr.mxu0 %v927
        %2266 = vmatpush1.msra.mxu0 %v926
        %2267 = vmatprep.subr.mxu0 0.0
        %2268 = vmatpush2.msra.mxu0 0.0
        %2269 = vmatprep.subr.mxu0 0.0
        %2270 = vmatpush2.msra.mxu0 0.0
        %2271 = vmatprep.subr.mxu0 0.0
        %2272 = vmatpush2.msra.mxu0 0.0
        %2273 = vmatprep.subr.mxu0 0.0
        %2274 = vmatpush2.msra.mxu0 0.0
        %2275 = vmatprep.subr.mxu0 0.0
        %2276 = vmatpush2.msra.mxu0 0.0
        %2277 = vmatprep.subr.mxu0 0.0
        %2278 = vmatpush2.msra.mxu0 0.0
        %2279 = vmatprep.subr.mxu0 0.0
        %2280 = vmatpush2.msra.mxu0 0.0
        %2281 = vmatprep.subr.mxu0 0.0
        %2282 = vmatpush2.msra.mxu0 0.0
        %2283 = vmatprep.subr.mxu0 0.0
        %2284 = vmatpush2.msra.mxu0 0.0
        %2285 = vmatprep.subr.mxu0 0.0
        %2286 = vmatpush2.msra.mxu0 0.0
        %2287 = vmatprep.subr.mxu0 0.0
        %2288 = vmatpush2.msra.mxu0 0.0
        %2289 = vmatprep.subr.mxu0 0.0
        %2290 = vmatpush2.msra.mxu0 0.0
        %2291 = vmatprep.subr.mxu0 0.0
        %2292 = vmatpush2.msra.mxu0 0.0
        %2293 = vmatprep.subr.mxu0 0.0
        %2294 = vmatpush2.msra.mxu0 0.0
        %2295 = vmatprep.subr.mxu0 0.0
        %2296 = vmatpush2.msra.mxu0 0.0
        %2297 = vmatprep.subr.mxu0 0.0
        %2298 = vmatpush2.msra.mxu0 0.0
        %2299 = vmatprep.mubr.f32.mxu0 0.0
        %2300 = vmatmul.mubr.f32.gmra.mxu0 %v2230
        %v2301 = vpop.f32.mrf.mxu0
        %v2302 = vadd.f32 0.0, %v2301
        %v2303 = vpop.f32.mrf.mxu0
        %v2304 = vadd.f32 0.0, %v2303
        %2305 = vmatprep.mubr.f32.mxu0 0.0
        %2306 = vmatmul.mubr.f32.gmra.mxu0 %v2233
        %v2307 = vpop.f32.mrf.mxu0
        %v2308 = vadd.f32 0.0, %v2307
        %v2309 = vpop.f32.mrf.mxu0
        %v2310 = vadd.f32 0.0, %v2309
        %2311 = vdwg.mxu0
        %2312 = vmatprep.subr.mxu0 0.0
        %2313 = vmatpush1.msra.mxu0 0.0
        %2314 = vmatprep.subr.mxu0 0.0
        %2315 = vmatpush1.msra.mxu0 0.0
        %2316 = vmatprep.subr.mxu0 0.0
        %2317 = vmatpush1.msra.mxu0 0.0
        %2318 = vmatprep.subr.mxu0 0.0
        %2319 = vmatpush1.msra.mxu0 0.0
        %2320 = vmatprep.subr.mxu0 0.0
        %2321 = vmatpush1.msra.mxu0 0.0
        %2322 = vmatprep.subr.mxu0 0.0
        %2323 = vmatpush1.msra.mxu0 0.0
        %2324 = vmatprep.subr.mxu0 0.0
        %2325 = vmatpush1.msra.mxu0 0.0
        %2326 = vmatprep.subr.mxu0 0.0
        %2327 = vmatpush1.msra.mxu0 0.0
        %2328 = vmatprep.subr.mxu0 0.0
        %2329 = vmatpush1.msra.mxu0 0.0
        %2330 = vmatprep.subr.mxu0 0.0
        %2331 = vmatpush1.msra.mxu0 0.0
        %2332 = vmatprep.subr.mxu0 0.0
        %2333 = vmatpush1.msra.mxu0 0.0
        %2334 = vmatprep.subr.mxu0 0.0
        %2335 = vmatpush1.msra.mxu0 0.0
        %2336 = vmatprep.subr.mxu0 0.0
        %2337 = vmatpush1.msra.mxu0 0.0
        %2338 = vmatprep.subr.mxu0 0.0
        %2339 = vmatpush1.msra.mxu0 0.0
        %2340 = vmatprep.subr.mxu0 %v933
        %2341 = vmatpush1.msra.mxu0 %v932
        %2342 = vmatprep.subr.mxu0 %v929
        %2343 = vmatpush1.msra.mxu0 %v928
        %2344 = vmatprep.subr.mxu0 0.0
        %2345 = vmatpush2.msra.mxu0 0.0
        %2346 = vmatprep.subr.mxu0 0.0
        %2347 = vmatpush2.msra.mxu0 0.0
        %2348 = vmatprep.subr.mxu0 0.0
        %2349 = vmatpush2.msra.mxu0 0.0
        %2350 = vmatprep.subr.mxu0 0.0
        %2351 = vmatpush2.msra.mxu0 0.0
        %2352 = vmatprep.subr.mxu0 0.0
        %2353 = vmatpush2.msra.mxu0 0.0
        %2354 = vmatprep.subr.mxu0 0.0
        %2355 = vmatpush2.msra.mxu0 0.0
        %2356 = vmatprep.subr.mxu0 0.0
        %2357 = vmatpush2.msra.mxu0 0.0
        %2358 = vmatprep.subr.mxu0 0.0
        %2359 = vmatpush2.msra.mxu0 0.0
        %2360 = vmatprep.subr.mxu0 0.0
        %2361 = vmatpush2.msra.mxu0 0.0
        %2362 = vmatprep.subr.mxu0 0.0
        %2363 = vmatpush2.msra.mxu0 0.0
        %2364 = vmatprep.subr.mxu0 0.0
        %2365 = vmatpush2.msra.mxu0 0.0
        %2366 = vmatprep.subr.mxu0 0.0
        %2367 = vmatpush2.msra.mxu0 0.0
        %2368 = vmatprep.subr.mxu0 0.0
        %2369 = vmatpush2.msra.mxu0 0.0
        %2370 = vmatprep.subr.mxu0 0.0
        %2371 = vmatpush2.msra.mxu0 0.0
        %2372 = vmatprep.subr.mxu0 0.0
        %2373 = vmatpush2.msra.mxu0 0.0
        %2374 = vmatprep.subr.mxu0 0.0
        %2375 = vmatpush2.msra.mxu0 0.0
        %2376 = vmatprep.mubr.f32.mxu0 0.0
        %2377 = vmatmul.mubr.f32.gmra.mxu0 %v2230
        %v2378 = vpop.f32.mrf.mxu0
        %v2379 = vadd.f32 0.0, %v2378
        %v2380 = vpop.f32.mrf.mxu0
        %v2381 = vadd.f32 0.0, %v2380
        %2382 = vmatprep.mubr.f32.mxu0 0.0
        %2383 = vmatmul.mubr.f32.gmra.mxu0 %v2233
        %v2384 = vpop.f32.mrf.mxu0
        %v2385 = vadd.f32 0.0, %v2384
        %v2386 = vpop.f32.mrf.mxu0
        %v2387 = vadd.f32 0.0, %v2386
        %2388 = vdwg.mxu0
        %s2389 = scalar_lea.vmem [#allocation10], 4096
        %v2390 = vld [vmem:[%s2389] sm:$0xff]
        %v2391 = vld [vmem:[%s2389 + $0x8] sm:$0xff]
        %v2392 = vld [vmem:[%s2389 + $0x10] sm:$0xff]
        %v2393 = vld [vmem:[%s2389 + $0x18] sm:$0xff]
        %v2394 = vld [vmem:[%s2389 + $0x20] sm:$0xff]
        %v2395 = vld [vmem:[%s2389 + $0x28] sm:$0xff]
        %v2396 = vld [vmem:[%s2389 + $0x30] sm:$0xff]
        %v2397 = vld [vmem:[%s2389 + $0x38] sm:$0xff]
        %v2398 = vld [vmem:[%s2389 + $0x40] sm:$0xff]
        %v2399 = vld [vmem:[%s2389 + $0x48] sm:$0xff]
        %v2400 = vld [vmem:[%s2389 + $0x50] sm:$0xff]
        %v2401 = vld [vmem:[%s2389 + $0x58] sm:$0xff]
        %v2402 = vld [vmem:[%s2389 + $0x60] sm:$0xff]
        %v2403 = vld [vmem:[%s2389 + $0x68] sm:$0xff]
        %v2404 = vld [vmem:[%s2389 + $0x70] sm:$0xff]
        %v2405 = vld [vmem:[%s2389 + $0x78] sm:$0xff]
        %v2406 = vld [vmem:[%s2389 + $0x80] sm:$0xff]
        %v2407 = vld [vmem:[%s2389 + $0x88] sm:$0xff]
        %v2408 = vld [vmem:[%s2389 + $0x90] sm:$0xff]
        %v2409 = vld [vmem:[%s2389 + $0x98] sm:$0xff]
        %v2410 = vld [vmem:[%s2389 + $0xa0] sm:$0xff]
        %v2411 = vld [vmem:[%s2389 + $0xa8] sm:$0xff]
        %v2412 = vld [vmem:[%s2389 + $0xb0] sm:$0xff]
        %v2413 = vld [vmem:[%s2389 + $0xb8] sm:$0xff]
        %v2414 = vld [vmem:[%s2389 + $0xc0] sm:$0xff]
        %v2415 = vld [vmem:[%s2389 + $0xc8] sm:$0xff]
        %v2416 = vld [vmem:[%s2389 + $0xd0] sm:$0xff]
        %v2417 = vld [vmem:[%s2389 + $0xd8] sm:$0xff]
        %v2418 = vld [vmem:[%s2389 + $0xe0] sm:$0xff]
        %v2419 = vld [vmem:[%s2389 + $0xe8] sm:$0xff]
        %v2420 = vld [vmem:[%s2389 + $0xf0] sm:$0xff]
        %v2421 = vld [vmem:[%s2389 + $0xf8] sm:$0xff]
        %v2422 = vld [vmem:[%s2389 + $0x100] sm:$0xff]
        %v2423 = vld [vmem:[%s2389 + $0x108] sm:$0xff]
        %v2424 = vld [vmem:[%s2389 + $0x110] sm:$0xff]
        %v2425 = vld [vmem:[%s2389 + $0x118] sm:$0xff]
        %v2426 = vld [vmem:[%s2389 + $0x120] sm:$0xff]
        %v2427 = vld [vmem:[%s2389 + $0x128] sm:$0xff]
        %v2428 = vld [vmem:[%s2389 + $0x130] sm:$0xff]
        %v2429 = vld [vmem:[%s2389 + $0x138] sm:$0xff]
        %v2430 = vld [vmem:[%s2389 + $0x140] sm:$0xff]
        %v2431 = vld [vmem:[%s2389 + $0x148] sm:$0xff]
        %v2432 = vld [vmem:[%s2389 + $0x150] sm:$0xff]
        %v2433 = vld [vmem:[%s2389 + $0x158] sm:$0xff]
        %v2434 = vld [vmem:[%s2389 + $0x160] sm:$0xff]
        %v2435 = vld [vmem:[%s2389 + $0x168] sm:$0xff]
        %v2436 = vld [vmem:[%s2389 + $0x170] sm:$0xff]
        %v2437 = vld [vmem:[%s2389 + $0x178] sm:$0xff]
        %v2438 = vld [vmem:[%s2389 + $0x180] sm:$0xff]
        %v2439 = vld [vmem:[%s2389 + $0x188] sm:$0xff]
        %v2440 = vld [vmem:[%s2389 + $0x190] sm:$0xff]
        %v2441 = vld [vmem:[%s2389 + $0x198] sm:$0xff]
        %v2442 = vld [vmem:[%s2389 + $0x1a0] sm:$0xff]
        %v2443 = vld [vmem:[%s2389 + $0x1a8] sm:$0xff]
        %v2444 = vld [vmem:[%s2389 + $0x1b0] sm:$0xff]
        %v2445 = vld [vmem:[%s2389 + $0x1b8] sm:$0xff]
        %v2446 = vld [vmem:[%s2389 + $0x1c0] sm:$0xff]
        %v2447 = vld [vmem:[%s2389 + $0x1c8] sm:$0xff]
        %v2448 = vld [vmem:[%s2389 + $0x1d0] sm:$0xff]
        %v2449 = vld [vmem:[%s2389 + $0x1d8] sm:$0xff]
        %v2450 = vld [vmem:[%s2389 + $0x1e0] sm:$0xff]
        %v2451 = vld [vmem:[%s2389 + $0x1e8] sm:$0xff]
        %v2452 = vld [vmem:[%s2389 + $0x1f0] sm:$0xff]
        %v2453 = vld [vmem:[%s2389 + $0x1f8] sm:$0xff]
        %v2454 = vld [vmem:[%s2389 + $0x200] sm:$0xff]
        %v2455 = vld [vmem:[%s2389 + $0x208] sm:$0xff]
        %v2456 = vld [vmem:[%s2389 + $0x210] sm:$0xff]
        %v2457 = vld [vmem:[%s2389 + $0x218] sm:$0xff]
        %v2458 = vld [vmem:[%s2389 + $0x220] sm:$0xff]
        %v2459 = vld [vmem:[%s2389 + $0x228] sm:$0xff]
        %v2460 = vld [vmem:[%s2389 + $0x230] sm:$0xff]
        %v2461 = vld [vmem:[%s2389 + $0x238] sm:$0xff]
        %v2462 = vld [vmem:[%s2389 + $0x240] sm:$0xff]
        %v2463 = vld [vmem:[%s2389 + $0x248] sm:$0xff]
        %v2464 = vld [vmem:[%s2389 + $0x250] sm:$0xff]
        %v2465 = vld [vmem:[%s2389 + $0x258] sm:$0xff]
        %v2466 = vld [vmem:[%s2389 + $0x260] sm:$0xff]
        %v2467 = vld [vmem:[%s2389 + $0x268] sm:$0xff]
        %v2468 = vld [vmem:[%s2389 + $0x270] sm:$0xff]
        %v2469 = vld [vmem:[%s2389 + $0x278] sm:$0xff]
        %v2470 = vld [vmem:[%s2389 + $0x280] sm:$0xff]
        %v2471 = vld [vmem:[%s2389 + $0x288] sm:$0xff]
        %v2472 = vld [vmem:[%s2389 + $0x290] sm:$0xff]
        %v2473 = vld [vmem:[%s2389 + $0x298] sm:$0xff]
        %v2474 = vld [vmem:[%s2389 + $0x2a0] sm:$0xff]
        %v2475 = vld [vmem:[%s2389 + $0x2a8] sm:$0xff]
        %v2476 = vld [vmem:[%s2389 + $0x2b0] sm:$0xff]
        %v2477 = vld [vmem:[%s2389 + $0x2b8] sm:$0xff]
        %v2478 = vld [vmem:[%s2389 + $0x2c0] sm:$0xff]
        %v2479 = vld [vmem:[%s2389 + $0x2c8] sm:$0xff]
        %v2480 = vld [vmem:[%s2389 + $0x2d0] sm:$0xff]
        %v2481 = vld [vmem:[%s2389 + $0x2d8] sm:$0xff]
        %v2482 = vld [vmem:[%s2389 + $0x2e0] sm:$0xff]
        %v2483 = vld [vmem:[%s2389 + $0x2e8] sm:$0xff]
        %v2484 = vld [vmem:[%s2389 + $0x2f0] sm:$0xff]
        %v2485 = vld [vmem:[%s2389 + $0x2f8] sm:$0xff]
        %v2486 = vld [vmem:[%s2389 + $0x300] sm:$0xff]
        %v2487 = vld [vmem:[%s2389 + $0x308] sm:$0xff]
        %v2488 = vld [vmem:[%s2389 + $0x310] sm:$0xff]
        %v2489 = vld [vmem:[%s2389 + $0x318] sm:$0xff]
        %v2490 = vld [vmem:[%s2389 + $0x320] sm:$0xff]
        %v2491 = vld [vmem:[%s2389 + $0x328] sm:$0xff]
        %v2492 = vld [vmem:[%s2389 + $0x330] sm:$0xff]
        %v2493 = vld [vmem:[%s2389 + $0x338] sm:$0xff]
        %v2494 = vld [vmem:[%s2389 + $0x340] sm:$0xff]
        %v2495 = vld [vmem:[%s2389 + $0x348] sm:$0xff]
        %v2496 = vld [vmem:[%s2389 + $0x350] sm:$0xff]
        %v2497 = vld [vmem:[%s2389 + $0x358] sm:$0xff]
        %v2498 = vld [vmem:[%s2389 + $0x360] sm:$0xff]
        %v2499 = vld [vmem:[%s2389 + $0x368] sm:$0xff]
        %v2500 = vld [vmem:[%s2389 + $0x370] sm:$0xff]
        %v2501 = vld [vmem:[%s2389 + $0x378] sm:$0xff]
        %v2502 = vld [vmem:[%s2389 + $0x380] sm:$0xff]
        %v2503 = vld [vmem:[%s2389 + $0x388] sm:$0xff]
        %v2504 = vld [vmem:[%s2389 + $0x390] sm:$0xff]
        %v2505 = vld [vmem:[%s2389 + $0x398] sm:$0xff]
        %v2506 = vld [vmem:[%s2389 + $0x3a0] sm:$0xff]
        %v2507 = vld [vmem:[%s2389 + $0x3a8] sm:$0xff]
        %v2508 = vld [vmem:[%s2389 + $0x3b0] sm:$0xff]
        %v2509 = vld [vmem:[%s2389 + $0x3b8] sm:$0xff]
        %v2510 = vld [vmem:[%s2389 + $0x3c0] sm:$0xff]
        %v2511 = vld [vmem:[%s2389 + $0x3c8] sm:$0xff]
        %v2512 = vld [vmem:[%s2389 + $0x3d0] sm:$0xff]
        %v2513 = vld [vmem:[%s2389 + $0x3d8] sm:$0xff]
        %v2514 = vld [vmem:[%s2389 + $0x3e0] sm:$0xff]
        %v2515 = vld [vmem:[%s2389 + $0x3e8] sm:$0xff]
        %v2516 = vld [vmem:[%s2389 + $0x3f0] sm:$0xff]
        %v2517 = vld [vmem:[%s2389 + $0x3f8] sm:$0xff]
        %v2518 = vld [vmem:[%s2389 + $0x400] sm:$0xff]
        %v2519 = vld [vmem:[%s2389 + $0x408] sm:$0xff]
        %v2520 = vld [vmem:[%s2389 + $0x410] sm:$0xff]
        %v2521 = vld [vmem:[%s2389 + $0x418] sm:$0xff]
        %v2522 = vld [vmem:[%s2389 + $0x420] sm:$0xff]
        %v2523 = vld [vmem:[%s2389 + $0x428] sm:$0xff]
        %v2524 = vld [vmem:[%s2389 + $0x430] sm:$0xff]
        %v2525 = vld [vmem:[%s2389 + $0x438] sm:$0xff]
        %v2526 = vld [vmem:[%s2389 + $0x440] sm:$0xff]
        %v2527 = vld [vmem:[%s2389 + $0x448] sm:$0xff]
        %v2528 = vld [vmem:[%s2389 + $0x450] sm:$0xff]
        %v2529 = vld [vmem:[%s2389 + $0x458] sm:$0xff]
        %v2530 = vld [vmem:[%s2389 + $0x460] sm:$0xff]
        %v2531 = vld [vmem:[%s2389 + $0x468] sm:$0xff]
        %v2532 = vld [vmem:[%s2389 + $0x470] sm:$0xff]
        %v2533 = vld [vmem:[%s2389 + $0x478] sm:$0xff]
        %v2534 = vld [vmem:[%s2389 + $0x480] sm:$0xff]
        %v2535 = vld [vmem:[%s2389 + $0x488] sm:$0xff]
        %v2536 = vld [vmem:[%s2389 + $0x490] sm:$0xff]
        %v2537 = vld [vmem:[%s2389 + $0x498] sm:$0xff]
        %v2538 = vld [vmem:[%s2389 + $0x4a0] sm:$0xff]
        %v2539 = vld [vmem:[%s2389 + $0x4a8] sm:$0xff]
        %v2540 = vld [vmem:[%s2389 + $0x4b0] sm:$0xff]
        %v2541 = vld [vmem:[%s2389 + $0x4b8] sm:$0xff]
        %v2542 = vld [vmem:[%s2389 + $0x4c0] sm:$0xff]
        %v2543 = vld [vmem:[%s2389 + $0x4c8] sm:$0xff]
        %v2544 = vld [vmem:[%s2389 + $0x4d0] sm:$0xff]
        %v2545 = vld [vmem:[%s2389 + $0x4d8] sm:$0xff]
        %v2546 = vld [vmem:[%s2389 + $0x4e0] sm:$0xff]
        %v2547 = vld [vmem:[%s2389 + $0x4e8] sm:$0xff]
        %v2548 = vld [vmem:[%s2389 + $0x4f0] sm:$0xff]
        %v2549 = vld [vmem:[%s2389 + $0x4f8] sm:$0xff]
        %v2550 = vld [vmem:[%s2389 + $0x500] sm:$0xff]
        %v2551 = vld [vmem:[%s2389 + $0x508] sm:$0xff]
        %v2552 = vld [vmem:[%s2389 + $0x510] sm:$0xff]
        %v2553 = vld [vmem:[%s2389 + $0x518] sm:$0xff]
        %v2554 = vld [vmem:[%s2389 + $0x520] sm:$0xff]
        %v2555 = vld [vmem:[%s2389 + $0x528] sm:$0xff]
        %v2556 = vld [vmem:[%s2389 + $0x530] sm:$0xff]
        %v2557 = vld [vmem:[%s2389 + $0x538] sm:$0xff]
        %v2558 = vld [vmem:[%s2389 + $0x540] sm:$0xff]
        %v2559 = vld [vmem:[%s2389 + $0x548] sm:$0xff]
        %v2560 = vld [vmem:[%s2389 + $0x550] sm:$0xff]
        %v2561 = vld [vmem:[%s2389 + $0x558] sm:$0xff]
        %v2562 = vld [vmem:[%s2389 + $0x560] sm:$0xff]
        %v2563 = vld [vmem:[%s2389 + $0x568] sm:$0xff]
        %v2564 = vld [vmem:[%s2389 + $0x570] sm:$0xff]
        %v2565 = vld [vmem:[%s2389 + $0x578] sm:$0xff]
        %v2566 = vld [vmem:[%s2389 + $0x580] sm:$0xff]
        %v2567 = vld [vmem:[%s2389 + $0x588] sm:$0xff]
        %v2568 = vld [vmem:[%s2389 + $0x590] sm:$0xff]
        %v2569 = vld [vmem:[%s2389 + $0x598] sm:$0xff]
        %v2570 = vld [vmem:[%s2389 + $0x5a0] sm:$0xff]
        %v2571 = vld [vmem:[%s2389 + $0x5a8] sm:$0xff]
        %v2572 = vld [vmem:[%s2389 + $0x5b0] sm:$0xff]
        %v2573 = vld [vmem:[%s2389 + $0x5b8] sm:$0xff]
        %v2574 = vld [vmem:[%s2389 + $0x5c0] sm:$0xff]
        %v2575 = vld [vmem:[%s2389 + $0x5c8] sm:$0xff]
        %v2576 = vld [vmem:[%s2389 + $0x5d0] sm:$0xff]
        %v2577 = vld [vmem:[%s2389 + $0x5d8] sm:$0xff]
        %v2578 = vld [vmem:[%s2389 + $0x5e0] sm:$0xff]
        %v2579 = vld [vmem:[%s2389 + $0x5e8] sm:$0xff]
        %v2580 = vld [vmem:[%s2389 + $0x5f0] sm:$0xff]
        %v2581 = vld [vmem:[%s2389 + $0x5f8] sm:$0xff]
        %v2582 = vld [vmem:[%s2389 + $0x600] sm:$0xff]
        %v2583 = vld [vmem:[%s2389 + $0x608] sm:$0xff]
        %v2584 = vld [vmem:[%s2389 + $0x610] sm:$0xff]
        %v2585 = vld [vmem:[%s2389 + $0x618] sm:$0xff]
        %v2586 = vld [vmem:[%s2389 + $0x620] sm:$0xff]
        %v2587 = vld [vmem:[%s2389 + $0x628] sm:$0xff]
        %v2588 = vld [vmem:[%s2389 + $0x630] sm:$0xff]
        %v2589 = vld [vmem:[%s2389 + $0x638] sm:$0xff]
        %v2590 = vld [vmem:[%s2389 + $0x640] sm:$0xff]
        %v2591 = vld [vmem:[%s2389 + $0x648] sm:$0xff]
        %v2592 = vld [vmem:[%s2389 + $0x650] sm:$0xff]
        %v2593 = vld [vmem:[%s2389 + $0x658] sm:$0xff]
        %v2594 = vld [vmem:[%s2389 + $0x660] sm:$0xff]
        %v2595 = vld [vmem:[%s2389 + $0x668] sm:$0xff]
        %v2596 = vld [vmem:[%s2389 + $0x670] sm:$0xff]
        %v2597 = vld [vmem:[%s2389 + $0x678] sm:$0xff]
        %v2598 = vld [vmem:[%s2389 + $0x680] sm:$0xff]
        %v2599 = vld [vmem:[%s2389 + $0x688] sm:$0xff]
        %v2600 = vld [vmem:[%s2389 + $0x690] sm:$0xff]
        %v2601 = vld [vmem:[%s2389 + $0x698] sm:$0xff]
        %v2602 = vld [vmem:[%s2389 + $0x6a0] sm:$0xff]
        %v2603 = vld [vmem:[%s2389 + $0x6a8] sm:$0xff]
        %v2604 = vld [vmem:[%s2389 + $0x6b0] sm:$0xff]
        %v2605 = vld [vmem:[%s2389 + $0x6b8] sm:$0xff]
        %v2606 = vld [vmem:[%s2389 + $0x6c0] sm:$0xff]
        %v2607 = vld [vmem:[%s2389 + $0x6c8] sm:$0xff]
        %v2608 = vld [vmem:[%s2389 + $0x6d0] sm:$0xff]
        %v2609 = vld [vmem:[%s2389 + $0x6d8] sm:$0xff]
        %v2610 = vld [vmem:[%s2389 + $0x6e0] sm:$0xff]
        %v2611 = vld [vmem:[%s2389 + $0x6e8] sm:$0xff]
        %v2612 = vld [vmem:[%s2389 + $0x6f0] sm:$0xff]
        %v2613 = vld [vmem:[%s2389 + $0x6f8] sm:$0xff]
        %v2614 = vld [vmem:[%s2389 + $0x700] sm:$0xff]
        %v2615 = vld [vmem:[%s2389 + $0x708] sm:$0xff]
        %v2616 = vld [vmem:[%s2389 + $0x710] sm:$0xff]
        %v2617 = vld [vmem:[%s2389 + $0x718] sm:$0xff]
        %v2618 = vld [vmem:[%s2389 + $0x720] sm:$0xff]
        %v2619 = vld [vmem:[%s2389 + $0x728] sm:$0xff]
        %v2620 = vld [vmem:[%s2389 + $0x730] sm:$0xff]
        %v2621 = vld [vmem:[%s2389 + $0x738] sm:$0xff]
        %v2622 = vld [vmem:[%s2389 + $0x740] sm:$0xff]
        %v2623 = vld [vmem:[%s2389 + $0x748] sm:$0xff]
        %v2624 = vld [vmem:[%s2389 + $0x750] sm:$0xff]
        %v2625 = vld [vmem:[%s2389 + $0x758] sm:$0xff]
        %v2626 = vld [vmem:[%s2389 + $0x760] sm:$0xff]
        %v2627 = vld [vmem:[%s2389 + $0x768] sm:$0xff]
        %v2628 = vld [vmem:[%s2389 + $0x770] sm:$0xff]
        %v2629 = vld [vmem:[%s2389 + $0x778] sm:$0xff]
        %v2630 = vld [vmem:[%s2389 + $0x780] sm:$0xff]
        %v2631 = vld [vmem:[%s2389 + $0x788] sm:$0xff]
        %v2632 = vld [vmem:[%s2389 + $0x790] sm:$0xff]
        %v2633 = vld [vmem:[%s2389 + $0x798] sm:$0xff]
        %v2634 = vld [vmem:[%s2389 + $0x7a0] sm:$0xff]
        %v2635 = vld [vmem:[%s2389 + $0x7a8] sm:$0xff]
        %v2636 = vld [vmem:[%s2389 + $0x7b0] sm:$0xff]
        %v2637 = vld [vmem:[%s2389 + $0x7b8] sm:$0xff]
        %v2638 = vld [vmem:[%s2389 + $0x7c0] sm:$0xff]
        %v2639 = vld [vmem:[%s2389 + $0x7c8] sm:$0xff]
        %v2640 = vld [vmem:[%s2389 + $0x7d0] sm:$0xff]
        %v2641 = vld [vmem:[%s2389 + $0x7d8] sm:$0xff]
        %v2642 = vld [vmem:[%s2389 + $0x7e0] sm:$0xff]
        %v2643 = vld [vmem:[%s2389 + $0x7e8] sm:$0xff]
        %v2644 = vld [vmem:[%s2389 + $0x7f0] sm:$0xff]
        %v2645 = vld [vmem:[%s2389 + $0x7f8] sm:$0xff]
        %2646 = vmatprep.subr.mxu0 %v2451
        %2647 = vmatpush1.msra.mxu0 %v2450
        %2648 = vmatprep.subr.mxu0 %v2447
        %2649 = vmatpush1.msra.mxu0 %v2446
        %2650 = vmatprep.subr.mxu0 %v2443
        %2651 = vmatpush1.msra.mxu0 %v2442
        %2652 = vmatprep.subr.mxu0 %v2439
        %2653 = vmatpush1.msra.mxu0 %v2438
        %2654 = vmatprep.subr.mxu0 %v2435
        %2655 = vmatpush1.msra.mxu0 %v2434
        %2656 = vmatprep.subr.mxu0 %v2431
        %2657 = vmatpush1.msra.mxu0 %v2430
        %2658 = vmatprep.subr.mxu0 %v2427
        %2659 = vmatpush1.msra.mxu0 %v2426
        %2660 = vmatprep.subr.mxu0 %v2423
        %2661 = vmatpush1.msra.mxu0 %v2422
        %2662 = vmatprep.subr.mxu0 %v2419
        %2663 = vmatpush1.msra.mxu0 %v2418
        %2664 = vmatprep.subr.mxu0 %v2415
        %2665 = vmatpush1.msra.mxu0 %v2414
        %2666 = vmatprep.subr.mxu0 %v2411
        %2667 = vmatpush1.msra.mxu0 %v2410
        %2668 = vmatprep.subr.mxu0 %v2407
        %2669 = vmatpush1.msra.mxu0 %v2406
        %2670 = vmatprep.subr.mxu0 %v2403
        %2671 = vmatpush1.msra.mxu0 %v2402
        %2672 = vmatprep.subr.mxu0 %v2399
        %2673 = vmatpush1.msra.mxu0 %v2398
        %2674 = vmatprep.subr.mxu0 %v2395
        %2675 = vmatpush1.msra.mxu0 %v2394
        %2676 = vmatprep.subr.mxu0 %v2391
        %2677 = vmatpush1.msra.mxu0 %v2390
        %2678 = vmatprep.subr.mxu0 %v2515
        %2679 = vmatpush2.msra.mxu0 %v2514
        %2680 = vmatprep.subr.mxu0 %v2511
        %2681 = vmatpush2.msra.mxu0 %v2510
        %2682 = vmatprep.subr.mxu0 %v2507
        %2683 = vmatpush2.msra.mxu0 %v2506
        %2684 = vmatprep.subr.mxu0 %v2503
        %2685 = vmatpush2.msra.mxu0 %v2502
        %2686 = vmatprep.subr.mxu0 %v2499
        %2687 = vmatpush2.msra.mxu0 %v2498
        %2688 = vmatprep.subr.mxu0 %v2495
        %2689 = vmatpush2.msra.mxu0 %v2494
        %2690 = vmatprep.subr.mxu0 %v2491
        %2691 = vmatpush2.msra.mxu0 %v2490
        %2692 = vmatprep.subr.mxu0 %v2487
        %2693 = vmatpush2.msra.mxu0 %v2486
        %2694 = vmatprep.subr.mxu0 %v2483
        %2695 = vmatpush2.msra.mxu0 %v2482
        %2696 = vmatprep.subr.mxu0 %v2479
        %2697 = vmatpush2.msra.mxu0 %v2478
        %2698 = vmatprep.subr.mxu0 %v2475
        %2699 = vmatpush2.msra.mxu0 %v2474
        %2700 = vmatprep.subr.mxu0 %v2471
        %2701 = vmatpush2.msra.mxu0 %v2470
        %2702 = vmatprep.subr.mxu0 %v2467
        %2703 = vmatpush2.msra.mxu0 %v2466
        %2704 = vmatprep.subr.mxu0 %v2463
        %2705 = vmatpush2.msra.mxu0 %v2462
        %2706 = vmatprep.subr.mxu0 %v2459
        %2707 = vmatpush2.msra.mxu0 %v2458
        %2708 = vmatprep.subr.mxu0 %v2455
        %2709 = vmatpush2.msra.mxu0 %v2454
        %2710 = vmatprep.mubr.f32.mxu0 %v2304
        %2711 = vmatmul.mubr.f32.gmra.mxu0 %v2302
        %v2712 = vpop.f32.mrf.mxu0
        %v2713 = vadd.f32 0.0, %v2712
        %v2714 = vpop.f32.mrf.mxu0
        %v2715 = vadd.f32 0.0, %v2714
        %2716 = vmatprep.mubr.f32.mxu0 %v2310
        %2717 = vmatmul.mubr.f32.gmra.mxu0 %v2308
        %v2718 = vpop.f32.mrf.mxu0
        %v2719 = vadd.f32 0.0, %v2718
        %v2720 = vpop.f32.mrf.mxu0
        %v2721 = vadd.f32 0.0, %v2720
        %2722 = vdwg.mxu0
        %2723 = vmatprep.subr.mxu0 %v2579
        %2724 = vmatpush1.msra.mxu0 %v2578
        %2725 = vmatprep.subr.mxu0 %v2575
        %2726 = vmatpush1.msra.mxu0 %v2574
        %2727 = vmatprep.subr.mxu0 %v2571
        %2728 = vmatpush1.msra.mxu0 %v2570
        %2729 = vmatprep.subr.mxu0 %v2567
        %2730 = vmatpush1.msra.mxu0 %v2566
        %2731 = vmatprep.subr.mxu0 %v2563
        %2732 = vmatpush1.msra.mxu0 %v2562
        %2733 = vmatprep.subr.mxu0 %v2559
        %2734 = vmatpush1.msra.mxu0 %v2558
        %2735 = vmatprep.subr.mxu0 %v2555
        %2736 = vmatpush1.msra.mxu0 %v2554
        %2737 = vmatprep.subr.mxu0 %v2551
        %2738 = vmatpush1.msra.mxu0 %v2550
        %2739 = vmatprep.subr.mxu0 %v2547
        %2740 = vmatpush1.msra.mxu0 %v2546
        %2741 = vmatprep.subr.mxu0 %v2543
        %2742 = vmatpush1.msra.mxu0 %v2542
        %2743 = vmatprep.subr.mxu0 %v2539
        %2744 = vmatpush1.msra.mxu0 %v2538
        %2745 = vmatprep.subr.mxu0 %v2535
        %2746 = vmatpush1.msra.mxu0 %v2534
        %2747 = vmatprep.subr.mxu0 %v2531
        %2748 = vmatpush1.msra.mxu0 %v2530
        %2749 = vmatprep.subr.mxu0 %v2527
        %2750 = vmatpush1.msra.mxu0 %v2526
        %2751 = vmatprep.subr.mxu0 %v2523
        %2752 = vmatpush1.msra.mxu0 %v2522
        %2753 = vmatprep.subr.mxu0 %v2519
        %2754 = vmatpush1.msra.mxu0 %v2518
        %2755 = vmatprep.subr.mxu0 %v2643
        %2756 = vmatpush2.msra.mxu0 %v2642
        %2757 = vmatprep.subr.mxu0 %v2639
        %2758 = vmatpush2.msra.mxu0 %v2638
        %2759 = vmatprep.subr.mxu0 %v2635
        %2760 = vmatpush2.msra.mxu0 %v2634
        %2761 = vmatprep.subr.mxu0 %v2631
        %2762 = vmatpush2.msra.mxu0 %v2630
        %2763 = vmatprep.subr.mxu0 %v2627
        %2764 = vmatpush2.msra.mxu0 %v2626
        %2765 = vmatprep.subr.mxu0 %v2623
        %2766 = vmatpush2.msra.mxu0 %v2622
        %2767 = vmatprep.subr.mxu0 %v2619
        %2768 = vmatpush2.msra.mxu0 %v2618
        %2769 = vmatprep.subr.mxu0 %v2615
        %2770 = vmatpush2.msra.mxu0 %v2614
        %2771 = vmatprep.subr.mxu0 %v2611
        %2772 = vmatpush2.msra.mxu0 %v2610
        %2773 = vmatprep.subr.mxu0 %v2607
        %2774 = vmatpush2.msra.mxu0 %v2606
        %2775 = vmatprep.subr.mxu0 %v2603
        %2776 = vmatpush2.msra.mxu0 %v2602
        %2777 = vmatprep.subr.mxu0 %v2599
        %2778 = vmatpush2.msra.mxu0 %v2598
        %2779 = vmatprep.subr.mxu0 %v2595
        %2780 = vmatpush2.msra.mxu0 %v2594
        %2781 = vmatprep.subr.mxu0 %v2591
        %2782 = vmatpush2.msra.mxu0 %v2590
        %2783 = vmatprep.subr.mxu0 %v2587
        %2784 = vmatpush2.msra.mxu0 %v2586
        %2785 = vmatprep.subr.mxu0 %v2583
        %2786 = vmatpush2.msra.mxu0 %v2582
        %2787 = vmatprep.mubr.f32.mxu0 %v2381
        %2788 = vmatmul.mubr.f32.gmra.mxu0 %v2379
        %v2789 = vpop.f32.mrf.mxu0
        %v2790 = vadd.f32 %v2713, %v2789
        %v2791 = vpop.f32.mrf.mxu0
        %v2792 = vadd.f32 %v2715, %v2791
        %2793 = vmatprep.mubr.f32.mxu0 %v2387
        %2794 = vmatmul.mubr.f32.gmra.mxu0 %v2385
        %v2795 = vpop.f32.mrf.mxu0
        %v2796 = vadd.f32 %v2719, %v2795
        %v2797 = vpop.f32.mrf.mxu0
        %v2798 = vadd.f32 %v2721, %v2797
        %2799 = vdwg.mxu0
        %2800 = vmatprep.subr.mxu0 %v2453
        %2801 = vmatpush1.msra.mxu0 %v2452
        %2802 = vmatprep.subr.mxu0 %v2449
        %2803 = vmatpush1.msra.mxu0 %v2448
        %2804 = vmatprep.subr.mxu0 %v2445
        %2805 = vmatpush1.msra.mxu0 %v2444
        %2806 = vmatprep.subr.mxu0 %v2441
        %2807 = vmatpush1.msra.mxu0 %v2440
        %2808 = vmatprep.subr.mxu0 %v2437
        %2809 = vmatpush1.msra.mxu0 %v2436
        %2810 = vmatprep.subr.mxu0 %v2433
        %2811 = vmatpush1.msra.mxu0 %v2432
        %2812 = vmatprep.subr.mxu0 %v2429
        %2813 = vmatpush1.msra.mxu0 %v2428
        %2814 = vmatprep.subr.mxu0 %v2425
        %2815 = vmatpush1.msra.mxu0 %v2424
        %2816 = vmatprep.subr.mxu0 %v2421
        %2817 = vmatpush1.msra.mxu0 %v2420
        %2818 = vmatprep.subr.mxu0 %v2417
        %2819 = vmatpush1.msra.mxu0 %v2416
        %2820 = vmatprep.subr.mxu0 %v2413
        %2821 = vmatpush1.msra.mxu0 %v2412
        %2822 = vmatprep.subr.mxu0 %v2409
        %2823 = vmatpush1.msra.mxu0 %v2408
        %2824 = vmatprep.subr.mxu0 %v2405
        %2825 = vmatpush1.msra.mxu0 %v2404
        %2826 = vmatprep.subr.mxu0 %v2401
        %2827 = vmatpush1.msra.mxu0 %v2400
        %2828 = vmatprep.subr.mxu0 %v2397
        %2829 = vmatpush1.msra.mxu0 %v2396
        %2830 = vmatprep.subr.mxu0 %v2393
        %2831 = vmatpush1.msra.mxu0 %v2392
        %2832 = vmatprep.subr.mxu0 %v2517
        %2833 = vmatpush2.msra.mxu0 %v2516
        %2834 = vmatprep.subr.mxu0 %v2513
        %2835 = vmatpush2.msra.mxu0 %v2512
        %2836 = vmatprep.subr.mxu0 %v2509
        %2837 = vmatpush2.msra.mxu0 %v2508
        %2838 = vmatprep.subr.mxu0 %v2505
        %2839 = vmatpush2.msra.mxu0 %v2504
        %2840 = vmatprep.subr.mxu0 %v2501
        %2841 = vmatpush2.msra.mxu0 %v2500
        %2842 = vmatprep.subr.mxu0 %v2497
        %2843 = vmatpush2.msra.mxu0 %v2496
        %2844 = vmatprep.subr.mxu0 %v2493
        %2845 = vmatpush2.msra.mxu0 %v2492
        %2846 = vmatprep.subr.mxu0 %v2489
        %2847 = vmatpush2.msra.mxu0 %v2488
        %2848 = vmatprep.subr.mxu0 %v2485
        %2849 = vmatpush2.msra.mxu0 %v2484
        %2850 = vmatprep.subr.mxu0 %v2481
        %2851 = vmatpush2.msra.mxu0 %v2480
        %2852 = vmatprep.subr.mxu0 %v2477
        %2853 = vmatpush2.msra.mxu0 %v2476
        %2854 = vmatprep.subr.mxu0 %v2473
        %2855 = vmatpush2.msra.mxu0 %v2472
        %2856 = vmatprep.subr.mxu0 %v2469
        %2857 = vmatpush2.msra.mxu0 %v2468
        %2858 = vmatprep.subr.mxu0 %v2465
        %2859 = vmatpush2.msra.mxu0 %v2464
        %2860 = vmatprep.subr.mxu0 %v2461
        %2861 = vmatpush2.msra.mxu0 %v2460
        %2862 = vmatprep.subr.mxu0 %v2457
        %2863 = vmatpush2.msra.mxu0 %v2456
        %2864 = vmatprep.mubr.f32.mxu0 %v2304
        %2865 = vmatmul.mubr.f32.gmra.mxu0 %v2302
        %v2866 = vpop.f32.mrf.mxu0
        %v2867 = vadd.f32 0.0, %v2866
        %v2868 = vpop.f32.mrf.mxu0
        %v2869 = vadd.f32 0.0, %v2868
        %2870 = vmatprep.mubr.f32.mxu0 %v2310
        %2871 = vmatmul.mubr.f32.gmra.mxu0 %v2308
        %v2872 = vpop.f32.mrf.mxu0
        %v2873 = vadd.f32 0.0, %v2872
        %v2874 = vpop.f32.mrf.mxu0
        %v2875 = vadd.f32 0.0, %v2874
        %2876 = vdwg.mxu0
        %2877 = vmatprep.subr.mxu0 %v2581
        %2878 = vmatpush1.msra.mxu0 %v2580
        %2879 = vmatprep.subr.mxu0 %v2577
        %2880 = vmatpush1.msra.mxu0 %v2576
        %2881 = vmatprep.subr.mxu0 %v2573
        %2882 = vmatpush1.msra.mxu0 %v2572
        %2883 = vmatprep.subr.mxu0 %v2569
        %2884 = vmatpush1.msra.mxu0 %v2568
        %2885 = vmatprep.subr.mxu0 %v2565
        %2886 = vmatpush1.msra.mxu0 %v2564
        %2887 = vmatprep.subr.mxu0 %v2561
        %2888 = vmatpush1.msra.mxu0 %v2560
        %2889 = vmatprep.subr.mxu0 %v2557
        %2890 = vmatpush1.msra.mxu0 %v2556
        %2891 = vmatprep.subr.mxu0 %v2553
        %2892 = vmatpush1.msra.mxu0 %v2552
        %2893 = vmatprep.subr.mxu0 %v2549
        %2894 = vmatpush1.msra.mxu0 %v2548
        %2895 = vmatprep.subr.mxu0 %v2545
        %2896 = vmatpush1.msra.mxu0 %v2544
        %2897 = vmatprep.subr.mxu0 %v2541
        %2898 = vmatpush1.msra.mxu0 %v2540
        %2899 = vmatprep.subr.mxu0 %v2537
        %2900 = vmatpush1.msra.mxu0 %v2536
        %2901 = vmatprep.subr.mxu0 %v2533
        %2902 = vmatpush1.msra.mxu0 %v2532
        %2903 = vmatprep.subr.mxu0 %v2529
        %2904 = vmatpush1.msra.mxu0 %v2528
        %2905 = vmatprep.subr.mxu0 %v2525
        %2906 = vmatpush1.msra.mxu0 %v2524
        %2907 = vmatprep.subr.mxu0 %v2521
        %2908 = vmatpush1.msra.mxu0 %v2520
        %2909 = vmatprep.subr.mxu0 %v2645
        %2910 = vmatpush2.msra.mxu0 %v2644
        %2911 = vmatprep.subr.mxu0 %v2641
        %2912 = vmatpush2.msra.mxu0 %v2640
        %2913 = vmatprep.subr.mxu0 %v2637
        %2914 = vmatpush2.msra.mxu0 %v2636
        %2915 = vmatprep.subr.mxu0 %v2633
        %2916 = vmatpush2.msra.mxu0 %v2632
        %2917 = vmatprep.subr.mxu0 %v2629
        %2918 = vmatpush2.msra.mxu0 %v2628
        %2919 = vmatprep.subr.mxu0 %v2625
        %2920 = vmatpush2.msra.mxu0 %v2624
        %2921 = vmatprep.subr.mxu0 %v2621
        %2922 = vmatpush2.msra.mxu0 %v2620
        %2923 = vmatprep.subr.mxu0 %v2617
        %2924 = vmatpush2.msra.mxu0 %v2616
        %2925 = vmatprep.subr.mxu0 %v2613
        %2926 = vmatpush2.msra.mxu0 %v2612
        %2927 = vmatprep.subr.mxu0 %v2609
        %2928 = vmatpush2.msra.mxu0 %v2608
        %2929 = vmatprep.subr.mxu0 %v2605
        %2930 = vmatpush2.msra.mxu0 %v2604
        %2931 = vmatprep.subr.mxu0 %v2601
        %2932 = vmatpush2.msra.mxu0 %v2600
        %2933 = vmatprep.subr.mxu0 %v2597
        %2934 = vmatpush2.msra.mxu0 %v2596
        %2935 = vmatprep.subr.mxu0 %v2593
        %2936 = vmatpush2.msra.mxu0 %v2592
        %2937 = vmatprep.subr.mxu0 %v2589
        %2938 = vmatpush2.msra.mxu0 %v2588
        %2939 = vmatprep.subr.mxu0 %v2585
        %2940 = vmatpush2.msra.mxu0 %v2584
        %2941 = vmatprep.mubr.f32.mxu0 %v2381
        %2942 = vmatmul.mubr.f32.gmra.mxu0 %v2379
        %v2943 = vpop.f32.mrf.mxu0
        %v2944 = vadd.f32 %v2867, %v2943
        %v2945 = vpop.f32.mrf.mxu0
        %v2946 = vadd.f32 %v2869, %v2945
        %2947 = vmatprep.mubr.f32.mxu0 %v2387
        %2948 = vmatmul.mubr.f32.gmra.mxu0 %v2385
        %v2949 = vpop.f32.mrf.mxu0
        %v2950 = vadd.f32 %v2873, %v2949
        %v2951 = vpop.f32.mrf.mxu0
        %v2952 = vadd.f32 %v2875, %v2951
        %2953 = vdwg.mxu0
        %v2954 = vadd.f32 %v2062, %v2790
        %v2955 = vadd.f32 %v2064, %v2792
        %v2956 = vadd.f32 %v2216, %v2944
        %v2957 = vadd.f32 %v2218, %v2946
        %v2958 = vadd.f32 %v2068, %v2796
        %v2959 = vadd.f32 %v2070, %v2798
        %v2960 = vadd.f32 %v2222, %v2950
        %v2961 = vadd.f32 %v2224, %v2952
        %v2962 = vld [vmem:[#allocation11] sm:$0xf]
        %v2964 = vlaneseq
        %v2965 = vshrl.u32 %v2964, 7
        %v2966 = vsub.s32 0, %v2965
        %v2967 = vrot.slane %v2962, %v2966
        %v2968 = vlaneseq
        %v2969 = vshrl.u32 %v2968, 7
        %v2970 = vsub.s32 1, %v2969
        %v2971 = vrot.slane %v2962, %v2970
        %v2972 = vlaneseq
        %v2973 = vshrl.u32 %v2972, 7
        %v2974 = vsub.s32 2, %v2973
        %v2975 = vrot.slane %v2962, %v2974
        %v2976 = vlaneseq
        %v2977 = vshrl.u32 %v2976, 7
        %v2978 = vsub.s32 3, %v2977
        %v2979 = vrot.slane %v2962, %v2978
        %v2984 = vadd.f32 %v2954, %v2967
        %v2985 = vadd.f32 %v2955, %v2971
        %v2986 = vadd.f32 %v2956, %v2975
        %v2987 = vadd.f32 %v2957, %v2979
        %v2988 = vadd.f32 %v2958, %v2967
        %v2989 = vadd.f32 %v2959, %v2971
        %v2990 = vadd.f32 %v2960, %v2975
        %v2991 = vadd.f32 %v2961, %v2979
        %v2992 = vxor.u32 %v2984, 2147483648
        %v2993 = vxor.u32 %v2985, 2147483648
        %v2994 = vxor.u32 %v2986, 2147483648
        %v2995 = vxor.u32 %v2987, 2147483648
        %v2996 = vxor.u32 %v2988, 2147483648
        %v2997 = vxor.u32 %v2989, 2147483648
        %v2998 = vxor.u32 %v2990, 2147483648
        %v2999 = vxor.u32 %v2991, 2147483648
        %v3000 = vmul.f32 %v2992, 1.442695
        %v3001 = vpow.pop %v3000
        %v3002 = vmul.f32 %v2993, 1.442695
        %v3003 = vpow.pop %v3002
        %v3004 = vmul.f32 %v2994, 1.442695
        %v3005 = vpow.pop %v3004
        %v3006 = vmul.f32 %v2995, 1.442695
        %v3007 = vpow.pop %v3006
        %v3008 = vmul.f32 %v2996, 1.442695
        %v3009 = vpow.pop %v3008
        %v3010 = vmul.f32 %v2997, 1.442695
        %v3011 = vpow.pop %v3010
        %v3012 = vmul.f32 %v2998, 1.442695
        %v3013 = vpow.pop %v3012
        %v3014 = vmul.f32 %v2999, 1.442695
        %v3015 = vpow.pop %v3014
        %v3016 = vadd.f32 %v3001, 1.0
        %v3017 = vadd.f32 %v3003, 1.0
        %v3018 = vadd.f32 %v3005, 1.0
        %v3019 = vadd.f32 %v3007, 1.0
        %v3020 = vadd.f32 %v3009, 1.0
        %v3021 = vadd.f32 %v3011, 1.0
        %v3022 = vadd.f32 %v3013, 1.0
        %v3023 = vadd.f32 %v3015, 1.0
        %v3024 = vrcp.pop %v3016
        %v3025 = vmul.f32 1.0, %v3024
        %v3026 = vrcp.pop %v3017
        %v3027 = vmul.f32 1.0, %v3026
        %v3028 = vrcp.pop %v3018
        %v3029 = vmul.f32 1.0, %v3028
        %v3030 = vrcp.pop %v3019
        %v3031 = vmul.f32 1.0, %v3030
        %v3032 = vrcp.pop %v3020
        %v3033 = vmul.f32 1.0, %v3032
        %v3034 = vrcp.pop %v3021
        %v3035 = vmul.f32 1.0, %v3034
        %v3036 = vrcp.pop %v3022
        %v3037 = vmul.f32 1.0, %v3036
        %v3038 = vrcp.pop %v3023
        %v3039 = vmul.f32 1.0, %v3038
        %v3040 = vmul.f32 %v2984, %v3025
        %v3041 = vmul.f32 %v2985, %v3027
        %v3042 = vmul.f32 %v2986, %v3029
        %v3043 = vmul.f32 %v2987, %v3031
        %v3044 = vmul.f32 %v2988, %v3033
        %v3045 = vmul.f32 %v2989, %v3035
        %v3046 = vmul.f32 %v2990, %v3037
        %v3047 = vmul.f32 %v2991, %v3039
        %v3048 = vadd.f32 %v3040, %v3044
        %v3049 = vrot.slane %v3048, 4
        %v3050 = vadd.f32 %v3048, %v3049
        %v3051 = vrot.slane %v3050, 2
        %v3052 = vadd.f32 %v3050, %v3051
        %v3053 = vrot.slane %v3052, 1
        %v3054 = vadd.f32 %v3052, %v3053
        %v3055 = vadd.f32 %v3041, %v3045
        %v3056 = vrot.slane %v3055, 4
        %v3057 = vadd.f32 %v3055, %v3056
        %v3058 = vrot.slane %v3057, 2
        %v3059 = vadd.f32 %v3057, %v3058
        %v3060 = vrot.slane %v3059, 1
        %v3061 = vadd.f32 %v3059, %v3060
        %v3062 = vadd.f32 %v3042, %v3046
        %v3063 = vrot.slane %v3062, 4
        %v3064 = vadd.f32 %v3062, %v3063
        %v3065 = vrot.slane %v3064, 2
        %v3066 = vadd.f32 %v3064, %v3065
        %v3067 = vrot.slane %v3066, 1
        %v3068 = vadd.f32 %v3066, %v3067
        %v3069 = vadd.f32 %v3043, %v3047
        %v3070 = vrot.slane %v3069, 4
        %v3071 = vadd.f32 %v3069, %v3070
        %v3072 = vrot.slane %v3071, 2
        %v3073 = vadd.f32 %v3071, %v3072
        %v3074 = vrot.slane %v3073, 1
        %v3075 = vadd.f32 %v3073, %v3074
        %v3076 = vld [vmem:[%s10] sm:$0xff]
        %v3077 = vld [vmem:[%s10 + $0x8] sm:$0xff]
        %v3078 = vld [vmem:[%s10 + $0x10] sm:$0xff]
        %v3079 = vld [vmem:[%s10 + $0x18] sm:$0xff]
        %v3080 = vld [vmem:[%s10 + $0x20] sm:$0xff]
        %v3081 = vld [vmem:[%s10 + $0x28] sm:$0xff]
        %v3082 = vld [vmem:[%s10 + $0x30] sm:$0xff]
        %v3083 = vld [vmem:[%s10 + $0x38] sm:$0xff]
        %v3084 = vld [vmem:[%s10 + $0x40] sm:$0xff]
        %v3085 = vld [vmem:[%s10 + $0x48] sm:$0xff]
        %v3086 = vld [vmem:[%s10 + $0x50] sm:$0xff]
        %v3087 = vld [vmem:[%s10 + $0x58] sm:$0xff]
        %v3088 = vld [vmem:[%s10 + $0x60] sm:$0xff]
        %v3089 = vld [vmem:[%s10 + $0x68] sm:$0xff]
        %v3090 = vld [vmem:[%s10 + $0x70] sm:$0xff]
        %v3091 = vld [vmem:[%s10 + $0x78] sm:$0xff]
        %v3092 = vld [vmem:[%s10 + $0x80] sm:$0xff]
        %v3093 = vld [vmem:[%s10 + $0x88] sm:$0xff]
        %v3094 = vld [vmem:[%s10 + $0x90] sm:$0xff]
        %v3095 = vld [vmem:[%s10 + $0x98] sm:$0xff]
        %v3096 = vld [vmem:[%s10 + $0xa0] sm:$0xff]
        %v3097 = vld [vmem:[%s10 + $0xa8] sm:$0xff]
        %v3098 = vld [vmem:[%s10 + $0xb0] sm:$0xff]
        %v3099 = vld [vmem:[%s10 + $0xb8] sm:$0xff]
        %v3100 = vld [vmem:[%s10 + $0xc0] sm:$0xff]
        %v3101 = vld [vmem:[%s10 + $0xc8] sm:$0xff]
        %v3102 = vld [vmem:[%s10 + $0xd0] sm:$0xff]
        %v3103 = vld [vmem:[%s10 + $0xd8] sm:$0xff]
        %v3104 = vld [vmem:[%s10 + $0xe0] sm:$0xff]
        %v3105 = vld [vmem:[%s10 + $0xe8] sm:$0xff]
        %v3106 = vld [vmem:[%s10 + $0xf0] sm:$0xff]
        %v3107 = vld [vmem:[%s10 + $0xf8] sm:$0xff]
        %v3108 = vld [vmem:[%s10 + $0x100] sm:$0xff]
        %v3109 = vld [vmem:[%s10 + $0x108] sm:$0xff]
        %v3110 = vld [vmem:[%s10 + $0x110] sm:$0xff]
        %v3111 = vld [vmem:[%s10 + $0x118] sm:$0xff]
        %v3112 = vld [vmem:[%s10 + $0x120] sm:$0xff]
        %v3113 = vld [vmem:[%s10 + $0x128] sm:$0xff]
        %v3114 = vld [vmem:[%s10 + $0x130] sm:$0xff]
        %v3115 = vld [vmem:[%s10 + $0x138] sm:$0xff]
        %v3116 = vld [vmem:[%s10 + $0x140] sm:$0xff]
        %v3117 = vld [vmem:[%s10 + $0x148] sm:$0xff]
        %v3118 = vld [vmem:[%s10 + $0x150] sm:$0xff]
        %v3119 = vld [vmem:[%s10 + $0x158] sm:$0xff]
        %v3120 = vld [vmem:[%s10 + $0x160] sm:$0xff]
        %v3121 = vld [vmem:[%s10 + $0x168] sm:$0xff]
        %v3122 = vld [vmem:[%s10 + $0x170] sm:$0xff]
        %v3123 = vld [vmem:[%s10 + $0x178] sm:$0xff]
        %v3124 = vld [vmem:[%s10 + $0x180] sm:$0xff]
        %v3125 = vld [vmem:[%s10 + $0x188] sm:$0xff]
        %v3126 = vld [vmem:[%s10 + $0x190] sm:$0xff]
        %v3127 = vld [vmem:[%s10 + $0x198] sm:$0xff]
        %v3128 = vld [vmem:[%s10 + $0x1a0] sm:$0xff]
        %v3129 = vld [vmem:[%s10 + $0x1a8] sm:$0xff]
        %v3130 = vld [vmem:[%s10 + $0x1b0] sm:$0xff]
        %v3131 = vld [vmem:[%s10 + $0x1b8] sm:$0xff]
        %v3132 = vld [vmem:[%s10 + $0x1c0] sm:$0xff]
        %v3133 = vld [vmem:[%s10 + $0x1c8] sm:$0xff]
        %v3134 = vld [vmem:[%s10 + $0x1d0] sm:$0xff]
        %v3135 = vld [vmem:[%s10 + $0x1d8] sm:$0xff]
        %v3136 = vld [vmem:[%s10 + $0x1e0] sm:$0xff]
        %v3137 = vld [vmem:[%s10 + $0x1e8] sm:$0xff]
        %v3138 = vld [vmem:[%s10 + $0x1f0] sm:$0xff]
        %v3139 = vld [vmem:[%s10 + $0x1f8] sm:$0xff]
        %3140 = vmatprep.subr.mxu0 0.0
        %3141 = vmatpush1.msra.mxu0 %v3091
        %3142 = vmatprep.subr.mxu0 0.0
        %3143 = vmatpush1.msra.mxu0 %v3090
        %3144 = vmatprep.subr.mxu0 0.0
        %3145 = vmatpush1.msra.mxu0 %v3089
        %3146 = vmatprep.subr.mxu0 0.0
        %3147 = vmatpush1.msra.mxu0 %v3088
        %3148 = vmatprep.subr.mxu0 0.0
        %3149 = vmatpush1.msra.mxu0 %v3087
        %3150 = vmatprep.subr.mxu0 0.0
        %3151 = vmatpush1.msra.mxu0 %v3086
        %3152 = vmatprep.subr.mxu0 0.0
        %3153 = vmatpush1.msra.mxu0 %v3085
        %3154 = vmatprep.subr.mxu0 0.0
        %3155 = vmatpush1.msra.mxu0 %v3084
        %3156 = vmatprep.subr.mxu0 0.0
        %3157 = vmatpush1.msra.mxu0 %v3083
        %3158 = vmatprep.subr.mxu0 0.0
        %3159 = vmatpush1.msra.mxu0 %v3082
        %3160 = vmatprep.subr.mxu0 0.0
        %3161 = vmatpush1.msra.mxu0 %v3081
        %3162 = vmatprep.subr.mxu0 0.0
        %3163 = vmatpush1.msra.mxu0 %v3080
        %3164 = vmatprep.subr.mxu0 0.0
        %3165 = vmatpush1.msra.mxu0 %v3079
        %3166 = vmatprep.subr.mxu0 0.0
        %3167 = vmatpush1.msra.mxu0 %v3078
        %3168 = vmatprep.subr.mxu0 0.0
        %3169 = vmatpush1.msra.mxu0 %v3077
        %3170 = vmatprep.subr.mxu0 0.0
        %3171 = vmatpush1.msra.mxu0 %v3076
        %3172 = vmatprep.subr.mxu0 0.0
        %3173 = vmatpush2.msra.mxu0 %v3107
        %3174 = vmatprep.subr.mxu0 0.0
        %3175 = vmatpush2.msra.mxu0 %v3106
        %3176 = vmatprep.subr.mxu0 0.0
        %3177 = vmatpush2.msra.mxu0 %v3105
        %3178 = vmatprep.subr.mxu0 0.0
        %3179 = vmatpush2.msra.mxu0 %v3104
        %3180 = vmatprep.subr.mxu0 0.0
        %3181 = vmatpush2.msra.mxu0 %v3103
        %3182 = vmatprep.subr.mxu0 0.0
        %3183 = vmatpush2.msra.mxu0 %v3102
        %3184 = vmatprep.subr.mxu0 0.0
        %3185 = vmatpush2.msra.mxu0 %v3101
        %3186 = vmatprep.subr.mxu0 0.0
        %3187 = vmatpush2.msra.mxu0 %v3100
        %3188 = vmatprep.subr.mxu0 0.0
        %3189 = vmatpush2.msra.mxu0 %v3099
        %3190 = vmatprep.subr.mxu0 0.0
        %3191 = vmatpush2.msra.mxu0 %v3098
        %3192 = vmatprep.subr.mxu0 0.0
        %3193 = vmatpush2.msra.mxu0 %v3097
        %3194 = vmatprep.subr.mxu0 0.0
        %3195 = vmatpush2.msra.mxu0 %v3096
        %3196 = vmatprep.subr.mxu0 0.0
        %3197 = vmatpush2.msra.mxu0 %v3095
        %3198 = vmatprep.subr.mxu0 0.0
        %3199 = vmatpush2.msra.mxu0 %v3094
        %3200 = vmatprep.subr.mxu0 0.0
        %3201 = vmatpush2.msra.mxu0 %v3093
        %3202 = vmatprep.subr.mxu0 0.0
        %3203 = vmatpush2.msra.mxu0 %v3092
        %3204 = vmatprep.mubr.f32.mxu0 %v3061
        %3205 = vmatmul.mubr.f32.gmra.mxu0 %v3054
        %v3206 = vpop.f32.mrf.mxu0
        %v3207 = vadd.f32 0.0, %v3206
        %v3208 = vpop.f32.mrf.mxu0
        %3209 = vdwg.mxu0
        %3210 = vmatprep.subr.mxu0 0.0
        %3211 = vmatpush1.msra.mxu0 %v3123
        %3212 = vmatprep.subr.mxu0 0.0
        %3213 = vmatpush1.msra.mxu0 %v3122
        %3214 = vmatprep.subr.mxu0 0.0
        %3215 = vmatpush1.msra.mxu0 %v3121
        %3216 = vmatprep.subr.mxu0 0.0
        %3217 = vmatpush1.msra.mxu0 %v3120
        %3218 = vmatprep.subr.mxu0 0.0
        %3219 = vmatpush1.msra.mxu0 %v3119
        %3220 = vmatprep.subr.mxu0 0.0
        %3221 = vmatpush1.msra.mxu0 %v3118
        %3222 = vmatprep.subr.mxu0 0.0
        %3223 = vmatpush1.msra.mxu0 %v3117
        %3224 = vmatprep.subr.mxu0 0.0
        %3225 = vmatpush1.msra.mxu0 %v3116
        %3226 = vmatprep.subr.mxu0 0.0
        %3227 = vmatpush1.msra.mxu0 %v3115
        %3228 = vmatprep.subr.mxu0 0.0
        %3229 = vmatpush1.msra.mxu0 %v3114
        %3230 = vmatprep.subr.mxu0 0.0
        %3231 = vmatpush1.msra.mxu0 %v3113
        %3232 = vmatprep.subr.mxu0 0.0
        %3233 = vmatpush1.msra.mxu0 %v3112
        %3234 = vmatprep.subr.mxu0 0.0
        %3235 = vmatpush1.msra.mxu0 %v3111
        %3236 = vmatprep.subr.mxu0 0.0
        %3237 = vmatpush1.msra.mxu0 %v3110
        %3238 = vmatprep.subr.mxu0 0.0
        %3239 = vmatpush1.msra.mxu0 %v3109
        %3240 = vmatprep.subr.mxu0 0.0
        %3241 = vmatpush1.msra.mxu0 %v3108
        %3242 = vmatprep.subr.mxu0 0.0
        %3243 = vmatpush2.msra.mxu0 %v3139
        %3244 = vmatprep.subr.mxu0 0.0
        %3245 = vmatpush2.msra.mxu0 %v3138
        %3246 = vmatprep.subr.mxu0 0.0
        %3247 = vmatpush2.msra.mxu0 %v3137
        %3248 = vmatprep.subr.mxu0 0.0
        %3249 = vmatpush2.msra.mxu0 %v3136
        %3250 = vmatprep.subr.mxu0 0.0
        %3251 = vmatpush2.msra.mxu0 %v3135
        %3252 = vmatprep.subr.mxu0 0.0
        %3253 = vmatpush2.msra.mxu0 %v3134
        %3254 = vmatprep.subr.mxu0 0.0
        %3255 = vmatpush2.msra.mxu0 %v3133
        %3256 = vmatprep.subr.mxu0 0.0
        %3257 = vmatpush2.msra.mxu0 %v3132
        %3258 = vmatprep.subr.mxu0 0.0
        %3259 = vmatpush2.msra.mxu0 %v3131
        %3260 = vmatprep.subr.mxu0 0.0
        %3261 = vmatpush2.msra.mxu0 %v3130
        %3262 = vmatprep.subr.mxu0 0.0
        %3263 = vmatpush2.msra.mxu0 %v3129
        %3264 = vmatprep.subr.mxu0 0.0
        %3265 = vmatpush2.msra.mxu0 %v3128
        %3266 = vmatprep.subr.mxu0 0.0
        %3267 = vmatpush2.msra.mxu0 %v3127
        %3268 = vmatprep.subr.mxu0 0.0
        %3269 = vmatpush2.msra.mxu0 %v3126
        %3270 = vmatprep.subr.mxu0 0.0
        %3271 = vmatpush2.msra.mxu0 %v3125
        %3272 = vmatprep.subr.mxu0 0.0
        %3273 = vmatpush2.msra.mxu0 %v3124
        %3274 = vmatprep.mubr.f32.mxu0 %v3075
        %3275 = vmatmul.mubr.f32.gmra.mxu0 %v3068
        %v3276 = vpop.f32.mrf.mxu0
        %v3277 = vadd.f32 %v3207, %v3276
        %v3278 = vpop.f32.mrf.mxu0
        %3279 = vdwg.mxu0
        %v3280 = vld [vmem:[%s6] sm:$0xff]
        %v3281 = vld [vmem:[%s6 + $0x8] sm:$0xff]
        %v3282 = vld [vmem:[%s6 + $0x10] sm:$0xff]
        %v3283 = vld [vmem:[%s6 + $0x18] sm:$0xff]
        %v3284 = vld [vmem:[#allocation13] sm:$0x1]
        %vm3285 = vcmask 261120
        %v3287 = vsel %vm3285, %v3277, 0
        %3289 = vmatprep.subr.mxu0 0.0
        %3290 = vmatpush1.msra.mxu0 0.0
        %3291 = vmatprep.subr.mxu0 0.0
        %3292 = vmatpush1.msra.mxu0 0.0
        %3293 = vmatprep.subr.mxu0 0.0
        %3294 = vmatpush1.msra.mxu0 0.0
        %3295 = vmatprep.subr.mxu0 0.0
        %3296 = vmatpush1.msra.mxu0 0.0
        %3297 = vmatprep.subr.mxu0 0.0
        %3298 = vmatpush1.msra.mxu0 0.0
        %3299 = vmatprep.subr.mxu0 0.0
        %3300 = vmatpush1.msra.mxu0 0.0
        %3301 = vmatprep.subr.mxu0 0.0
        %3302 = vmatpush1.msra.mxu0 0.0
        %3303 = vmatprep.subr.mxu0 0.0
        %3304 = vmatpush1.msra.mxu0 0.0
        %3305 = vmatprep.subr.mxu0 0.0
        %3306 = vmatpush1.msra.mxu0 0.0
        %3307 = vmatprep.subr.mxu0 0.0
        %3308 = vmatpush1.msra.mxu0 0.0
        %3309 = vmatprep.subr.mxu0 0.0
        %3310 = vmatpush1.msra.mxu0 0.0
        %3311 = vmatprep.subr.mxu0 0.0
        %3312 = vmatpush1.msra.mxu0 0.0
        %3313 = vmatprep.subr.mxu0 0.0
        %3314 = vmatpush1.msra.mxu0 %v3283
        %3315 = vmatprep.subr.mxu0 0.0
        %3316 = vmatpush1.msra.mxu0 %v3282
        %3317 = vmatprep.subr.mxu0 0.0
        %3318 = vmatpush1.msra.mxu0 %v3281
        %3319 = vmatprep.subr.mxu0 0.0
        %3320 = vmatpush1.msra.mxu0 %v3280
        %3321 = vmatprep.subr.mxu0 0.0
        %3322 = vmatpush2.msra.mxu0 0.0
        %3323 = vmatprep.subr.mxu0 0.0
        %3324 = vmatpush2.msra.mxu0 0.0
        %3325 = vmatprep.subr.mxu0 0.0
        %3326 = vmatpush2.msra.mxu0 0.0
        %3327 = vmatprep.subr.mxu0 0.0
        %3328 = vmatpush2.msra.mxu0 0.0
        %3329 = vmatprep.subr.mxu0 0.0
        %3330 = vmatpush2.msra.mxu0 0.0
        %3331 = vmatprep.subr.mxu0 0.0
        %3332 = vmatpush2.msra.mxu0 0.0
        %3333 = vmatprep.subr.mxu0 0.0
        %3334 = vmatpush2.msra.mxu0 0.0
        %3335 = vmatprep.subr.mxu0 0.0
        %3336 = vmatpush2.msra.mxu0 0.0
        %3337 = vmatprep.subr.mxu0 0.0
        %3338 = vmatpush2.msra.mxu0 0.0
        %3339 = vmatprep.subr.mxu0 0.0
        %3340 = vmatpush2.msra.mxu0 0.0
        %3341 = vmatprep.subr.mxu0 0.0
        %3342 = vmatpush2.msra.mxu0 0.0
        %3343 = vmatprep.subr.mxu0 0.0
        %3344 = vmatpush2.msra.mxu0 0.0
        %3345 = vmatprep.subr.mxu0 0.0
        %3346 = vmatpush2.msra.mxu0 0.0
        %3347 = vmatprep.subr.mxu0 0.0
        %3348 = vmatpush2.msra.mxu0 0.0
        %3349 = vmatprep.subr.mxu0 0.0
        %3350 = vmatpush2.msra.mxu0 0.0
        %3351 = vmatprep.subr.mxu0 0.0
        %3352 = vmatpush2.msra.mxu0 0.0
        %3353 = vmatprep.mubr.f32.mxu0 0.0
        %3354 = vmatmul.mubr.f32.gmra.mxu0 %v3287
        %v3355 = vpop.f32.mrf.mxu0
        %v3356 = vadd.f32 %v3284, %v3355
        %v3357 = vpop.f32.mrf.mxu0
        %3358 = vdwg.mxu0
        %v3359 = vxor.u32 %v3356, 2147483648
        %v3360 = vmul.f32 %v3359, 1.442695
        %v3361 = vpow.pop %v3360
        %v3362 = vadd.f32 %v3361, 1.0
        %v3363 = vrcp.pop %v3362
        %v3364 = vmul.f32 1.0, %v3363
        %v3365 = vmul.f32 %v3356, %v3364
        %v3366 = vld [vmem:[#allocation14] sm:$0x3]
        %v3367 = vld [vmem:[#allocation16] sm:$0x1]
        %vm3368 = vcmask 15360
        %v3370 = vsel %vm3368, %v3365, 0
        %vm3372 = vcmask 1041408
        %v3374 = vsel %vm3372, %v3366, 0
        %3376 = vmatprep.subr.mxu0 0.0
        %3377 = vmatpush1.msra.mxu0 0.0
        %3378 = vmatprep.subr.mxu0 0.0
        %3379 = vmatpush1.msra.mxu0 0.0
        %3380 = vmatprep.subr.mxu0 0.0
        %3381 = vmatpush1.msra.mxu0 0.0
        %3382 = vmatprep.subr.mxu0 0.0
        %3383 = vmatpush1.msra.mxu0 0.0
        %3384 = vmatprep.subr.mxu0 0.0
        %3385 = vmatpush1.msra.mxu0 0.0
        %3386 = vmatprep.subr.mxu0 0.0
        %3387 = vmatpush1.msra.mxu0 0.0
        %3388 = vmatprep.subr.mxu0 0.0
        %3389 = vmatpush1.msra.mxu0 0.0
        %3390 = vmatprep.subr.mxu0 0.0
        %3391 = vmatpush1.msra.mxu0 0.0
        %3392 = vmatprep.subr.mxu0 0.0
        %3393 = vmatpush1.msra.mxu0 0.0
        %3394 = vmatprep.subr.mxu0 0.0
        %3395 = vmatpush1.msra.mxu0 0.0
        %3396 = vmatprep.subr.mxu0 0.0
        %3397 = vmatpush1.msra.mxu0 0.0
        %3398 = vmatprep.subr.mxu0 0.0
        %3399 = vmatpush1.msra.mxu0 0.0
        %3400 = vmatprep.subr.mxu0 0.0
        %3401 = vmatpush1.msra.mxu0 0.0
        %3402 = vmatprep.subr.mxu0 0.0
        %3403 = vmatpush1.msra.mxu0 0.0
        %3404 = vmatprep.subr.mxu0 0.0
        %3405 = vmatpush1.msra.mxu0 0.0
        %3406 = vmatprep.subr.mxu0 0.0
        %3407 = vmatpush1.msra.mxu0 %v3374
        %3408 = vmatprep.subr.mxu0 0.0
        %3409 = vmatpush2.msra.mxu0 0.0
        %3410 = vmatprep.subr.mxu0 0.0
        %3411 = vmatpush2.msra.mxu0 0.0
        %3412 = vmatprep.subr.mxu0 0.0
        %3413 = vmatpush2.msra.mxu0 0.0
        %3414 = vmatprep.subr.mxu0 0.0
        %3415 = vmatpush2.msra.mxu0 0.0
        %3416 = vmatprep.subr.mxu0 0.0
        %3417 = vmatpush2.msra.mxu0 0.0
        %3418 = vmatprep.subr.mxu0 0.0
        %3419 = vmatpush2.msra.mxu0 0.0
        %3420 = vmatprep.subr.mxu0 0.0
        %3421 = vmatpush2.msra.mxu0 0.0
        %3422 = vmatprep.subr.mxu0 0.0
        %3423 = vmatpush2.msra.mxu0 0.0
        %3424 = vmatprep.subr.mxu0 0.0
        %3425 = vmatpush2.msra.mxu0 0.0
        %3426 = vmatprep.subr.mxu0 0.0
        %3427 = vmatpush2.msra.mxu0 0.0
        %3428 = vmatprep.subr.mxu0 0.0
        %3429 = vmatpush2.msra.mxu0 0.0
        %3430 = vmatprep.subr.mxu0 0.0
        %3431 = vmatpush2.msra.mxu0 0.0
        %3432 = vmatprep.subr.mxu0 0.0
        %3433 = vmatpush2.msra.mxu0 0.0
        %3434 = vmatprep.subr.mxu0 0.0
        %3435 = vmatpush2.msra.mxu0 0.0
        %3436 = vmatprep.subr.mxu0 0.0
        %3437 = vmatpush2.msra.mxu0 0.0
        %3438 = vmatprep.subr.mxu0 0.0
        %3439 = vmatpush2.msra.mxu0 0.0
        %3440 = vmatprep.mubr.f32.mxu0 0.0
        %3441 = vmatmul.mubr.f32.gmra.mxu0 %v3370
        %v3442 = vpop.f32.mrf.mxu0
        %v3443 = vadd.f32 %v3367, %v3442
        %v3444 = vpop.f32.mrf.mxu0
        %3445 = vdwg.mxu0
        %v3446 = vxor.u32 %v3443, 2147483648
        %v3447 = vmul.f32 %v3446, 1.442695
        %v3448 = vpow.pop %v3447
        %v3449 = vadd.f32 %v3448, 1.0
        %v3450 = vrcp.pop %v3449
        %v3451 = vmul.f32 1.0, %v3450
        %v3452 = vld [vmem:[#allocation17] sm:$0xff]
        %v3453 = vld [vmem:[#allocation17 + $0x8] sm:$0xff]
        %v3454 = vld [vmem:[#allocation17 + $0x10] sm:$0xff]
        %v3455 = vld [vmem:[#allocation17 + $0x18] sm:$0xff]
        %v3456 = vld [vmem:[#allocation17 + $0x20] sm:$0xff]
        %v3457 = vld [vmem:[#allocation17 + $0x28] sm:$0xff]
        %v3458 = vld [vmem:[#allocation17 + $0x30] sm:$0xff]
        %v3459 = vld [vmem:[#allocation17 + $0x38] sm:$0xff]
        %v3460 = vld [vmem:[#allocation17 + $0x40] sm:$0xff]
        %v3461 = vld [vmem:[#allocation17 + $0x48] sm:$0xff]
        %v3462 = vld [vmem:[#allocation17 + $0x50] sm:$0xff]
        %v3463 = vld [vmem:[#allocation17 + $0x58] sm:$0xff]
        %v3464 = vld [vmem:[#allocation17 + $0x60] sm:$0xff]
        %v3465 = vld [vmem:[#allocation17 + $0x68] sm:$0xff]
        %v3466 = vld [vmem:[#allocation17 + $0x70] sm:$0xff]
        %v3467 = vld [vmem:[#allocation17 + $0x78] sm:$0xff]
        %v3469 = vsel %vm3285, %v3451, 0
        %3471 = vmatprep.subr.mxu0 0.0
        %3472 = vmatpush1.msra.mxu0 0.0
        %3473 = vmatprep.subr.mxu0 0.0
        %3474 = vmatpush1.msra.mxu0 0.0
        %3475 = vmatprep.subr.mxu0 0.0
        %3476 = vmatpush1.msra.mxu0 0.0
        %3477 = vmatprep.subr.mxu0 0.0
        %3478 = vmatpush1.msra.mxu0 0.0
        %3479 = vmatprep.subr.mxu0 0.0
        %3480 = vmatpush1.msra.mxu0 0.0
        %3481 = vmatprep.subr.mxu0 0.0
        %3482 = vmatpush1.msra.mxu0 0.0
        %3483 = vmatprep.subr.mxu0 0.0
        %3484 = vmatpush1.msra.mxu0 0.0
        %3485 = vmatprep.subr.mxu0 0.0
        %3486 = vmatpush1.msra.mxu0 0.0
        %3487 = vmatprep.subr.mxu0 0.0
        %3488 = vmatpush1.msra.mxu0 0.0
        %3489 = vmatprep.subr.mxu0 0.0
        %3490 = vmatpush1.msra.mxu0 0.0
        %3491 = vmatprep.subr.mxu0 0.0
        %3492 = vmatpush1.msra.mxu0 0.0
        %3493 = vmatprep.subr.mxu0 0.0
        %3494 = vmatpush1.msra.mxu0 0.0
        %3495 = vmatprep.subr.mxu0 %v3465
        %3496 = vmatpush1.msra.mxu0 %v3464
        %3497 = vmatprep.subr.mxu0 %v3461
        %3498 = vmatpush1.msra.mxu0 %v3460
        %3499 = vmatprep.subr.mxu0 %v3457
        %3500 = vmatpush1.msra.mxu0 %v3456
        %3501 = vmatprep.subr.mxu0 %v3453
        %3502 = vmatpush1.msra.mxu0 %v3452
        %3503 = vmatprep.subr.mxu0 0.0
        %3504 = vmatpush2.msra.mxu0 0.0
        %3505 = vmatprep.subr.mxu0 0.0
        %3506 = vmatpush2.msra.mxu0 0.0
        %3507 = vmatprep.subr.mxu0 0.0
        %3508 = vmatpush2.msra.mxu0 0.0
        %3509 = vmatprep.subr.mxu0 0.0
        %3510 = vmatpush2.msra.mxu0 0.0
        %3511 = vmatprep.subr.mxu0 0.0
        %3512 = vmatpush2.msra.mxu0 0.0
        %3513 = vmatprep.subr.mxu0 0.0
        %3514 = vmatpush2.msra.mxu0 0.0
        %3515 = vmatprep.subr.mxu0 0.0
        %3516 = vmatpush2.msra.mxu0 0.0
        %3517 = vmatprep.subr.mxu0 0.0
        %3518 = vmatpush2.msra.mxu0 0.0
        %3519 = vmatprep.subr.mxu0 0.0
        %3520 = vmatpush2.msra.mxu0 0.0
        %3521 = vmatprep.subr.mxu0 0.0
        %3522 = vmatpush2.msra.mxu0 0.0
        %3523 = vmatprep.subr.mxu0 0.0
        %3524 = vmatpush2.msra.mxu0 0.0
        %3525 = vmatprep.subr.mxu0 0.0
        %3526 = vmatpush2.msra.mxu0 0.0
        %3527 = vmatprep.subr.mxu0 0.0
        %3528 = vmatpush2.msra.mxu0 0.0
        %3529 = vmatprep.subr.mxu0 0.0
        %3530 = vmatpush2.msra.mxu0 0.0
        %3531 = vmatprep.subr.mxu0 0.0
        %3532 = vmatpush2.msra.mxu0 0.0
        %3533 = vmatprep.subr.mxu0 0.0
        %3534 = vmatpush2.msra.mxu0 0.0
        %3535 = vmatprep.mubr.f32.mxu0 0.0
        %3536 = vmatmul.mubr.f32.gmra.mxu0 %v3469
        %v3537 = vpop.f32.mrf.mxu0
        %v3538 = vadd.f32 0.0, %v3537
        %v3539 = vpop.f32.mrf.mxu0
        %v3540 = vadd.f32 0.0, %v3539
        %3541 = vdwg.mxu0
        %3542 = vmatprep.subr.mxu0 0.0
        %3543 = vmatpush1.msra.mxu0 0.0
        %3544 = vmatprep.subr.mxu0 0.0
        %3545 = vmatpush1.msra.mxu0 0.0
        %3546 = vmatprep.subr.mxu0 0.0
        %3547 = vmatpush1.msra.mxu0 0.0
        %3548 = vmatprep.subr.mxu0 0.0
        %3549 = vmatpush1.msra.mxu0 0.0
        %3550 = vmatprep.subr.mxu0 0.0
        %3551 = vmatpush1.msra.mxu0 0.0
        %3552 = vmatprep.subr.mxu0 0.0
        %3553 = vmatpush1.msra.mxu0 0.0
        %3554 = vmatprep.subr.mxu0 0.0
        %3555 = vmatpush1.msra.mxu0 0.0
        %3556 = vmatprep.subr.mxu0 0.0
        %3557 = vmatpush1.msra.mxu0 0.0
        %3558 = vmatprep.subr.mxu0 0.0
        %3559 = vmatpush1.msra.mxu0 0.0
        %3560 = vmatprep.subr.mxu0 0.0
        %3561 = vmatpush1.msra.mxu0 0.0
        %3562 = vmatprep.subr.mxu0 0.0
        %3563 = vmatpush1.msra.mxu0 0.0
        %3564 = vmatprep.subr.mxu0 0.0
        %3565 = vmatpush1.msra.mxu0 0.0
        %3566 = vmatprep.subr.mxu0 %v3467
        %3567 = vmatpush1.msra.mxu0 %v3466
        %3568 = vmatprep.subr.mxu0 %v3463
        %3569 = vmatpush1.msra.mxu0 %v3462
        %3570 = vmatprep.subr.mxu0 %v3459
        %3571 = vmatpush1.msra.mxu0 %v3458
        %3572 = vmatprep.subr.mxu0 %v3455
        %3573 = vmatpush1.msra.mxu0 %v3454
        %3574 = vmatprep.subr.mxu0 0.0
        %3575 = vmatpush2.msra.mxu0 0.0
        %3576 = vmatprep.subr.mxu0 0.0
        %3577 = vmatpush2.msra.mxu0 0.0
        %3578 = vmatprep.subr.mxu0 0.0
        %3579 = vmatpush2.msra.mxu0 0.0
        %3580 = vmatprep.subr.mxu0 0.0
        %3581 = vmatpush2.msra.mxu0 0.0
        %3582 = vmatprep.subr.mxu0 0.0
        %3583 = vmatpush2.msra.mxu0 0.0
        %3584 = vmatprep.subr.mxu0 0.0
        %3585 = vmatpush2.msra.mxu0 0.0
        %3586 = vmatprep.subr.mxu0 0.0
        %3587 = vmatpush2.msra.mxu0 0.0
        %3588 = vmatprep.subr.mxu0 0.0
        %3589 = vmatpush2.msra.mxu0 0.0
        %3590 = vmatprep.subr.mxu0 0.0
        %3591 = vmatpush2.msra.mxu0 0.0
        %3592 = vmatprep.subr.mxu0 0.0
        %3593 = vmatpush2.msra.mxu0 0.0
        %3594 = vmatprep.subr.mxu0 0.0
        %3595 = vmatpush2.msra.mxu0 0.0
        %3596 = vmatprep.subr.mxu0 0.0
        %3597 = vmatpush2.msra.mxu0 0.0
        %3598 = vmatprep.subr.mxu0 0.0
        %3599 = vmatpush2.msra.mxu0 0.0
        %3600 = vmatprep.subr.mxu0 0.0
        %3601 = vmatpush2.msra.mxu0 0.0
        %3602 = vmatprep.subr.mxu0 0.0
        %3603 = vmatpush2.msra.mxu0 0.0
        %3604 = vmatprep.subr.mxu0 0.0
        %3605 = vmatpush2.msra.mxu0 0.0
        %3606 = vmatprep.mubr.f32.mxu0 0.0
        %3607 = vmatmul.mubr.f32.gmra.mxu0 %v3469
        %v3608 = vpop.f32.mrf.mxu0
        %v3609 = vadd.f32 0.0, %v3608
        %v3610 = vpop.f32.mrf.mxu0
        %v3611 = vadd.f32 0.0, %v3610
        %3612 = vdwg.mxu0
        %v3613 = vlaneseq
        %v3614 = vshrl.u32 %v3613, 7
        %v3615 = vsub.s32 0, %v3614
        %v3616 = vrot.slane %v3538, %v3615
        %v3617 = vlaneseq
        %v3618 = vshrl.u32 %v3617, 7
        %v3619 = vsub.s32 0, %v3618
        %v3620 = vrot.slane %v3540, %v3619
        %v3621 = vlaneseq
        %v3622 = vshrl.u32 %v3621, 7
        %v3623 = vsub.s32 0, %v3622
        %v3624 = vrot.slane %v3609, %v3623
        %v3625 = vlaneseq
        %v3626 = vshrl.u32 %v3625, 7
        %v3627 = vsub.s32 0, %v3626
        %v3628 = vrot.slane %v3611, %v3627
        %v3629 = vmul.f32 %v3040, %v3616
        %v3630 = vmul.f32 %v3041, %v3620
        %v3631 = vmul.f32 %v3042, %v3624
        %v3632 = vmul.f32 %v3043, %v3628
        %v3633 = vmul.f32 %v3044, %v3616
        %v3634 = vmul.f32 %v3045, %v3620
        %v3635 = vmul.f32 %v3046, %v3624
        %v3636 = vmul.f32 %v3047, %v3628
        %v3637 = vld [vmem:[#allocation19] sm:$0xff]
        %v3638 = vld [vmem:[#allocation19 + $0x8] sm:$0xff]
        %v3639 = vld [vmem:[#allocation19 + $0x10] sm:$0xff]
        %v3640 = vld [vmem:[#allocation19 + $0x18] sm:$0xff]
        %v3641 = vld [vmem:[#allocation19 + $0x20] sm:$0xff]
        %v3642 = vld [vmem:[#allocation19 + $0x28] sm:$0xff]
        %v3643 = vld [vmem:[#allocation19 + $0x30] sm:$0xff]
        %v3644 = vld [vmem:[#allocation19 + $0x38] sm:$0xff]
        %v3645 = vld [vmem:[#allocation19 + $0x40] sm:$0xff]
        %v3646 = vld [vmem:[#allocation19 + $0x48] sm:$0xff]
        %v3647 = vld [vmem:[#allocation19 + $0x50] sm:$0xff]
        %v3648 = vld [vmem:[#allocation19 + $0x58] sm:$0xff]
        %v3649 = vld [vmem:[#allocation19 + $0x60] sm:$0xff]
        %v3650 = vld [vmem:[#allocation19 + $0x68] sm:$0xff]
        %v3651 = vld [vmem:[#allocation19 + $0x70] sm:$0xff]
        %v3652 = vld [vmem:[#allocation19 + $0x78] sm:$0xff]
        %v3653 = vld [vmem:[#allocation19 + $0x80] sm:$0xff]
        %v3654 = vld [vmem:[#allocation19 + $0x88] sm:$0xff]
        %v3655 = vld [vmem:[#allocation19 + $0x90] sm:$0xff]
        %v3656 = vld [vmem:[#allocation19 + $0x98] sm:$0xff]
        %v3657 = vld [vmem:[#allocation19 + $0xa0] sm:$0xff]
        %v3658 = vld [vmem:[#allocation19 + $0xa8] sm:$0xff]
        %v3659 = vld [vmem:[#allocation19 + $0xb0] sm:$0xff]
        %v3660 = vld [vmem:[#allocation19 + $0xb8] sm:$0xff]
        %v3661 = vld [vmem:[#allocation19 + $0xc0] sm:$0xff]
        %v3662 = vld [vmem:[#allocation19 + $0xc8] sm:$0xff]
        %v3663 = vld [vmem:[#allocation19 + $0xd0] sm:$0xff]
        %v3664 = vld [vmem:[#allocation19 + $0xd8] sm:$0xff]
        %v3665 = vld [vmem:[#allocation19 + $0xe0] sm:$0xff]
        %v3666 = vld [vmem:[#allocation19 + $0xe8] sm:$0xff]
        %v3667 = vld [vmem:[#allocation19 + $0xf0] sm:$0xff]
        %v3668 = vld [vmem:[#allocation19 + $0xf8] sm:$0xff]
        %v3669 = vld [vmem:[#allocation19 + $0x100] sm:$0xff]
        %v3670 = vld [vmem:[#allocation19 + $0x108] sm:$0xff]
        %v3671 = vld [vmem:[#allocation19 + $0x110] sm:$0xff]
        %v3672 = vld [vmem:[#allocation19 + $0x118] sm:$0xff]
        %v3673 = vld [vmem:[#allocation19 + $0x120] sm:$0xff]
        %v3674 = vld [vmem:[#allocation19 + $0x128] sm:$0xff]
        %v3675 = vld [vmem:[#allocation19 + $0x130] sm:$0xff]
        %v3676 = vld [vmem:[#allocation19 + $0x138] sm:$0xff]
        %v3677 = vld [vmem:[#allocation19 + $0x140] sm:$0xff]
        %v3678 = vld [vmem:[#allocation19 + $0x148] sm:$0xff]
        %v3679 = vld [vmem:[#allocation19 + $0x150] sm:$0xff]
        %v3680 = vld [vmem:[#allocation19 + $0x158] sm:$0xff]
        %v3681 = vld [vmem:[#allocation19 + $0x160] sm:$0xff]
        %v3682 = vld [vmem:[#allocation19 + $0x168] sm:$0xff]
        %v3683 = vld [vmem:[#allocation19 + $0x170] sm:$0xff]
        %v3684 = vld [vmem:[#allocation19 + $0x178] sm:$0xff]
        %v3685 = vld [vmem:[#allocation19 + $0x180] sm:$0xff]
        %v3686 = vld [vmem:[#allocation19 + $0x188] sm:$0xff]
        %v3687 = vld [vmem:[#allocation19 + $0x190] sm:$0xff]
        %v3688 = vld [vmem:[#allocation19 + $0x198] sm:$0xff]
        %v3689 = vld [vmem:[#allocation19 + $0x1a0] sm:$0xff]
        %v3690 = vld [vmem:[#allocation19 + $0x1a8] sm:$0xff]
        %v3691 = vld [vmem:[#allocation19 + $0x1b0] sm:$0xff]
        %v3692 = vld [vmem:[#allocation19 + $0x1b8] sm:$0xff]
        %v3693 = vld [vmem:[#allocation19 + $0x1c0] sm:$0xff]
        %v3694 = vld [vmem:[#allocation19 + $0x1c8] sm:$0xff]
        %v3695 = vld [vmem:[#allocation19 + $0x1d0] sm:$0xff]
        %v3696 = vld [vmem:[#allocation19 + $0x1d8] sm:$0xff]
        %v3697 = vld [vmem:[#allocation19 + $0x1e0] sm:$0xff]
        %v3698 = vld [vmem:[#allocation19 + $0x1e8] sm:$0xff]
        %v3699 = vld [vmem:[#allocation19 + $0x1f0] sm:$0xff]
        %v3700 = vld [vmem:[#allocation19 + $0x1f8] sm:$0xff]
        %v3701 = vld [vmem:[#allocation20] sm:$0x1]
        %v3703 = vlaneseq
        %v3704 = vshrl.u32 %v3703, 7
        %v3705 = vsub.s32 0, %v3704
        %v3706 = vrot.slane %v3701, %v3705
        %3708 = vmatprep.subr.mxu0 0.0
        %3709 = vmatpush1.msra.mxu0 %v3652
        %3710 = vmatprep.subr.mxu0 0.0
        %3711 = vmatpush1.msra.mxu0 %v3651
        %3712 = vmatprep.subr.mxu0 0.0
        %3713 = vmatpush1.msra.mxu0 %v3650
        %3714 = vmatprep.subr.mxu0 0.0
        %3715 = vmatpush1.msra.mxu0 %v3649
        %3716 = vmatprep.subr.mxu0 0.0
        %3717 = vmatpush1.msra.mxu0 %v3648
        %3718 = vmatprep.subr.mxu0 0.0
        %3719 = vmatpush1.msra.mxu0 %v3647
        %3720 = vmatprep.subr.mxu0 0.0
        %3721 = vmatpush1.msra.mxu0 %v3646
        %3722 = vmatprep.subr.mxu0 0.0
        %3723 = vmatpush1.msra.mxu0 %v3645
        %3724 = vmatprep.subr.mxu0 0.0
        %3725 = vmatpush1.msra.mxu0 %v3644
        %3726 = vmatprep.subr.mxu0 0.0
        %3727 = vmatpush1.msra.mxu0 %v3643
        %3728 = vmatprep.subr.mxu0 0.0
        %3729 = vmatpush1.msra.mxu0 %v3642
        %3730 = vmatprep.subr.mxu0 0.0
        %3731 = vmatpush1.msra.mxu0 %v3641
        %3732 = vmatprep.subr.mxu0 0.0
        %3733 = vmatpush1.msra.mxu0 %v3640
        %3734 = vmatprep.subr.mxu0 0.0
        %3735 = vmatpush1.msra.mxu0 %v3639
        %3736 = vmatprep.subr.mxu0 0.0
        %3737 = vmatpush1.msra.mxu0 %v3638
        %3738 = vmatprep.subr.mxu0 0.0
        %3739 = vmatpush1.msra.mxu0 %v3637
        %3740 = vmatprep.subr.mxu0 0.0
        %3741 = vmatpush2.msra.mxu0 %v3668
        %3742 = vmatprep.subr.mxu0 0.0
        %3743 = vmatpush2.msra.mxu0 %v3667
        %3744 = vmatprep.subr.mxu0 0.0
        %3745 = vmatpush2.msra.mxu0 %v3666
        %3746 = vmatprep.subr.mxu0 0.0
        %3747 = vmatpush2.msra.mxu0 %v3665
        %3748 = vmatprep.subr.mxu0 0.0
        %3749 = vmatpush2.msra.mxu0 %v3664
        %3750 = vmatprep.subr.mxu0 0.0
        %3751 = vmatpush2.msra.mxu0 %v3663
        %3752 = vmatprep.subr.mxu0 0.0
        %3753 = vmatpush2.msra.mxu0 %v3662
        %3754 = vmatprep.subr.mxu0 0.0
        %3755 = vmatpush2.msra.mxu0 %v3661
        %3756 = vmatprep.subr.mxu0 0.0
        %3757 = vmatpush2.msra.mxu0 %v3660
        %3758 = vmatprep.subr.mxu0 0.0
        %3759 = vmatpush2.msra.mxu0 %v3659
        %3760 = vmatprep.subr.mxu0 0.0
        %3761 = vmatpush2.msra.mxu0 %v3658
        %3762 = vmatprep.subr.mxu0 0.0
        %3763 = vmatpush2.msra.mxu0 %v3657
        %3764 = vmatprep.subr.mxu0 0.0
        %3765 = vmatpush2.msra.mxu0 %v3656
        %3766 = vmatprep.subr.mxu0 0.0
        %3767 = vmatpush2.msra.mxu0 %v3655
        %3768 = vmatprep.subr.mxu0 0.0
        %3769 = vmatpush2.msra.mxu0 %v3654
        %3770 = vmatprep.subr.mxu0 0.0
        %3771 = vmatpush2.msra.mxu0 %v3653
        %3772 = vmatprep.mubr.f32.mxu0 %v3630
        %3773 = vmatmul.mubr.f32.gmra.mxu0 %v3629
        %v3774 = vpop.f32.mrf.mxu0
        %v3775 = vadd.f32 %v3706, %v3774
        %v3776 = vpop.f32.mrf.mxu0
        %3777 = vmatprep.mubr.f32.mxu0 %v3634
        %3778 = vmatmul.mubr.f32.gmra.mxu0 %v3633
        %v3779 = vpop.f32.mrf.mxu0
        %v3780 = vadd.f32 %v3706, %v3779
        %v3781 = vpop.f32.mrf.mxu0
        %3782 = vdwg.mxu0
        %3783 = vmatprep.subr.mxu0 0.0
        %3784 = vmatpush1.msra.mxu0 %v3684
        %3785 = vmatprep.subr.mxu0 0.0
        %3786 = vmatpush1.msra.mxu0 %v3683
        %3787 = vmatprep.subr.mxu0 0.0
        %3788 = vmatpush1.msra.mxu0 %v3682
        %3789 = vmatprep.subr.mxu0 0.0
        %3790 = vmatpush1.msra.mxu0 %v3681
        %3791 = vmatprep.subr.mxu0 0.0
        %3792 = vmatpush1.msra.mxu0 %v3680
        %3793 = vmatprep.subr.mxu0 0.0
        %3794 = vmatpush1.msra.mxu0 %v3679
        %3795 = vmatprep.subr.mxu0 0.0
        %3796 = vmatpush1.msra.mxu0 %v3678
        %3797 = vmatprep.subr.mxu0 0.0
        %3798 = vmatpush1.msra.mxu0 %v3677
        %3799 = vmatprep.subr.mxu0 0.0
        %3800 = vmatpush1.msra.mxu0 %v3676
        %3801 = vmatprep.subr.mxu0 0.0
        %3802 = vmatpush1.msra.mxu0 %v3675
        %3803 = vmatprep.subr.mxu0 0.0
        %3804 = vmatpush1.msra.mxu0 %v3674
        %3805 = vmatprep.subr.mxu0 0.0
        %3806 = vmatpush1.msra.mxu0 %v3673
        %3807 = vmatprep.subr.mxu0 0.0
        %3808 = vmatpush1.msra.mxu0 %v3672
        %3809 = vmatprep.subr.mxu0 0.0
        %3810 = vmatpush1.msra.mxu0 %v3671
        %3811 = vmatprep.subr.mxu0 0.0
        %3812 = vmatpush1.msra.mxu0 %v3670
        %3813 = vmatprep.subr.mxu0 0.0
        %3814 = vmatpush1.msra.mxu0 %v3669
        %3815 = vmatprep.subr.mxu0 0.0
        %3816 = vmatpush2.msra.mxu0 %v3700
        %3817 = vmatprep.subr.mxu0 0.0
        %3818 = vmatpush2.msra.mxu0 %v3699
        %3819 = vmatprep.subr.mxu0 0.0
        %3820 = vmatpush2.msra.mxu0 %v3698
        %3821 = vmatprep.subr.mxu0 0.0
        %3822 = vmatpush2.msra.mxu0 %v3697
        %3823 = vmatprep.subr.mxu0 0.0
        %3824 = vmatpush2.msra.mxu0 %v3696
        %3825 = vmatprep.subr.mxu0 0.0
        %3826 = vmatpush2.msra.mxu0 %v3695
        %3827 = vmatprep.subr.mxu0 0.0
        %3828 = vmatpush2.msra.mxu0 %v3694
        %3829 = vmatprep.subr.mxu0 0.0
        %3830 = vmatpush2.msra.mxu0 %v3693
        %3831 = vmatprep.subr.mxu0 0.0
        %3832 = vmatpush2.msra.mxu0 %v3692
        %3833 = vmatprep.subr.mxu0 0.0
        %3834 = vmatpush2.msra.mxu0 %v3691
        %3835 = vmatprep.subr.mxu0 0.0
        %3836 = vmatpush2.msra.mxu0 %v3690
        %3837 = vmatprep.subr.mxu0 0.0
        %3838 = vmatpush2.msra.mxu0 %v3689
        %3839 = vmatprep.subr.mxu0 0.0
        %3840 = vmatpush2.msra.mxu0 %v3688
        %3841 = vmatprep.subr.mxu0 0.0
        %3842 = vmatpush2.msra.mxu0 %v3687
        %3843 = vmatprep.subr.mxu0 0.0
        %3844 = vmatpush2.msra.mxu0 %v3686
        %3845 = vmatprep.subr.mxu0 0.0
        %3846 = vmatpush2.msra.mxu0 %v3685
        %3847 = vmatprep.mubr.f32.mxu0 %v3632
        %3848 = vmatmul.mubr.f32.gmra.mxu0 %v3631
        %v3849 = vpop.f32.mrf.mxu0
        %v3850 = vadd.f32 %v3775, %v3849
        %v3851 = vpop.f32.mrf.mxu0
        %3852 = vmatprep.mubr.f32.mxu0 %v3636
        %3853 = vmatmul.mubr.f32.gmra.mxu0 %v3635
        %v3854 = vpop.f32.mrf.mxu0
        %v3855 = vadd.f32 %v3780, %v3854
        %v3856 = vpop.f32.mrf.mxu0
        %3857 = vdwg.mxu0
        %v3858 = vadd.f32 %v3850, %v636
        %v3859 = vadd.f32 %v3855, %v637
        %3860 = vst [vmem:[%s633] sm:$0xff] %v3858
        %3861 = vst [vmem:[%s633 + $0x8] sm:$0xff] %v3859
        %s3862 = sand.u32 %s344, 1
        %s3863 = scalar_lea.sflag [#allocation4], %s3862
        %s3864 = sand.u32 %s344, 1
        %s3865 = smul.addr %s3864, 16
        %s3866 = scalar_lea.vmem [#allocation22], %s3865
        // Predicated region
        $region125: #{tpu_custom_call.1} parent=75 // pred_check
          %p3867 = pneg %p354
        $region126: #{tpu_custom_call.1} parent=75 // pred_check_branch
          %3869 = sbr.rel (%p3867) target = $region128
        $region127: #{tpu_custom_call.1} parent=75 // pred_region
          %s3870 = smul.u32 2, %s37
          %s3872 = ssub.s32 256, 256
          %3873 = vsyncadd %s3863, %s3872
          %s3874 = smul.addr %s3870, 128
          %s3875 = scalar_lea.hbm %s14, %s3874
          %s3876 = sshll.u32 %s3866, 4
          %s3877 = int_to_ptr.vmem [resolvable:$true] %s3876
          %3882 = dma.vmem_to_hbm [thread:$0]  %s3877, 256, %s3875, %s3863, 128, 128, 8
        $region128: #{tpu_custom_call.1} parent=75 // pred_fallthru
          _
      $region76: #{tpu_custom_call.1} parent=5 // pred_fallthru
        _
      %p3883 = scmp.le.s32.totalorder 2, %s32
      // Predicated region
      $region129: #{tpu_custom_call.1} parent=5 // pred_check
        %p3884 = pneg %p3883
      $region130: #{tpu_custom_call.1} parent=5 // pred_check_branch
        %3886 = sbr.rel (%p3884) target = $region132
      $region131: #{tpu_custom_call.1} parent=5 // pred_region
        %s3887 = ssub.s32 %s32, 2
        // Predicated region
        $region133: #{tpu_custom_call.1} parent=131 // pred_check
          %p3888 = pneg %p360
        $region134: #{tpu_custom_call.1} parent=131 // pred_check_branch
          %3890 = sbr.rel (%p3888) target = $region136
        $region135: #{tpu_custom_call.1} parent=131 // pred_region
          %s3891 = sand.u32 %s345, 1
          %s3892 = scalar_lea.sflag [#allocation4], %s3891
          %s3893 = sand.u32 %s345, 1
          %s3894 = smul.addr %s3893, 16
          %s3895 = scalar_lea.vmem [#allocation22], %s3894
          %3896 = dma.done %s3892, 256
        $region136: #{tpu_custom_call.1} parent=131 // pred_fallthru
          _
      $region132: #{tpu_custom_call.1} parent=5 // pred_fallthru
        _
    $region6: #{tpu_custom_call.1} parent=1 // loop_footer
      %s36 = sadd.s32 1, %s32
    $region7: #{tpu_custom_call.1} parent=1 // loop_footer_branch
      %31 = sbr.rel target = $region3
    $region8: #{tpu_custom_call.1} parent=1 // loop_exit
      _
    %3897 = vsyncpa [#allocation3], 1
    %s3898 = scalar_lea.sflag [#allocation3], 1
    %3899 = vsyncpa %s3898, 1
    %3900 = vsyncpa [#allocation6], 1
    %3901 = vsyncpa [#allocation9], 1
    %3902 = vsyncpa [#allocation12], 1
    %3903 = vsyncpa [#allocation15], 1
    %3904 = vsyncpa [#allocation18], 1
    %3905 = vsyncpa [#allocation21], 1
    %3906 = vsyncpa [#allocation4], 1
    %s3907 = scalar_lea.sflag [#allocation4], 1
    %3908 = vsyncpa %s3907, 1

</llo_original>
